<compile_context>
chip_gen: v7x
topology: tpu7x:2x2x1
jax: 0.10.0
libtpu: 0.0.40
codegen_flags: <defaults>
</compile_context>

<pallas_src>
import jax
import jax.numpy as jnp
from jax import lax
from jax.experimental import pallas as pl
from jax.experimental.pallas import tpu as pltpu

# ---------------- configuration (small, deterministic) ----------------
NUM_TAGS = 36          # number of LSTMCells in the module (VBN..OTHER)
N_UNIQUE_WORDS = 50
EMBED = 32             # embedding_vector_size
HIDDEN = 32            # hidden_state_size
SEQ = 8                # longest_sequence
BATCH = 8              # config.BATCH_SIZE
DENSE_HIDDEN = 256
N_CLASSES = 1          # n_output_classes (binary -> sigmoid + squeeze(1))


# ---------------- fused Pallas kernel ----------------
def fused_lstm_head_kernel(idx_smem,   # SMEM: (T, B) int32 token ids (transposed)
                           idx_ref,    # VMEM: (T, B) int32 token ids (same data)
                           emb_ref,    # VMEM: (V, E) f32 embedding table
                           wih_hbm,    # HBM : (NUM_TAGS, E, 4H) bf16
                           whh_hbm,    # HBM : (NUM_TAGS, H, 4H) bf16
                           b_hbm,      # HBM : (NUM_TAGS, 1, 4H) f32 (b_ih + b_hh)
                           w1_ref,     # VMEM: (H, 256) bf16
                           b1_ref,     # VMEM: (1, 256) f32
                           w2t_ref,    # VMEM: (1, 256) f32 (transposed head weight)
                           b2_smem,    # SMEM: (1,) f32
                           out_ref,    # VMEM: (B, C) f32
                           wih_sel,    # scratch VMEM: (T, E, 4H) bf16
                           whh_sel,    # scratch VMEM: (T, H, 4H) bf16
                           b_sel,      # scratch VMEM: (T, 1, 4H) f32
                           sems):      # scratch: DMA sems (3, T)
    T, B = idx_ref.shape
    V, E = emb_ref.shape
    H = whh_sel.shape[1]

    # ---- 1) DMA only the T selected tag slices HBM -> VMEM (not the full stacks)
    # TODO(synk): FullTagger / IndexMapper is an external NLP POS tagger with no
    # Pallas equivalent; tag ids are derived deterministically from the first
    # batch row's token ids (mirrors the reference's `batch.tolist()[0]` usage).
    for t in range(T):                                     # T static -> unrolled
        tag = lax.rem(idx_smem[t, 0], jnp.int32(NUM_TAGS))  # scalar, in [0, 36)
        pltpu.make_async_copy(wih_hbm.at[tag], wih_sel.at[t], sems.at[0, t]).start()
        pltpu.make_async_copy(whh_hbm.at[tag], whh_sel.at[t], sems.at[1, t]).start()
        pltpu.make_async_copy(b_hbm.at[tag],   b_sel.at[t],   sems.at[2, t]).start()

    # ---- 2) fused embedding lookup (one-hot matmul; overlaps the weight DMAs)
    # x[t, b, :] = emb[idx[t, b], :]   -> (T, B, E), t-major so x[t] is a cheap slice.
    idx = idx_ref[...]                                      # (T, B) int32
    onehot = (idx[:, :, None] ==
              lax.broadcasted_iota(jnp.int32, (T, B, V), 2)).astype(jnp.float32)
    x = jnp.dot(onehot.reshape(T * B, V), emb_ref[...],
                preferred_element_type=jnp.float32).reshape(T, B, E)

    # ---- 3) wait for W_ih / b slices, hoisted input projections off the h-chain
    for t in range(T):
        pltpu.make_async_copy(wih_hbm.at[0], wih_sel.at[t], sems.at[0, t]).wait()
        pltpu.make_async_copy(b_hbm.at[0],   b_sel.at[t],   sems.at[2, t]).wait()
    # pre[t] = x_t @ W_ih[tag_t] + b[tag_t]  -> (T, B, 4H), one batched einsum
    pre = jnp.einsum('tbe,teg->tbg', x.astype(jnp.bfloat16), wih_sel[...],
                     preferred_element_type=jnp.float32) + b_sel[...]

    # ---- 4) wait for W_hh slices, serial recurrence (only h @ W_hh + pre[t])
    for t in range(T):
        pltpu.make_async_copy(whh_hbm.at[0], whh_sel.at[t], sems.at[1, t]).wait()

    h = jnp.zeros((B, H), jnp.float32)
    c = jnp.zeros((B, H), jnp.float32)
    for t in range(T):                                      # T static -> unrolled
        gates = jnp.dot(h.astype(jnp.bfloat16), whh_sel[t],
                        preferred_element_type=jnp.float32) + pre[t]   # (B, 4H)
        # Full (8,128)-lane-width nonlinearities, then 32-lane slices (i,f,g,o).
        s = jax.nn.sigmoid(gates)
        th = jnp.tanh(gates)
        c = s[:, H:2 * H] * c + s[:, 0:H] * th[:, 2 * H:3 * H]
        h = s[:, 3 * H:4 * H] * jnp.tanh(c)

    # ---- 5) fused dense head (Dropout is identity at inference)
    z = jnp.dot(h.astype(jnp.bfloat16), w1_ref[...],
                preferred_element_type=jnp.float32) + b1_ref[...]
    z = jnp.maximum(z, 0.0)                                 # ReLU
    # (B,256) @ (256,1) as VPU multiply + lane reduction (skip an N=1 MXU pass).
    logits = jnp.sum(z * w2t_ref[...], axis=-1, keepdims=True) + b2_smem[0]
    out_ref[...] = jax.nn.sigmoid(logits)                   # not IS_MULTICLASS


# ---------------- wrapper ----------------
@jax.jit
def lstm_pos_penn_forward(indices, params):
    """indices: (B, T) int token ids -> (B,) sigmoid outputs."""
    B, T = indices.shape
    C = N_CLASSES
    # Tiny (T,B) transpose of the int32 index matrix; all heavy glue
    # (embedding gather, tag derivation) is fused into the kernel.
    idx_tb = indices.astype(jnp.int32).T                    # (T, B)

    vmem = pl.BlockSpec(memory_space=pltpu.MemorySpace.VMEM)
    smem = pl.BlockSpec(memory_space=pltpu.MemorySpace.SMEM)
    hbm = pl.BlockSpec(memory_space=pl.ANY)                 # weights stay in HBM

    out = pl.pallas_call(
        fused_lstm_head_kernel,
        out_shape=jax.ShapeDtypeStruct((B, C), jnp.float32),
        in_specs=[smem,                 # token ids (scalar tag reads)
                  vmem,                 # token ids (one-hot embedding lookup)
                  vmem,                 # embedding table
                  hbm, hbm, hbm,        # stacked LSTMCell weights (gathered by DMA)
                  vmem, vmem, vmem,     # dense head weights
                  smem],                # head output bias (scalar)
        out_specs=vmem,
        scratch_shapes=[
            pltpu.VMEM((T, EMBED, 4 * HIDDEN), jnp.bfloat16),   # selected W_ih
            pltpu.VMEM((T, HIDDEN, 4 * HIDDEN), jnp.bfloat16),  # selected W_hh
            pltpu.VMEM((T, 1, 4 * HIDDEN), jnp.float32),        # selected biases
            pltpu.SemaphoreType.DMA((3, T)),
        ],
    )(idx_tb, idx_tb, params["embedding"],
      params["w_ih"], params["w_hh"], params["b"],
      params["w1"], params["b1"], params["w2t"], params["b2"])

    return out[:, 0]                                        # squeeze(1)


# ---------------- deterministic parameter construction ----------------
def init_params(key):
    ks = jax.random.split(key, 8)
    bound = 1.0 / jnp.sqrt(jnp.float32(HIDDEN))

    embedding = jax.random.normal(ks[0], (N_UNIQUE_WORDS, EMBED), jnp.float32) * 0.1

    # Stacked LSTMCell params, pre-transposed for x @ W layout (gate order i,f,g,o).
    # Weights in bf16 (MXU-native, half the HBM bytes); biases stay f32.
    w_ih = jax.random.uniform(ks[1], (NUM_TAGS, EMBED, 4 * HIDDEN), jnp.float32,
                              -bound, bound).astype(jnp.bfloat16)
    w_hh = jax.random.uniform(ks[2], (NUM_TAGS, HIDDEN, 4 * HIDDEN), jnp.float32,
                              -bound, bound).astype(jnp.bfloat16)
    b_ih = jax.random.uniform(ks[3], (NUM_TAGS, 1, 4 * HIDDEN), jnp.float32,
                              -bound, bound)
    b_hh = jax.random.uniform(ks[4], (NUM_TAGS, 1, 4 * HIDDEN), jnp.float32,
                              -bound, bound)
    b = b_ih + b_hh  # biases always appear summed in the cell equation

    w1 = jax.random.uniform(ks[5], (HIDDEN, DENSE_HIDDEN), jnp.float32,
                            -bound, bound).astype(jnp.bfloat16)
    b1 = jnp.zeros((1, DENSE_HIDDEN), jnp.float32)
    bound2 = 1.0 / jnp.sqrt(jnp.float32(DENSE_HIDDEN))
    # Second head weight stored pre-transposed (C, 256) for the VPU-reduce path.
    w2t = jax.random.uniform(ks[6], (N_CLASSES, DENSE_HIDDEN), jnp.float32,
                             -bound2, bound2)
    b2 = jnp.zeros((N_CLASSES,), jnp.float32)

    return {"embedding": embedding, "w_ih": w_ih, "w_hh": w_hh, "b": b,
            "w1": w1, "b1": b1, "w2t": w2t, "b2": b2}


if __name__ == "__main__":
    key = jax.random.PRNGKey(0)
    pkey, dkey = jax.random.split(key)
    params = init_params(pkey)

    # deterministic "batch" of token indices, shape (BATCH, SEQ)
    indices = jax.random.randint(dkey, (BATCH, SEQ), 0, N_UNIQUE_WORDS, jnp.int32)

    out = lstm_pos_penn_forward(indices, params)
    out = jax.block_until_ready(out)
    assert out.shape == (BATCH,)
    assert bool(jnp.all(jnp.isfinite(out)))
    print("KERNEL_OK")
</pallas_src>

<mosaic_0001>
module attributes {stable_mosaic.version = 11 : i64} {
  func.func @fused_lstm_head_kernel(%arg0: memref<8x8xi32, #tpu.memory_space<smem>>, %arg1: memref<8x8xi32, #tpu.memory_space<vmem>>, %arg2: memref<50x32xf32, #tpu.memory_space<vmem>>, %arg3: memref<36x32x128xbf16, #tpu.memory_space<any>>, %arg4: memref<36x32x128xbf16, #tpu.memory_space<any>>, %arg5: memref<36x1x128xf32, #tpu.memory_space<any>>, %arg6: memref<32x256xbf16, #tpu.memory_space<vmem>>, %arg7: memref<1x256xf32, #tpu.memory_space<vmem>>, %arg8: memref<1x256xf32, #tpu.memory_space<vmem>>, %arg9: memref<1xf32, #tpu.memory_space<smem>>, %arg10: memref<8x1xf32, #tpu.memory_space<vmem>>, %arg11: memref<8x32x128xbf16, #tpu.memory_space<vmem>>, %arg12: memref<8x32x128xbf16, #tpu.memory_space<vmem>>, %arg13: memref<8x1x128xf32, #tpu.memory_space<vmem>>, %arg14: memref<3x8x!tpu.dma_semaphore, #tpu.memory_space<semaphore_mem>>) attributes {dimension_semantics = [], scalar_prefetch = 0 : i64, scratch_operands = 4 : i64, tpu.core_type = #tpu.core_type<tc>} {
    %c0 = arith.constant 0 : index
    %c0_0 = arith.constant 0 : index
    %0 = memref.load %arg0[%c0, %c0_0] : memref<8x8xi32, #tpu.memory_space<smem>>
    %c36_i32 = arith.constant 36 : i32
    %1 = arith.remsi %0, %c36_i32 : i32
    %c0_i32 = arith.constant 0 : i32
    %c0_i32_1 = arith.constant 0 : i32
    %c0_i32_2 = arith.constant 0 : i32
    %c0_i32_3 = arith.constant 0 : i32
    %c0_i32_4 = arith.constant 0 : i32
    %2 = tpu.memref_slice %arg3[%1, %c0_i32_3, %c0_i32_4] : memref<36x32x128xbf16, #tpu.memory_space<any>> -> memref<1x32x128xbf16, #tpu.memory_space<any>>
    %3 = tpu.memref_squeeze %2 : memref<1x32x128xbf16, #tpu.memory_space<any>> -> memref<32x128xbf16, #tpu.memory_space<any>>
    %c0_i32_5 = arith.constant 0 : i32
    %c0_i32_6 = arith.constant 0 : i32
    %4 = tpu.memref_slice %arg11[%c0_i32, %c0_i32_5, %c0_i32_6] : memref<8x32x128xbf16, #tpu.memory_space<vmem>> -> memref<1x32x128xbf16, #tpu.memory_space<vmem>>
    %5 = tpu.memref_squeeze %4 : memref<1x32x128xbf16, #tpu.memory_space<vmem>> -> memref<32x128xbf16, #tpu.memory_space<vmem>>
    %6 = tpu.memref_slice %arg14[%c0_i32_1, %c0_i32_2] : memref<3x8x!tpu.dma_semaphore, #tpu.memory_space<semaphore_mem>> -> memref<1x1x!tpu.dma_semaphore, #tpu.memory_space<semaphore_mem>>
    %7 = tpu.memref_squeeze %6 : memref<1x1x!tpu.dma_semaphore, #tpu.memory_space<semaphore_mem>> -> memref<!tpu.dma_semaphore, #tpu.memory_space<semaphore_mem>>
    tpu.enqueue_dma source(%3 : memref<32x128xbf16, #tpu.memory_space<any>>) target(%5 : memref<32x128xbf16, #tpu.memory_space<vmem>>) target_semaphore(%7 : memref<!tpu.dma_semaphore, #tpu.memory_space<semaphore_mem>>)
    %c0_i32_7 = arith.constant 0 : i32
    %c1_i32 = arith.constant 1 : i32
    %c0_i32_8 = arith.constant 0 : i32
    %c0_i32_9 = arith.constant 0 : i32
    %c0_i32_10 = arith.constant 0 : i32
    %8 = tpu.memref_slice %arg4[%1, %c0_i32_9, %c0_i32_10] : memref<36x32x128xbf16, #tpu.memory_space<any>> -> memref<1x32x128xbf16, #tpu.memory_space<any>>
    %9 = tpu.memref_squeeze %8 : memref<1x32x128xbf16, #tpu.memory_space<any>> -> memref<32x128xbf16, #tpu.memory_space<any>>
    %c0_i32_11 = arith.constant 0 : i32
    %c0_i32_12 = arith.constant 0 : i32
    %10 = tpu.memref_slice %arg12[%c0_i32_7, %c0_i32_11, %c0_i32_12] : memref<8x32x128xbf16, #tpu.memory_space<vmem>> -> memref<1x32x128xbf16, #tpu.memory_space<vmem>>
    %11 = tpu.memref_squeeze %10 : memref<1x32x128xbf16, #tpu.memory_space<vmem>> -> memref<32x128xbf16, #tpu.memory_space<vmem>>
    %12 = tpu.memref_slice %arg14[%c1_i32, %c0_i32_8] : memref<3x8x!tpu.dma_semaphore, #tpu.memory_space<semaphore_mem>> -> memref<1x1x!tpu.dma_semaphore, #tpu.memory_space<semaphore_mem>>
    %13 = tpu.memref_squeeze %12 : memref<1x1x!tpu.dma_semaphore, #tpu.memory_space<semaphore_mem>> -> memref<!tpu.dma_semaphore, #tpu.memory_space<semaphore_mem>>
    tpu.enqueue_dma source(%9 : memref<32x128xbf16, #tpu.memory_space<any>>) target(%11 : memref<32x128xbf16, #tpu.memory_space<vmem>>) target_semaphore(%13 : memref<!tpu.dma_semaphore, #tpu.memory_space<semaphore_mem>>)
    %c0_i32_13 = arith.constant 0 : i32
    %c2_i32 = arith.constant 2 : i32
    %c0_i32_14 = arith.constant 0 : i32
    %c0_i32_15 = arith.constant 0 : i32
    %c0_i32_16 = arith.constant 0 : i32
    %14 = tpu.memref_slice %arg5[%1, %c0_i32_15, %c0_i32_16] : memref<36x1x128xf32, #tpu.memory_space<any>> -> memref<1x1x128xf32, #tpu.memory_space<any>>
    %15 = tpu.memref_squeeze %14 : memref<1x1x128xf32, #tpu.memory_space<any>> -> memref<1x128xf32, #tpu.memory_space<any>>
    %c0_i32_17 = arith.constant 0 : i32
    %c0_i32_18 = arith.constant 0 : i32
    %16 = tpu.memref_slice %arg13[%c0_i32_13, %c0_i32_17, %c0_i32_18] : memref<8x1x128xf32, #tpu.memory_space<vmem>> -> memref<1x1x128xf32, #tpu.memory_space<vmem>>
    %17 = tpu.memref_squeeze %16 : memref<1x1x128xf32, #tpu.memory_space<vmem>> -> memref<1x128xf32, #tpu.memory_space<vmem>>
    %18 = tpu.memref_slice %arg14[%c2_i32, %c0_i32_14] : memref<3x8x!tpu.dma_semaphore, #tpu.memory_space<semaphore_mem>> -> memref<1x1x!tpu.dma_semaphore, #tpu.memory_space<semaphore_mem>>
    %19 = tpu.memref_squeeze %18 : memref<1x1x!tpu.dma_semaphore, #tpu.memory_space<semaphore_mem>> -> memref<!tpu.dma_semaphore, #tpu.memory_space<semaphore_mem>>
    tpu.enqueue_dma source(%15 : memref<1x128xf32, #tpu.memory_space<any>>) target(%17 : memref<1x128xf32, #tpu.memory_space<vmem>>) target_semaphore(%19 : memref<!tpu.dma_semaphore, #tpu.memory_space<semaphore_mem>>)
    %c1 = arith.constant 1 : index
    %c0_19 = arith.constant 0 : index
    %20 = memref.load %arg0[%c1, %c0_19] : memref<8x8xi32, #tpu.memory_space<smem>>
    %c36_i32_20 = arith.constant 36 : i32
    %21 = arith.remsi %20, %c36_i32_20 : i32
    %c1_i32_21 = arith.constant 1 : i32
    %c0_i32_22 = arith.constant 0 : i32
    %c1_i32_23 = arith.constant 1 : i32
    %c0_i32_24 = arith.constant 0 : i32
    %c0_i32_25 = arith.constant 0 : i32
    %22 = tpu.memref_slice %arg3[%21, %c0_i32_24, %c0_i32_25] : memref<36x32x128xbf16, #tpu.memory_space<any>> -> memref<1x32x128xbf16, #tpu.memory_space<any>>
    %23 = tpu.memref_squeeze %22 : memref<1x32x128xbf16, #tpu.memory_space<any>> -> memref<32x128xbf16, #tpu.memory_space<any>>
    %c0_i32_26 = arith.constant 0 : i32
    %c0_i32_27 = arith.constant 0 : i32
    %24 = tpu.memref_slice %arg11[%c1_i32_21, %c0_i32_26, %c0_i32_27] : memref<8x32x128xbf16, #tpu.memory_space<vmem>> -> memref<1x32x128xbf16, #tpu.memory_space<vmem>>
    %25 = tpu.memref_squeeze %24 : memref<1x32x128xbf16, #tpu.memory_space<vmem>> -> memref<32x128xbf16, #tpu.memory_space<vmem>>
    %26 = tpu.memref_slice %arg14[%c0_i32_22, %c1_i32_23] : memref<3x8x!tpu.dma_semaphore, #tpu.memory_space<semaphore_mem>> -> memref<1x1x!tpu.dma_semaphore, #tpu.memory_space<semaphore_mem>>
    %27 = tpu.memref_squeeze %26 : memref<1x1x!tpu.dma_semaphore, #tpu.memory_space<semaphore_mem>> -> memref<!tpu.dma_semaphore, #tpu.memory_space<semaphore_mem>>
    tpu.enqueue_dma source(%23 : memref<32x128xbf16, #tpu.memory_space<any>>) target(%25 : memref<32x128xbf16, #tpu.memory_space<vmem>>) target_semaphore(%27 : memref<!tpu.dma_semaphore, #tpu.memory_space<semaphore_mem>>)
    %c1_i32_28 = arith.constant 1 : i32
    %c1_i32_29 = arith.constant 1 : i32
    %c1_i32_30 = arith.constant 1 : i32
    %c0_i32_31 = arith.constant 0 : i32
    %c0_i32_32 = arith.constant 0 : i32
    %28 = tpu.memref_slice %arg4[%21, %c0_i32_31, %c0_i32_32] : memref<36x32x128xbf16, #tpu.memory_space<any>> -> memref<1x32x128xbf16, #tpu.memory_space<any>>
    %29 = tpu.memref_squeeze %28 : memref<1x32x128xbf16, #tpu.memory_space<any>> -> memref<32x128xbf16, #tpu.memory_space<any>>
    %c0_i32_33 = arith.constant 0 : i32
    %c0_i32_34 = arith.constant 0 : i32
    %30 = tpu.memref_slice %arg12[%c1_i32_28, %c0_i32_33, %c0_i32_34] : memref<8x32x128xbf16, #tpu.memory_space<vmem>> -> memref<1x32x128xbf16, #tpu.memory_space<vmem>>
    %31 = tpu.memref_squeeze %30 : memref<1x32x128xbf16, #tpu.memory_space<vmem>> -> memref<32x128xbf16, #tpu.memory_space<vmem>>
    %32 = tpu.memref_slice %arg14[%c1_i32_29, %c1_i32_30] : memref<3x8x!tpu.dma_semaphore, #tpu.memory_space<semaphore_mem>> -> memref<1x1x!tpu.dma_semaphore, #tpu.memory_space<semaphore_mem>>
    %33 = tpu.memref_squeeze %32 : memref<1x1x!tpu.dma_semaphore, #tpu.memory_space<semaphore_mem>> -> memref<!tpu.dma_semaphore, #tpu.memory_space<semaphore_mem>>
    tpu.enqueue_dma source(%29 : memref<32x128xbf16, #tpu.memory_space<any>>) target(%31 : memref<32x128xbf16, #tpu.memory_space<vmem>>) target_semaphore(%33 : memref<!tpu.dma_semaphore, #tpu.memory_space<semaphore_mem>>)
    %c1_i32_35 = arith.constant 1 : i32
    %c2_i32_36 = arith.constant 2 : i32
    %c1_i32_37 = arith.constant 1 : i32
    %c0_i32_38 = arith.constant 0 : i32
    %c0_i32_39 = arith.constant 0 : i32
    %34 = tpu.memref_slice %arg5[%21, %c0_i32_38, %c0_i32_39] : memref<36x1x128xf32, #tpu.memory_space<any>> -> memref<1x1x128xf32, #tpu.memory_space<any>>
    %35 = tpu.memref_squeeze %34 : memref<1x1x128xf32, #tpu.memory_space<any>> -> memref<1x128xf32, #tpu.memory_space<any>>
    %c0_i32_40 = arith.constant 0 : i32
    %c0_i32_41 = arith.constant 0 : i32
    %36 = tpu.memref_slice %arg13[%c1_i32_35, %c0_i32_40, %c0_i32_41] : memref<8x1x128xf32, #tpu.memory_space<vmem>> -> memref<1x1x128xf32, #tpu.memory_space<vmem>>
    %37 = tpu.memref_squeeze %36 : memref<1x1x128xf32, #tpu.memory_space<vmem>> -> memref<1x128xf32, #tpu.memory_space<vmem>>
    %38 = tpu.memref_slice %arg14[%c2_i32_36, %c1_i32_37] : memref<3x8x!tpu.dma_semaphore, #tpu.memory_space<semaphore_mem>> -> memref<1x1x!tpu.dma_semaphore, #tpu.memory_space<semaphore_mem>>
    %39 = tpu.memref_squeeze %38 : memref<1x1x!tpu.dma_semaphore, #tpu.memory_space<semaphore_mem>> -> memref<!tpu.dma_semaphore, #tpu.memory_space<semaphore_mem>>
    tpu.enqueue_dma source(%35 : memref<1x128xf32, #tpu.memory_space<any>>) target(%37 : memref<1x128xf32, #tpu.memory_space<vmem>>) target_semaphore(%39 : memref<!tpu.dma_semaphore, #tpu.memory_space<semaphore_mem>>)
    %c2 = arith.constant 2 : index
    %c0_42 = arith.constant 0 : index
    %40 = memref.load %arg0[%c2, %c0_42] : memref<8x8xi32, #tpu.memory_space<smem>>
    %c36_i32_43 = arith.constant 36 : i32
    %41 = arith.remsi %40, %c36_i32_43 : i32
    %c2_i32_44 = arith.constant 2 : i32
    %c0_i32_45 = arith.constant 0 : i32
    %c2_i32_46 = arith.constant 2 : i32
    %c0_i32_47 = arith.constant 0 : i32
    %c0_i32_48 = arith.constant 0 : i32
    %42 = tpu.memref_slice %arg3[%41, %c0_i32_47, %c0_i32_48] : memref<36x32x128xbf16, #tpu.memory_space<any>> -> memref<1x32x128xbf16, #tpu.memory_space<any>>
    %43 = tpu.memref_squeeze %42 : memref<1x32x128xbf16, #tpu.memory_space<any>> -> memref<32x128xbf16, #tpu.memory_space<any>>
    %c0_i32_49 = arith.constant 0 : i32
    %c0_i32_50 = arith.constant 0 : i32
    %44 = tpu.memref_slice %arg11[%c2_i32_44, %c0_i32_49, %c0_i32_50] : memref<8x32x128xbf16, #tpu.memory_space<vmem>> -> memref<1x32x128xbf16, #tpu.memory_space<vmem>>
    %45 = tpu.memref_squeeze %44 : memref<1x32x128xbf16, #tpu.memory_space<vmem>> -> memref<32x128xbf16, #tpu.memory_space<vmem>>
    %46 = tpu.memref_slice %arg14[%c0_i32_45, %c2_i32_46] : memref<3x8x!tpu.dma_semaphore, #tpu.memory_space<semaphore_mem>> -> memref<1x1x!tpu.dma_semaphore, #tpu.memory_space<semaphore_mem>>
    %47 = tpu.memref_squeeze %46 : memref<1x1x!tpu.dma_semaphore, #tpu.memory_space<semaphore_mem>> -> memref<!tpu.dma_semaphore, #tpu.memory_space<semaphore_mem>>
    tpu.enqueue_dma source(%43 : memref<32x128xbf16, #tpu.memory_space<any>>) target(%45 : memref<32x128xbf16, #tpu.memory_space<vmem>>) target_semaphore(%47 : memref<!tpu.dma_semaphore, #tpu.memory_space<semaphore_mem>>)
    %c2_i32_51 = arith.constant 2 : i32
    %c1_i32_52 = arith.constant 1 : i32
    %c2_i32_53 = arith.constant 2 : i32
    %c0_i32_54 = arith.constant 0 : i32
    %c0_i32_55 = arith.constant 0 : i32
    %48 = tpu.memref_slice %arg4[%41, %c0_i32_54, %c0_i32_55] : memref<36x32x128xbf16, #tpu.memory_space<any>> -> memref<1x32x128xbf16, #tpu.memory_space<any>>
    %49 = tpu.memref_squeeze %48 : memref<1x32x128xbf16, #tpu.memory_space<any>> -> memref<32x128xbf16, #tpu.memory_space<any>>
    %c0_i32_56 = arith.constant 0 : i32
    %c0_i32_57 = arith.constant 0 : i32
    %50 = tpu.memref_slice %arg12[%c2_i32_51, %c0_i32_56, %c0_i32_57] : memref<8x32x128xbf16, #tpu.memory_space<vmem>> -> memref<1x32x128xbf16, #tpu.memory_space<vmem>>
    %51 = tpu.memref_squeeze %50 : memref<1x32x128xbf16, #tpu.memory_space<vmem>> -> memref<32x128xbf16, #tpu.memory_space<vmem>>
    %52 = tpu.memref_slice %arg14[%c1_i32_52, %c2_i32_53] : memref<3x8x!tpu.dma_semaphore, #tpu.memory_space<semaphore_mem>> -> memref<1x1x!tpu.dma_semaphore, #tpu.memory_space<semaphore_mem>>
    %53 = tpu.memref_squeeze %52 : memref<1x1x!tpu.dma_semaphore, #tpu.memory_space<semaphore_mem>> -> memref<!tpu.dma_semaphore, #tpu.memory_space<semaphore_mem>>
    tpu.enqueue_dma source(%49 : memref<32x128xbf16, #tpu.memory_space<any>>) target(%51 : memref<32x128xbf16, #tpu.memory_space<vmem>>) target_semaphore(%53 : memref<!tpu.dma_semaphore, #tpu.memory_space<semaphore_mem>>)
    %c2_i32_58 = arith.constant 2 : i32
    %c2_i32_59 = arith.constant 2 : i32
    %c2_i32_60 = arith.constant 2 : i32
    %c0_i32_61 = arith.constant 0 : i32
    %c0_i32_62 = arith.constant 0 : i32
    %54 = tpu.memref_slice %arg5[%41, %c0_i32_61, %c0_i32_62] : memref<36x1x128xf32, #tpu.memory_space<any>> -> memref<1x1x128xf32, #tpu.memory_space<any>>
    %55 = tpu.memref_squeeze %54 : memref<1x1x128xf32, #tpu.memory_space<any>> -> memref<1x128xf32, #tpu.memory_space<any>>
    %c0_i32_63 = arith.constant 0 : i32
    %c0_i32_64 = arith.constant 0 : i32
    %56 = tpu.memref_slice %arg13[%c2_i32_58, %c0_i32_63, %c0_i32_64] : memref<8x1x128xf32, #tpu.memory_space<vmem>> -> memref<1x1x128xf32, #tpu.memory_space<vmem>>
    %57 = tpu.memref_squeeze %56 : memref<1x1x128xf32, #tpu.memory_space<vmem>> -> memref<1x128xf32, #tpu.memory_space<vmem>>
    %58 = tpu.memref_slice %arg14[%c2_i32_59, %c2_i32_60] : memref<3x8x!tpu.dma_semaphore, #tpu.memory_space<semaphore_mem>> -> memref<1x1x!tpu.dma_semaphore, #tpu.memory_space<semaphore_mem>>
    %59 = tpu.memref_squeeze %58 : memref<1x1x!tpu.dma_semaphore, #tpu.memory_space<semaphore_mem>> -> memref<!tpu.dma_semaphore, #tpu.memory_space<semaphore_mem>>
    tpu.enqueue_dma source(%55 : memref<1x128xf32, #tpu.memory_space<any>>) target(%57 : memref<1x128xf32, #tpu.memory_space<vmem>>) target_semaphore(%59 : memref<!tpu.dma_semaphore, #tpu.memory_space<semaphore_mem>>)
    %c3 = arith.constant 3 : index
    %c0_65 = arith.constant 0 : index
    %60 = memref.load %arg0[%c3, %c0_65] : memref<8x8xi32, #tpu.memory_space<smem>>
    %c36_i32_66 = arith.constant 36 : i32
    %61 = arith.remsi %60, %c36_i32_66 : i32
    %c3_i32 = arith.constant 3 : i32
    %c0_i32_67 = arith.constant 0 : i32
    %c3_i32_68 = arith.constant 3 : i32
    %c0_i32_69 = arith.constant 0 : i32
    %c0_i32_70 = arith.constant 0 : i32
    %62 = tpu.memref_slice %arg3[%61, %c0_i32_69, %c0_i32_70] : memref<36x32x128xbf16, #tpu.memory_space<any>> -> memref<1x32x128xbf16, #tpu.memory_space<any>>
    %63 = tpu.memref_squeeze %62 : memref<1x32x128xbf16, #tpu.memory_space<any>> -> memref<32x128xbf16, #tpu.memory_space<any>>
    %c0_i32_71 = arith.constant 0 : i32
    %c0_i32_72 = arith.constant 0 : i32
    %64 = tpu.memref_slice %arg11[%c3_i32, %c0_i32_71, %c0_i32_72] : memref<8x32x128xbf16, #tpu.memory_space<vmem>> -> memref<1x32x128xbf16, #tpu.memory_space<vmem>>
    %65 = tpu.memref_squeeze %64 : memref<1x32x128xbf16, #tpu.memory_space<vmem>> -> memref<32x128xbf16, #tpu.memory_space<vmem>>
    %66 = tpu.memref_slice %arg14[%c0_i32_67, %c3_i32_68] : memref<3x8x!tpu.dma_semaphore, #tpu.memory_space<semaphore_mem>> -> memref<1x1x!tpu.dma_semaphore, #tpu.memory_space<semaphore_mem>>
    %67 = tpu.memref_squeeze %66 : memref<1x1x!tpu.dma_semaphore, #tpu.memory_space<semaphore_mem>> -> memref<!tpu.dma_semaphore, #tpu.memory_space<semaphore_mem>>
    tpu.enqueue_dma source(%63 : memref<32x128xbf16, #tpu.memory_space<any>>) target(%65 : memref<32x128xbf16, #tpu.memory_space<vmem>>) target_semaphore(%67 : memref<!tpu.dma_semaphore, #tpu.memory_space<semaphore_mem>>)
    %c3_i32_73 = arith.constant 3 : i32
    %c1_i32_74 = arith.constant 1 : i32
    %c3_i32_75 = arith.constant 3 : i32
    %c0_i32_76 = arith.constant 0 : i32
    %c0_i32_77 = arith.constant 0 : i32
    %68 = tpu.memref_slice %arg4[%61, %c0_i32_76, %c0_i32_77] : memref<36x32x128xbf16, #tpu.memory_space<any>> -> memref<1x32x128xbf16, #tpu.memory_space<any>>
    %69 = tpu.memref_squeeze %68 : memref<1x32x128xbf16, #tpu.memory_space<any>> -> memref<32x128xbf16, #tpu.memory_space<any>>
    %c0_i32_78 = arith.constant 0 : i32
    %c0_i32_79 = arith.constant 0 : i32
    %70 = tpu.memref_slice %arg12[%c3_i32_73, %c0_i32_78, %c0_i32_79] : memref<8x32x128xbf16, #tpu.memory_space<vmem>> -> memref<1x32x128xbf16, #tpu.memory_space<vmem>>
    %71 = tpu.memref_squeeze %70 : memref<1x32x128xbf16, #tpu.memory_space<vmem>> -> memref<32x128xbf16, #tpu.memory_space<vmem>>
    %72 = tpu.memref_slice %arg14[%c1_i32_74, %c3_i32_75] : memref<3x8x!tpu.dma_semaphore, #tpu.memory_space<semaphore_mem>> -> memref<1x1x!tpu.dma_semaphore, #tpu.memory_space<semaphore_mem>>
    %73 = tpu.memref_squeeze %72 : memref<1x1x!tpu.dma_semaphore, #tpu.memory_space<semaphore_mem>> -> memref<!tpu.dma_semaphore, #tpu.memory_space<semaphore_mem>>
    tpu.enqueue_dma source(%69 : memref<32x128xbf16, #tpu.memory_space<any>>) target(%71 : memref<32x128xbf16, #tpu.memory_space<vmem>>) target_semaphore(%73 : memref<!tpu.dma_semaphore, #tpu.memory_space<semaphore_mem>>)
    %c3_i32_80 = arith.constant 3 : i32
    %c2_i32_81 = arith.constant 2 : i32
    %c3_i32_82 = arith.constant 3 : i32
    %c0_i32_83 = arith.constant 0 : i32
    %c0_i32_84 = arith.constant 0 : i32
    %74 = tpu.memref_slice %arg5[%61, %c0_i32_83, %c0_i32_84] : memref<36x1x128xf32, #tpu.memory_space<any>> -> memref<1x1x128xf32, #tpu.memory_space<any>>
    %75 = tpu.memref_squeeze %74 : memref<1x1x128xf32, #tpu.memory_space<any>> -> memref<1x128xf32, #tpu.memory_space<any>>
    %c0_i32_85 = arith.constant 0 : i32
    %c0_i32_86 = arith.constant 0 : i32
    %76 = tpu.memref_slice %arg13[%c3_i32_80, %c0_i32_85, %c0_i32_86] : memref<8x1x128xf32, #tpu.memory_space<vmem>> -> memref<1x1x128xf32, #tpu.memory_space<vmem>>
    %77 = tpu.memref_squeeze %76 : memref<1x1x128xf32, #tpu.memory_space<vmem>> -> memref<1x128xf32, #tpu.memory_space<vmem>>
    %78 = tpu.memref_slice %arg14[%c2_i32_81, %c3_i32_82] : memref<3x8x!tpu.dma_semaphore, #tpu.memory_space<semaphore_mem>> -> memref<1x1x!tpu.dma_semaphore, #tpu.memory_space<semaphore_mem>>
    %79 = tpu.memref_squeeze %78 : memref<1x1x!tpu.dma_semaphore, #tpu.memory_space<semaphore_mem>> -> memref<!tpu.dma_semaphore, #tpu.memory_space<semaphore_mem>>
    tpu.enqueue_dma source(%75 : memref<1x128xf32, #tpu.memory_space<any>>) target(%77 : memref<1x128xf32, #tpu.memory_space<vmem>>) target_semaphore(%79 : memref<!tpu.dma_semaphore, #tpu.memory_space<semaphore_mem>>)
    %c4 = arith.constant 4 : index
    %c0_87 = arith.constant 0 : index
    %80 = memref.load %arg0[%c4, %c0_87] : memref<8x8xi32, #tpu.memory_space<smem>>
    %c36_i32_88 = arith.constant 36 : i32
    %81 = arith.remsi %80, %c36_i32_88 : i32
    %c4_i32 = arith.constant 4 : i32
    %c0_i32_89 = arith.constant 0 : i32
    %c4_i32_90 = arith.constant 4 : i32
    %c0_i32_91 = arith.constant 0 : i32
    %c0_i32_92 = arith.constant 0 : i32
    %82 = tpu.memref_slice %arg3[%81, %c0_i32_91, %c0_i32_92] : memref<36x32x128xbf16, #tpu.memory_space<any>> -> memref<1x32x128xbf16, #tpu.memory_space<any>>
    %83 = tpu.memref_squeeze %82 : memref<1x32x128xbf16, #tpu.memory_space<any>> -> memref<32x128xbf16, #tpu.memory_space<any>>
    %c0_i32_93 = arith.constant 0 : i32
    %c0_i32_94 = arith.constant 0 : i32
    %84 = tpu.memref_slice %arg11[%c4_i32, %c0_i32_93, %c0_i32_94] : memref<8x32x128xbf16, #tpu.memory_space<vmem>> -> memref<1x32x128xbf16, #tpu.memory_space<vmem>>
    %85 = tpu.memref_squeeze %84 : memref<1x32x128xbf16, #tpu.memory_space<vmem>> -> memref<32x128xbf16, #tpu.memory_space<vmem>>
    %86 = tpu.memref_slice %arg14[%c0_i32_89, %c4_i32_90] : memref<3x8x!tpu.dma_semaphore, #tpu.memory_space<semaphore_mem>> -> memref<1x1x!tpu.dma_semaphore, #tpu.memory_space<semaphore_mem>>
    %87 = tpu.memref_squeeze %86 : memref<1x1x!tpu.dma_semaphore, #tpu.memory_space<semaphore_mem>> -> memref<!tpu.dma_semaphore, #tpu.memory_space<semaphore_mem>>
    tpu.enqueue_dma source(%83 : memref<32x128xbf16, #tpu.memory_space<any>>) target(%85 : memref<32x128xbf16, #tpu.memory_space<vmem>>) target_semaphore(%87 : memref<!tpu.dma_semaphore, #tpu.memory_space<semaphore_mem>>)
    %c4_i32_95 = arith.constant 4 : i32
    %c1_i32_96 = arith.constant 1 : i32
    %c4_i32_97 = arith.constant 4 : i32
    %c0_i32_98 = arith.constant 0 : i32
    %c0_i32_99 = arith.constant 0 : i32
    %88 = tpu.memref_slice %arg4[%81, %c0_i32_98, %c0_i32_99] : memref<36x32x128xbf16, #tpu.memory_space<any>> -> memref<1x32x128xbf16, #tpu.memory_space<any>>
    %89 = tpu.memref_squeeze %88 : memref<1x32x128xbf16, #tpu.memory_space<any>> -> memref<32x128xbf16, #tpu.memory_space<any>>
    %c0_i32_100 = arith.constant 0 : i32
    %c0_i32_101 = arith.constant 0 : i32
    %90 = tpu.memref_slice %arg12[%c4_i32_95, %c0_i32_100, %c0_i32_101] : memref<8x32x128xbf16, #tpu.memory_space<vmem>> -> memref<1x32x128xbf16, #tpu.memory_space<vmem>>
    %91 = tpu.memref_squeeze %90 : memref<1x32x128xbf16, #tpu.memory_space<vmem>> -> memref<32x128xbf16, #tpu.memory_space<vmem>>
    %92 = tpu.memref_slice %arg14[%c1_i32_96, %c4_i32_97] : memref<3x8x!tpu.dma_semaphore, #tpu.memory_space<semaphore_mem>> -> memref<1x1x!tpu.dma_semaphore, #tpu.memory_space<semaphore_mem>>
    %93 = tpu.memref_squeeze %92 : memref<1x1x!tpu.dma_semaphore, #tpu.memory_space<semaphore_mem>> -> memref<!tpu.dma_semaphore, #tpu.memory_space<semaphore_mem>>
    tpu.enqueue_dma source(%89 : memref<32x128xbf16, #tpu.memory_space<any>>) target(%91 : memref<32x128xbf16, #tpu.memory_space<vmem>>) target_semaphore(%93 : memref<!tpu.dma_semaphore, #tpu.memory_space<semaphore_mem>>)
    %c4_i32_102 = arith.constant 4 : i32
    %c2_i32_103 = arith.constant 2 : i32
    %c4_i32_104 = arith.constant 4 : i32
    %c0_i32_105 = arith.constant 0 : i32
    %c0_i32_106 = arith.constant 0 : i32
    %94 = tpu.memref_slice %arg5[%81, %c0_i32_105, %c0_i32_106] : memref<36x1x128xf32, #tpu.memory_space<any>> -> memref<1x1x128xf32, #tpu.memory_space<any>>
    %95 = tpu.memref_squeeze %94 : memref<1x1x128xf32, #tpu.memory_space<any>> -> memref<1x128xf32, #tpu.memory_space<any>>
    %c0_i32_107 = arith.constant 0 : i32
    %c0_i32_108 = arith.constant 0 : i32
    %96 = tpu.memref_slice %arg13[%c4_i32_102, %c0_i32_107, %c0_i32_108] : memref<8x1x128xf32, #tpu.memory_space<vmem>> -> memref<1x1x128xf32, #tpu.memory_space<vmem>>
    %97 = tpu.memref_squeeze %96 : memref<1x1x128xf32, #tpu.memory_space<vmem>> -> memref<1x128xf32, #tpu.memory_space<vmem>>
    %98 = tpu.memref_slice %arg14[%c2_i32_103, %c4_i32_104] : memref<3x8x!tpu.dma_semaphore, #tpu.memory_space<semaphore_mem>> -> memref<1x1x!tpu.dma_semaphore, #tpu.memory_space<semaphore_mem>>
    %99 = tpu.memref_squeeze %98 : memref<1x1x!tpu.dma_semaphore, #tpu.memory_space<semaphore_mem>> -> memref<!tpu.dma_semaphore, #tpu.memory_space<semaphore_mem>>
    tpu.enqueue_dma source(%95 : memref<1x128xf32, #tpu.memory_space<any>>) target(%97 : memref<1x128xf32, #tpu.memory_space<vmem>>) target_semaphore(%99 : memref<!tpu.dma_semaphore, #tpu.memory_space<semaphore_mem>>)
    %c5 = arith.constant 5 : index
    %c0_109 = arith.constant 0 : index
    %100 = memref.load %arg0[%c5, %c0_109] : memref<8x8xi32, #tpu.memory_space<smem>>
    %c36_i32_110 = arith.constant 36 : i32
    %101 = arith.remsi %100, %c36_i32_110 : i32
    %c5_i32 = arith.constant 5 : i32
    %c0_i32_111 = arith.constant 0 : i32
    %c5_i32_112 = arith.constant 5 : i32
    %c0_i32_113 = arith.constant 0 : i32
    %c0_i32_114 = arith.constant 0 : i32
    %102 = tpu.memref_slice %arg3[%101, %c0_i32_113, %c0_i32_114] : memref<36x32x128xbf16, #tpu.memory_space<any>> -> memref<1x32x128xbf16, #tpu.memory_space<any>>
    %103 = tpu.memref_squeeze %102 : memref<1x32x128xbf16, #tpu.memory_space<any>> -> memref<32x128xbf16, #tpu.memory_space<any>>
    %c0_i32_115 = arith.constant 0 : i32
    %c0_i32_116 = arith.constant 0 : i32
    %104 = tpu.memref_slice %arg11[%c5_i32, %c0_i32_115, %c0_i32_116] : memref<8x32x128xbf16, #tpu.memory_space<vmem>> -> memref<1x32x128xbf16, #tpu.memory_space<vmem>>
    %105 = tpu.memref_squeeze %104 : memref<1x32x128xbf16, #tpu.memory_space<vmem>> -> memref<32x128xbf16, #tpu.memory_space<vmem>>
    %106 = tpu.memref_slice %arg14[%c0_i32_111, %c5_i32_112] : memref<3x8x!tpu.dma_semaphore, #tpu.memory_space<semaphore_mem>> -> memref<1x1x!tpu.dma_semaphore, #tpu.memory_space<semaphore_mem>>
    %107 = tpu.memref_squeeze %106 : memref<1x1x!tpu.dma_semaphore, #tpu.memory_space<semaphore_mem>> -> memref<!tpu.dma_semaphore, #tpu.memory_space<semaphore_mem>>
    tpu.enqueue_dma source(%103 : memref<32x128xbf16, #tpu.memory_space<any>>) target(%105 : memref<32x128xbf16, #tpu.memory_space<vmem>>) target_semaphore(%107 : memref<!tpu.dma_semaphore, #tpu.memory_space<semaphore_mem>>)
    %c5_i32_117 = arith.constant 5 : i32
    %c1_i32_118 = arith.constant 1 : i32
    %c5_i32_119 = arith.constant 5 : i32
    %c0_i32_120 = arith.constant 0 : i32
    %c0_i32_121 = arith.constant 0 : i32
    %108 = tpu.memref_slice %arg4[%101, %c0_i32_120, %c0_i32_121] : memref<36x32x128xbf16, #tpu.memory_space<any>> -> memref<1x32x128xbf16, #tpu.memory_space<any>>
    %109 = tpu.memref_squeeze %108 : memref<1x32x128xbf16, #tpu.memory_space<any>> -> memref<32x128xbf16, #tpu.memory_space<any>>
    %c0_i32_122 = arith.constant 0 : i32
    %c0_i32_123 = arith.constant 0 : i32
    %110 = tpu.memref_slice %arg12[%c5_i32_117, %c0_i32_122, %c0_i32_123] : memref<8x32x128xbf16, #tpu.memory_space<vmem>> -> memref<1x32x128xbf16, #tpu.memory_space<vmem>>
    %111 = tpu.memref_squeeze %110 : memref<1x32x128xbf16, #tpu.memory_space<vmem>> -> memref<32x128xbf16, #tpu.memory_space<vmem>>
    %112 = tpu.memref_slice %arg14[%c1_i32_118, %c5_i32_119] : memref<3x8x!tpu.dma_semaphore, #tpu.memory_space<semaphore_mem>> -> memref<1x1x!tpu.dma_semaphore, #tpu.memory_space<semaphore_mem>>
    %113 = tpu.memref_squeeze %112 : memref<1x1x!tpu.dma_semaphore, #tpu.memory_space<semaphore_mem>> -> memref<!tpu.dma_semaphore, #tpu.memory_space<semaphore_mem>>
    tpu.enqueue_dma source(%109 : memref<32x128xbf16, #tpu.memory_space<any>>) target(%111 : memref<32x128xbf16, #tpu.memory_space<vmem>>) target_semaphore(%113 : memref<!tpu.dma_semaphore, #tpu.memory_space<semaphore_mem>>)
    %c5_i32_124 = arith.constant 5 : i32
    %c2_i32_125 = arith.constant 2 : i32
    %c5_i32_126 = arith.constant 5 : i32
    %c0_i32_127 = arith.constant 0 : i32
    %c0_i32_128 = arith.constant 0 : i32
    %114 = tpu.memref_slice %arg5[%101, %c0_i32_127, %c0_i32_128] : memref<36x1x128xf32, #tpu.memory_space<any>> -> memref<1x1x128xf32, #tpu.memory_space<any>>
    %115 = tpu.memref_squeeze %114 : memref<1x1x128xf32, #tpu.memory_space<any>> -> memref<1x128xf32, #tpu.memory_space<any>>
    %c0_i32_129 = arith.constant 0 : i32
    %c0_i32_130 = arith.constant 0 : i32
    %116 = tpu.memref_slice %arg13[%c5_i32_124, %c0_i32_129, %c0_i32_130] : memref<8x1x128xf32, #tpu.memory_space<vmem>> -> memref<1x1x128xf32, #tpu.memory_space<vmem>>
    %117 = tpu.memref_squeeze %116 : memref<1x1x128xf32, #tpu.memory_space<vmem>> -> memref<1x128xf32, #tpu.memory_space<vmem>>
    %118 = tpu.memref_slice %arg14[%c2_i32_125, %c5_i32_126] : memref<3x8x!tpu.dma_semaphore, #tpu.memory_space<semaphore_mem>> -> memref<1x1x!tpu.dma_semaphore, #tpu.memory_space<semaphore_mem>>
    %119 = tpu.memref_squeeze %118 : memref<1x1x!tpu.dma_semaphore, #tpu.memory_space<semaphore_mem>> -> memref<!tpu.dma_semaphore, #tpu.memory_space<semaphore_mem>>
    tpu.enqueue_dma source(%115 : memref<1x128xf32, #tpu.memory_space<any>>) target(%117 : memref<1x128xf32, #tpu.memory_space<vmem>>) target_semaphore(%119 : memref<!tpu.dma_semaphore, #tpu.memory_space<semaphore_mem>>)
    %c6 = arith.constant 6 : index
    %c0_131 = arith.constant 0 : index
    %120 = memref.load %arg0[%c6, %c0_131] : memref<8x8xi32, #tpu.memory_space<smem>>
    %c36_i32_132 = arith.constant 36 : i32
    %121 = arith.remsi %120, %c36_i32_132 : i32
    %c6_i32 = arith.constant 6 : i32
    %c0_i32_133 = arith.constant 0 : i32
    %c6_i32_134 = arith.constant 6 : i32
    %c0_i32_135 = arith.constant 0 : i32
    %c0_i32_136 = arith.constant 0 : i32
    %122 = tpu.memref_slice %arg3[%121, %c0_i32_135, %c0_i32_136] : memref<36x32x128xbf16, #tpu.memory_space<any>> -> memref<1x32x128xbf16, #tpu.memory_space<any>>
    %123 = tpu.memref_squeeze %122 : memref<1x32x128xbf16, #tpu.memory_space<any>> -> memref<32x128xbf16, #tpu.memory_space<any>>
    %c0_i32_137 = arith.constant 0 : i32
    %c0_i32_138 = arith.constant 0 : i32
    %124 = tpu.memref_slice %arg11[%c6_i32, %c0_i32_137, %c0_i32_138] : memref<8x32x128xbf16, #tpu.memory_space<vmem>> -> memref<1x32x128xbf16, #tpu.memory_space<vmem>>
    %125 = tpu.memref_squeeze %124 : memref<1x32x128xbf16, #tpu.memory_space<vmem>> -> memref<32x128xbf16, #tpu.memory_space<vmem>>
    %126 = tpu.memref_slice %arg14[%c0_i32_133, %c6_i32_134] : memref<3x8x!tpu.dma_semaphore, #tpu.memory_space<semaphore_mem>> -> memref<1x1x!tpu.dma_semaphore, #tpu.memory_space<semaphore_mem>>
    %127 = tpu.memref_squeeze %126 : memref<1x1x!tpu.dma_semaphore, #tpu.memory_space<semaphore_mem>> -> memref<!tpu.dma_semaphore, #tpu.memory_space<semaphore_mem>>
    tpu.enqueue_dma source(%123 : memref<32x128xbf16, #tpu.memory_space<any>>) target(%125 : memref<32x128xbf16, #tpu.memory_space<vmem>>) target_semaphore(%127 : memref<!tpu.dma_semaphore, #tpu.memory_space<semaphore_mem>>)
    %c6_i32_139 = arith.constant 6 : i32
    %c1_i32_140 = arith.constant 1 : i32
    %c6_i32_141 = arith.constant 6 : i32
    %c0_i32_142 = arith.constant 0 : i32
    %c0_i32_143 = arith.constant 0 : i32
    %128 = tpu.memref_slice %arg4[%121, %c0_i32_142, %c0_i32_143] : memref<36x32x128xbf16, #tpu.memory_space<any>> -> memref<1x32x128xbf16, #tpu.memory_space<any>>
    %129 = tpu.memref_squeeze %128 : memref<1x32x128xbf16, #tpu.memory_space<any>> -> memref<32x128xbf16, #tpu.memory_space<any>>
    %c0_i32_144 = arith.constant 0 : i32
    %c0_i32_145 = arith.constant 0 : i32
    %130 = tpu.memref_slice %arg12[%c6_i32_139, %c0_i32_144, %c0_i32_145] : memref<8x32x128xbf16, #tpu.memory_space<vmem>> -> memref<1x32x128xbf16, #tpu.memory_space<vmem>>
    %131 = tpu.memref_squeeze %130 : memref<1x32x128xbf16, #tpu.memory_space<vmem>> -> memref<32x128xbf16, #tpu.memory_space<vmem>>
    %132 = tpu.memref_slice %arg14[%c1_i32_140, %c6_i32_141] : memref<3x8x!tpu.dma_semaphore, #tpu.memory_space<semaphore_mem>> -> memref<1x1x!tpu.dma_semaphore, #tpu.memory_space<semaphore_mem>>
    %133 = tpu.memref_squeeze %132 : memref<1x1x!tpu.dma_semaphore, #tpu.memory_space<semaphore_mem>> -> memref<!tpu.dma_semaphore, #tpu.memory_space<semaphore_mem>>
    tpu.enqueue_dma source(%129 : memref<32x128xbf16, #tpu.memory_space<any>>) target(%131 : memref<32x128xbf16, #tpu.memory_space<vmem>>) target_semaphore(%133 : memref<!tpu.dma_semaphore, #tpu.memory_space<semaphore_mem>>)
    %c6_i32_146 = arith.constant 6 : i32
    %c2_i32_147 = arith.constant 2 : i32
    %c6_i32_148 = arith.constant 6 : i32
    %c0_i32_149 = arith.constant 0 : i32
    %c0_i32_150 = arith.constant 0 : i32
    %134 = tpu.memref_slice %arg5[%121, %c0_i32_149, %c0_i32_150] : memref<36x1x128xf32, #tpu.memory_space<any>> -> memref<1x1x128xf32, #tpu.memory_space<any>>
    %135 = tpu.memref_squeeze %134 : memref<1x1x128xf32, #tpu.memory_space<any>> -> memref<1x128xf32, #tpu.memory_space<any>>
    %c0_i32_151 = arith.constant 0 : i32
    %c0_i32_152 = arith.constant 0 : i32
    %136 = tpu.memref_slice %arg13[%c6_i32_146, %c0_i32_151, %c0_i32_152] : memref<8x1x128xf32, #tpu.memory_space<vmem>> -> memref<1x1x128xf32, #tpu.memory_space<vmem>>
    %137 = tpu.memref_squeeze %136 : memref<1x1x128xf32, #tpu.memory_space<vmem>> -> memref<1x128xf32, #tpu.memory_space<vmem>>
    %138 = tpu.memref_slice %arg14[%c2_i32_147, %c6_i32_148] : memref<3x8x!tpu.dma_semaphore, #tpu.memory_space<semaphore_mem>> -> memref<1x1x!tpu.dma_semaphore, #tpu.memory_space<semaphore_mem>>
    %139 = tpu.memref_squeeze %138 : memref<1x1x!tpu.dma_semaphore, #tpu.memory_space<semaphore_mem>> -> memref<!tpu.dma_semaphore, #tpu.memory_space<semaphore_mem>>
    tpu.enqueue_dma source(%135 : memref<1x128xf32, #tpu.memory_space<any>>) target(%137 : memref<1x128xf32, #tpu.memory_space<vmem>>) target_semaphore(%139 : memref<!tpu.dma_semaphore, #tpu.memory_space<semaphore_mem>>)
    %c7 = arith.constant 7 : index
    %c0_153 = arith.constant 0 : index
    %140 = memref.load %arg0[%c7, %c0_153] : memref<8x8xi32, #tpu.memory_space<smem>>
    %c36_i32_154 = arith.constant 36 : i32
    %141 = arith.remsi %140, %c36_i32_154 : i32
    %c7_i32 = arith.constant 7 : i32
    %c0_i32_155 = arith.constant 0 : i32
    %c7_i32_156 = arith.constant 7 : i32
    %c0_i32_157 = arith.constant 0 : i32
    %c0_i32_158 = arith.constant 0 : i32
    %142 = tpu.memref_slice %arg3[%141, %c0_i32_157, %c0_i32_158] : memref<36x32x128xbf16, #tpu.memory_space<any>> -> memref<1x32x128xbf16, #tpu.memory_space<any>>
    %143 = tpu.memref_squeeze %142 : memref<1x32x128xbf16, #tpu.memory_space<any>> -> memref<32x128xbf16, #tpu.memory_space<any>>
    %c0_i32_159 = arith.constant 0 : i32
    %c0_i32_160 = arith.constant 0 : i32
    %144 = tpu.memref_slice %arg11[%c7_i32, %c0_i32_159, %c0_i32_160] : memref<8x32x128xbf16, #tpu.memory_space<vmem>> -> memref<1x32x128xbf16, #tpu.memory_space<vmem>>
    %145 = tpu.memref_squeeze %144 : memref<1x32x128xbf16, #tpu.memory_space<vmem>> -> memref<32x128xbf16, #tpu.memory_space<vmem>>
    %146 = tpu.memref_slice %arg14[%c0_i32_155, %c7_i32_156] : memref<3x8x!tpu.dma_semaphore, #tpu.memory_space<semaphore_mem>> -> memref<1x1x!tpu.dma_semaphore, #tpu.memory_space<semaphore_mem>>
    %147 = tpu.memref_squeeze %146 : memref<1x1x!tpu.dma_semaphore, #tpu.memory_space<semaphore_mem>> -> memref<!tpu.dma_semaphore, #tpu.memory_space<semaphore_mem>>
    tpu.enqueue_dma source(%143 : memref<32x128xbf16, #tpu.memory_space<any>>) target(%145 : memref<32x128xbf16, #tpu.memory_space<vmem>>) target_semaphore(%147 : memref<!tpu.dma_semaphore, #tpu.memory_space<semaphore_mem>>)
    %c7_i32_161 = arith.constant 7 : i32
    %c1_i32_162 = arith.constant 1 : i32
    %c7_i32_163 = arith.constant 7 : i32
    %c0_i32_164 = arith.constant 0 : i32
    %c0_i32_165 = arith.constant 0 : i32
    %148 = tpu.memref_slice %arg4[%141, %c0_i32_164, %c0_i32_165] : memref<36x32x128xbf16, #tpu.memory_space<any>> -> memref<1x32x128xbf16, #tpu.memory_space<any>>
    %149 = tpu.memref_squeeze %148 : memref<1x32x128xbf16, #tpu.memory_space<any>> -> memref<32x128xbf16, #tpu.memory_space<any>>
    %c0_i32_166 = arith.constant 0 : i32
    %c0_i32_167 = arith.constant 0 : i32
    %150 = tpu.memref_slice %arg12[%c7_i32_161, %c0_i32_166, %c0_i32_167] : memref<8x32x128xbf16, #tpu.memory_space<vmem>> -> memref<1x32x128xbf16, #tpu.memory_space<vmem>>
    %151 = tpu.memref_squeeze %150 : memref<1x32x128xbf16, #tpu.memory_space<vmem>> -> memref<32x128xbf16, #tpu.memory_space<vmem>>
    %152 = tpu.memref_slice %arg14[%c1_i32_162, %c7_i32_163] : memref<3x8x!tpu.dma_semaphore, #tpu.memory_space<semaphore_mem>> -> memref<1x1x!tpu.dma_semaphore, #tpu.memory_space<semaphore_mem>>
    %153 = tpu.memref_squeeze %152 : memref<1x1x!tpu.dma_semaphore, #tpu.memory_space<semaphore_mem>> -> memref<!tpu.dma_semaphore, #tpu.memory_space<semaphore_mem>>
    tpu.enqueue_dma source(%149 : memref<32x128xbf16, #tpu.memory_space<any>>) target(%151 : memref<32x128xbf16, #tpu.memory_space<vmem>>) target_semaphore(%153 : memref<!tpu.dma_semaphore, #tpu.memory_space<semaphore_mem>>)
    %c7_i32_168 = arith.constant 7 : i32
    %c2_i32_169 = arith.constant 2 : i32
    %c7_i32_170 = arith.constant 7 : i32
    %c0_i32_171 = arith.constant 0 : i32
    %c0_i32_172 = arith.constant 0 : i32
    %154 = tpu.memref_slice %arg5[%141, %c0_i32_171, %c0_i32_172] : memref<36x1x128xf32, #tpu.memory_space<any>> -> memref<1x1x128xf32, #tpu.memory_space<any>>
    %155 = tpu.memref_squeeze %154 : memref<1x1x128xf32, #tpu.memory_space<any>> -> memref<1x128xf32, #tpu.memory_space<any>>
    %c0_i32_173 = arith.constant 0 : i32
    %c0_i32_174 = arith.constant 0 : i32
    %156 = tpu.memref_slice %arg13[%c7_i32_168, %c0_i32_173, %c0_i32_174] : memref<8x1x128xf32, #tpu.memory_space<vmem>> -> memref<1x1x128xf32, #tpu.memory_space<vmem>>
    %157 = tpu.memref_squeeze %156 : memref<1x1x128xf32, #tpu.memory_space<vmem>> -> memref<1x128xf32, #tpu.memory_space<vmem>>
    %158 = tpu.memref_slice %arg14[%c2_i32_169, %c7_i32_170] : memref<3x8x!tpu.dma_semaphore, #tpu.memory_space<semaphore_mem>> -> memref<1x1x!tpu.dma_semaphore, #tpu.memory_space<semaphore_mem>>
    %159 = tpu.memref_squeeze %158 : memref<1x1x!tpu.dma_semaphore, #tpu.memory_space<semaphore_mem>> -> memref<!tpu.dma_semaphore, #tpu.memory_space<semaphore_mem>>
    tpu.enqueue_dma source(%155 : memref<1x128xf32, #tpu.memory_space<any>>) target(%157 : memref<1x128xf32, #tpu.memory_space<vmem>>) target_semaphore(%159 : memref<!tpu.dma_semaphore, #tpu.memory_space<semaphore_mem>>)
    %c0_175 = arith.constant 0 : index
    %c0_176 = arith.constant 0 : index
    %160 = vector.load %arg1[%c0_175, %c0_176] : memref<8x8xi32, #tpu.memory_space<vmem>>, vector<8x8xi32>
    %161 = vector.shape_cast %160 : vector<8x8xi32> to vector<8x8x1xi32>
    %162 = tpu.iota {dimensions = array<i32: 2>} : vector<8x8x50xi32>
    %163 = vector.broadcast %161 : vector<8x8x1xi32> to vector<8x8x50xi32>
    %164 = arith.cmpi eq, %163, %162 : vector<8x8x50xi32>
    %165 = arith.extui %164 : vector<8x8x50xi1> to vector<8x8x50xi32>
    %166 = arith.sitofp %165 : vector<8x8x50xi32> to vector<8x8x50xf32>
    %167 = vector.shape_cast %166 : vector<8x8x50xf32> to vector<64x50xf32>
    %c0_177 = arith.constant 0 : index
    %c0_178 = arith.constant 0 : index
    %168 = vector.load %arg2[%c0_177, %c0_178] : memref<50x32xf32, #tpu.memory_space<vmem>>, vector<50x32xf32>
    %cst = arith.constant dense<0.000000e+00> : vector<64x32xf32>
    %169 = tpu.matmul %167, %168, %cst {dimension_numbers = #tpu.dot_dimension_numbers<[1], [0], [0], [1], [0, 0, 1, 1], [], []>} : vector<64x50xf32>, vector<50x32xf32>, vector<64x32xf32> -> vector<64x32xf32>
    %170 = vector.shape_cast %169 : vector<64x32xf32> to vector<8x8x32xf32>
    %c0_i32_179 = arith.constant 0 : i32
    %c0_i32_180 = arith.constant 0 : i32
    %c0_i32_181 = arith.constant 0 : i32
    %c0_i32_182 = arith.constant 0 : i32
    %c0_i32_183 = arith.constant 0 : i32
    %c0_i32_184 = arith.constant 0 : i32
    %171 = tpu.memref_slice %arg3[%c0_i32_179, %c0_i32_183, %c0_i32_184] : memref<36x32x128xbf16, #tpu.memory_space<any>> -> memref<1x32x128xbf16, #tpu.memory_space<any>>
    %172 = tpu.memref_squeeze %171 : memref<1x32x128xbf16, #tpu.memory_space<any>> -> memref<32x128xbf16, #tpu.memory_space<any>>
    %c0_i32_185 = arith.constant 0 : i32
    %c0_i32_186 = arith.constant 0 : i32
    %173 = tpu.memref_slice %arg11[%c0_i32_180, %c0_i32_185, %c0_i32_186] : memref<8x32x128xbf16, #tpu.memory_space<vmem>> -> memref<1x32x128xbf16, #tpu.memory_space<vmem>>
    %174 = tpu.memref_squeeze %173 : memref<1x32x128xbf16, #tpu.memory_space<vmem>> -> memref<32x128xbf16, #tpu.memory_space<vmem>>
    %175 = tpu.memref_slice %arg14[%c0_i32_181, %c0_i32_182] : memref<3x8x!tpu.dma_semaphore, #tpu.memory_space<semaphore_mem>> -> memref<1x1x!tpu.dma_semaphore, #tpu.memory_space<semaphore_mem>>
    %176 = tpu.memref_squeeze %175 : memref<1x1x!tpu.dma_semaphore, #tpu.memory_space<semaphore_mem>> -> memref<!tpu.dma_semaphore, #tpu.memory_space<semaphore_mem>>
    tpu.wait_dma2 semaphore(%176 : memref<!tpu.dma_semaphore, #tpu.memory_space<semaphore_mem>>) src(%172 : memref<32x128xbf16, #tpu.memory_space<any>>) dst(%174 : memref<32x128xbf16, #tpu.memory_space<vmem>>)
    %c0_i32_187 = arith.constant 0 : i32
    %c0_i32_188 = arith.constant 0 : i32
    %c2_i32_189 = arith.constant 2 : i32
    %c0_i32_190 = arith.constant 0 : i32
    %c0_i32_191 = arith.constant 0 : i32
    %c0_i32_192 = arith.constant 0 : i32
    %177 = tpu.memref_slice %arg5[%c0_i32_187, %c0_i32_191, %c0_i32_192] : memref<36x1x128xf32, #tpu.memory_space<any>> -> memref<1x1x128xf32, #tpu.memory_space<any>>
    %178 = tpu.memref_squeeze %177 : memref<1x1x128xf32, #tpu.memory_space<any>> -> memref<1x128xf32, #tpu.memory_space<any>>
    %c0_i32_193 = arith.constant 0 : i32
    %c0_i32_194 = arith.constant 0 : i32
    %179 = tpu.memref_slice %arg13[%c0_i32_188, %c0_i32_193, %c0_i32_194] : memref<8x1x128xf32, #tpu.memory_space<vmem>> -> memref<1x1x128xf32, #tpu.memory_space<vmem>>
    %180 = tpu.memref_squeeze %179 : memref<1x1x128xf32, #tpu.memory_space<vmem>> -> memref<1x128xf32, #tpu.memory_space<vmem>>
    %181 = tpu.memref_slice %arg14[%c2_i32_189, %c0_i32_190] : memref<3x8x!tpu.dma_semaphore, #tpu.memory_space<semaphore_mem>> -> memref<1x1x!tpu.dma_semaphore, #tpu.memory_space<semaphore_mem>>
    %182 = tpu.memref_squeeze %181 : memref<1x1x!tpu.dma_semaphore, #tpu.memory_space<semaphore_mem>> -> memref<!tpu.dma_semaphore, #tpu.memory_space<semaphore_mem>>
    tpu.wait_dma2 semaphore(%182 : memref<!tpu.dma_semaphore, #tpu.memory_space<semaphore_mem>>) src(%178 : memref<1x128xf32, #tpu.memory_space<any>>) dst(%180 : memref<1x128xf32, #tpu.memory_space<vmem>>)
    %c0_i32_195 = arith.constant 0 : i32
    %c1_i32_196 = arith.constant 1 : i32
    %c0_i32_197 = arith.constant 0 : i32
    %c1_i32_198 = arith.constant 1 : i32
    %c0_i32_199 = arith.constant 0 : i32
    %c0_i32_200 = arith.constant 0 : i32
    %183 = tpu.memref_slice %arg3[%c0_i32_195, %c0_i32_199, %c0_i32_200] : memref<36x32x128xbf16, #tpu.memory_space<any>> -> memref<1x32x128xbf16, #tpu.memory_space<any>>
    %184 = tpu.memref_squeeze %183 : memref<1x32x128xbf16, #tpu.memory_space<any>> -> memref<32x128xbf16, #tpu.memory_space<any>>
    %c0_i32_201 = arith.constant 0 : i32
    %c0_i32_202 = arith.constant 0 : i32
    %185 = tpu.memref_slice %arg11[%c1_i32_196, %c0_i32_201, %c0_i32_202] : memref<8x32x128xbf16, #tpu.memory_space<vmem>> -> memref<1x32x128xbf16, #tpu.memory_space<vmem>>
    %186 = tpu.memref_squeeze %185 : memref<1x32x128xbf16, #tpu.memory_space<vmem>> -> memref<32x128xbf16, #tpu.memory_space<vmem>>
    %187 = tpu.memref_slice %arg14[%c0_i32_197, %c1_i32_198] : memref<3x8x!tpu.dma_semaphore, #tpu.memory_space<semaphore_mem>> -> memref<1x1x!tpu.dma_semaphore, #tpu.memory_space<semaphore_mem>>
    %188 = tpu.memref_squeeze %187 : memref<1x1x!tpu.dma_semaphore, #tpu.memory_space<semaphore_mem>> -> memref<!tpu.dma_semaphore, #tpu.memory_space<semaphore_mem>>
    tpu.wait_dma2 semaphore(%188 : memref<!tpu.dma_semaphore, #tpu.memory_space<semaphore_mem>>) src(%184 : memref<32x128xbf16, #tpu.memory_space<any>>) dst(%186 : memref<32x128xbf16, #tpu.memory_space<vmem>>)
    %c0_i32_203 = arith.constant 0 : i32
    %c1_i32_204 = arith.constant 1 : i32
    %c2_i32_205 = arith.constant 2 : i32
    %c1_i32_206 = arith.constant 1 : i32
    %c0_i32_207 = arith.constant 0 : i32
    %c0_i32_208 = arith.constant 0 : i32
    %189 = tpu.memref_slice %arg5[%c0_i32_203, %c0_i32_207, %c0_i32_208] : memref<36x1x128xf32, #tpu.memory_space<any>> -> memref<1x1x128xf32, #tpu.memory_space<any>>
    %190 = tpu.memref_squeeze %189 : memref<1x1x128xf32, #tpu.memory_space<any>> -> memref<1x128xf32, #tpu.memory_space<any>>
    %c0_i32_209 = arith.constant 0 : i32
    %c0_i32_210 = arith.constant 0 : i32
    %191 = tpu.memref_slice %arg13[%c1_i32_204, %c0_i32_209, %c0_i32_210] : memref<8x1x128xf32, #tpu.memory_space<vmem>> -> memref<1x1x128xf32, #tpu.memory_space<vmem>>
    %192 = tpu.memref_squeeze %191 : memref<1x1x128xf32, #tpu.memory_space<vmem>> -> memref<1x128xf32, #tpu.memory_space<vmem>>
    %193 = tpu.memref_slice %arg14[%c2_i32_205, %c1_i32_206] : memref<3x8x!tpu.dma_semaphore, #tpu.memory_space<semaphore_mem>> -> memref<1x1x!tpu.dma_semaphore, #tpu.memory_space<semaphore_mem>>
    %194 = tpu.memref_squeeze %193 : memref<1x1x!tpu.dma_semaphore, #tpu.memory_space<semaphore_mem>> -> memref<!tpu.dma_semaphore, #tpu.memory_space<semaphore_mem>>
    tpu.wait_dma2 semaphore(%194 : memref<!tpu.dma_semaphore, #tpu.memory_space<semaphore_mem>>) src(%190 : memref<1x128xf32, #tpu.memory_space<any>>) dst(%192 : memref<1x128xf32, #tpu.memory_space<vmem>>)
    %c0_i32_211 = arith.constant 0 : i32
    %c2_i32_212 = arith.constant 2 : i32
    %c0_i32_213 = arith.constant 0 : i32
    %c2_i32_214 = arith.constant 2 : i32
    %c0_i32_215 = arith.constant 0 : i32
    %c0_i32_216 = arith.constant 0 : i32
    %195 = tpu.memref_slice %arg3[%c0_i32_211, %c0_i32_215, %c0_i32_216] : memref<36x32x128xbf16, #tpu.memory_space<any>> -> memref<1x32x128xbf16, #tpu.memory_space<any>>
    %196 = tpu.memref_squeeze %195 : memref<1x32x128xbf16, #tpu.memory_space<any>> -> memref<32x128xbf16, #tpu.memory_space<any>>
    %c0_i32_217 = arith.constant 0 : i32
    %c0_i32_218 = arith.constant 0 : i32
    %197 = tpu.memref_slice %arg11[%c2_i32_212, %c0_i32_217, %c0_i32_218] : memref<8x32x128xbf16, #tpu.memory_space<vmem>> -> memref<1x32x128xbf16, #tpu.memory_space<vmem>>
    %198 = tpu.memref_squeeze %197 : memref<1x32x128xbf16, #tpu.memory_space<vmem>> -> memref<32x128xbf16, #tpu.memory_space<vmem>>
    %199 = tpu.memref_slice %arg14[%c0_i32_213, %c2_i32_214] : memref<3x8x!tpu.dma_semaphore, #tpu.memory_space<semaphore_mem>> -> memref<1x1x!tpu.dma_semaphore, #tpu.memory_space<semaphore_mem>>
    %200 = tpu.memref_squeeze %199 : memref<1x1x!tpu.dma_semaphore, #tpu.memory_space<semaphore_mem>> -> memref<!tpu.dma_semaphore, #tpu.memory_space<semaphore_mem>>
    tpu.wait_dma2 semaphore(%200 : memref<!tpu.dma_semaphore, #tpu.memory_space<semaphore_mem>>) src(%196 : memref<32x128xbf16, #tpu.memory_space<any>>) dst(%198 : memref<32x128xbf16, #tpu.memory_space<vmem>>)
    %c0_i32_219 = arith.constant 0 : i32
    %c2_i32_220 = arith.constant 2 : i32
    %c2_i32_221 = arith.constant 2 : i32
    %c2_i32_222 = arith.constant 2 : i32
    %c0_i32_223 = arith.constant 0 : i32
    %c0_i32_224 = arith.constant 0 : i32
    %201 = tpu.memref_slice %arg5[%c0_i32_219, %c0_i32_223, %c0_i32_224] : memref<36x1x128xf32, #tpu.memory_space<any>> -> memref<1x1x128xf32, #tpu.memory_space<any>>
    %202 = tpu.memref_squeeze %201 : memref<1x1x128xf32, #tpu.memory_space<any>> -> memref<1x128xf32, #tpu.memory_space<any>>
    %c0_i32_225 = arith.constant 0 : i32
    %c0_i32_226 = arith.constant 0 : i32
    %203 = tpu.memref_slice %arg13[%c2_i32_220, %c0_i32_225, %c0_i32_226] : memref<8x1x128xf32, #tpu.memory_space<vmem>> -> memref<1x1x128xf32, #tpu.memory_space<vmem>>
    %204 = tpu.memref_squeeze %203 : memref<1x1x128xf32, #tpu.memory_space<vmem>> -> memref<1x128xf32, #tpu.memory_space<vmem>>
    %205 = tpu.memref_slice %arg14[%c2_i32_221, %c2_i32_222] : memref<3x8x!tpu.dma_semaphore, #tpu.memory_space<semaphore_mem>> -> memref<1x1x!tpu.dma_semaphore, #tpu.memory_space<semaphore_mem>>
    %206 = tpu.memref_squeeze %205 : memref<1x1x!tpu.dma_semaphore, #tpu.memory_space<semaphore_mem>> -> memref<!tpu.dma_semaphore, #tpu.memory_space<semaphore_mem>>
    tpu.wait_dma2 semaphore(%206 : memref<!tpu.dma_semaphore, #tpu.memory_space<semaphore_mem>>) src(%202 : memref<1x128xf32, #tpu.memory_space<any>>) dst(%204 : memref<1x128xf32, #tpu.memory_space<vmem>>)
    %c0_i32_227 = arith.constant 0 : i32
    %c3_i32_228 = arith.constant 3 : i32
    %c0_i32_229 = arith.constant 0 : i32
    %c3_i32_230 = arith.constant 3 : i32
    %c0_i32_231 = arith.constant 0 : i32
    %c0_i32_232 = arith.constant 0 : i32
    %207 = tpu.memref_slice %arg3[%c0_i32_227, %c0_i32_231, %c0_i32_232] : memref<36x32x128xbf16, #tpu.memory_space<any>> -> memref<1x32x128xbf16, #tpu.memory_space<any>>
    %208 = tpu.memref_squeeze %207 : memref<1x32x128xbf16, #tpu.memory_space<any>> -> memref<32x128xbf16, #tpu.memory_space<any>>
    %c0_i32_233 = arith.constant 0 : i32
    %c0_i32_234 = arith.constant 0 : i32
    %209 = tpu.memref_slice %arg11[%c3_i32_228, %c0_i32_233, %c0_i32_234] : memref<8x32x128xbf16, #tpu.memory_space<vmem>> -> memref<1x32x128xbf16, #tpu.memory_space<vmem>>
    %210 = tpu.memref_squeeze %209 : memref<1x32x128xbf16, #tpu.memory_space<vmem>> -> memref<32x128xbf16, #tpu.memory_space<vmem>>
    %211 = tpu.memref_slice %arg14[%c0_i32_229, %c3_i32_230] : memref<3x8x!tpu.dma_semaphore, #tpu.memory_space<semaphore_mem>> -> memref<1x1x!tpu.dma_semaphore, #tpu.memory_space<semaphore_mem>>
    %212 = tpu.memref_squeeze %211 : memref<1x1x!tpu.dma_semaphore, #tpu.memory_space<semaphore_mem>> -> memref<!tpu.dma_semaphore, #tpu.memory_space<semaphore_mem>>
    tpu.wait_dma2 semaphore(%212 : memref<!tpu.dma_semaphore, #tpu.memory_space<semaphore_mem>>) src(%208 : memref<32x128xbf16, #tpu.memory_space<any>>) dst(%210 : memref<32x128xbf16, #tpu.memory_space<vmem>>)
    %c0_i32_235 = arith.constant 0 : i32
    %c3_i32_236 = arith.constant 3 : i32
    %c2_i32_237 = arith.constant 2 : i32
    %c3_i32_238 = arith.constant 3 : i32
    %c0_i32_239 = arith.constant 0 : i32
    %c0_i32_240 = arith.constant 0 : i32
    %213 = tpu.memref_slice %arg5[%c0_i32_235, %c0_i32_239, %c0_i32_240] : memref<36x1x128xf32, #tpu.memory_space<any>> -> memref<1x1x128xf32, #tpu.memory_space<any>>
    %214 = tpu.memref_squeeze %213 : memref<1x1x128xf32, #tpu.memory_space<any>> -> memref<1x128xf32, #tpu.memory_space<any>>
    %c0_i32_241 = arith.constant 0 : i32
    %c0_i32_242 = arith.constant 0 : i32
    %215 = tpu.memref_slice %arg13[%c3_i32_236, %c0_i32_241, %c0_i32_242] : memref<8x1x128xf32, #tpu.memory_space<vmem>> -> memref<1x1x128xf32, #tpu.memory_space<vmem>>
    %216 = tpu.memref_squeeze %215 : memref<1x1x128xf32, #tpu.memory_space<vmem>> -> memref<1x128xf32, #tpu.memory_space<vmem>>
    %217 = tpu.memref_slice %arg14[%c2_i32_237, %c3_i32_238] : memref<3x8x!tpu.dma_semaphore, #tpu.memory_space<semaphore_mem>> -> memref<1x1x!tpu.dma_semaphore, #tpu.memory_space<semaphore_mem>>
    %218 = tpu.memref_squeeze %217 : memref<1x1x!tpu.dma_semaphore, #tpu.memory_space<semaphore_mem>> -> memref<!tpu.dma_semaphore, #tpu.memory_space<semaphore_mem>>
    tpu.wait_dma2 semaphore(%218 : memref<!tpu.dma_semaphore, #tpu.memory_space<semaphore_mem>>) src(%214 : memref<1x128xf32, #tpu.memory_space<any>>) dst(%216 : memref<1x128xf32, #tpu.memory_space<vmem>>)
    %c0_i32_243 = arith.constant 0 : i32
    %c4_i32_244 = arith.constant 4 : i32
    %c0_i32_245 = arith.constant 0 : i32
    %c4_i32_246 = arith.constant 4 : i32
    %c0_i32_247 = arith.constant 0 : i32
    %c0_i32_248 = arith.constant 0 : i32
    %219 = tpu.memref_slice %arg3[%c0_i32_243, %c0_i32_247, %c0_i32_248] : memref<36x32x128xbf16, #tpu.memory_space<any>> -> memref<1x32x128xbf16, #tpu.memory_space<any>>
    %220 = tpu.memref_squeeze %219 : memref<1x32x128xbf16, #tpu.memory_space<any>> -> memref<32x128xbf16, #tpu.memory_space<any>>
    %c0_i32_249 = arith.constant 0 : i32
    %c0_i32_250 = arith.constant 0 : i32
    %221 = tpu.memref_slice %arg11[%c4_i32_244, %c0_i32_249, %c0_i32_250] : memref<8x32x128xbf16, #tpu.memory_space<vmem>> -> memref<1x32x128xbf16, #tpu.memory_space<vmem>>
    %222 = tpu.memref_squeeze %221 : memref<1x32x128xbf16, #tpu.memory_space<vmem>> -> memref<32x128xbf16, #tpu.memory_space<vmem>>
    %223 = tpu.memref_slice %arg14[%c0_i32_245, %c4_i32_246] : memref<3x8x!tpu.dma_semaphore, #tpu.memory_space<semaphore_mem>> -> memref<1x1x!tpu.dma_semaphore, #tpu.memory_space<semaphore_mem>>
    %224 = tpu.memref_squeeze %223 : memref<1x1x!tpu.dma_semaphore, #tpu.memory_space<semaphore_mem>> -> memref<!tpu.dma_semaphore, #tpu.memory_space<semaphore_mem>>
    tpu.wait_dma2 semaphore(%224 : memref<!tpu.dma_semaphore, #tpu.memory_space<semaphore_mem>>) src(%220 : memref<32x128xbf16, #tpu.memory_space<any>>) dst(%222 : memref<32x128xbf16, #tpu.memory_space<vmem>>)
    %c0_i32_251 = arith.constant 0 : i32
    %c4_i32_252 = arith.constant 4 : i32
    %c2_i32_253 = arith.constant 2 : i32
    %c4_i32_254 = arith.constant 4 : i32
    %c0_i32_255 = arith.constant 0 : i32
    %c0_i32_256 = arith.constant 0 : i32
    %225 = tpu.memref_slice %arg5[%c0_i32_251, %c0_i32_255, %c0_i32_256] : memref<36x1x128xf32, #tpu.memory_space<any>> -> memref<1x1x128xf32, #tpu.memory_space<any>>
    %226 = tpu.memref_squeeze %225 : memref<1x1x128xf32, #tpu.memory_space<any>> -> memref<1x128xf32, #tpu.memory_space<any>>
    %c0_i32_257 = arith.constant 0 : i32
    %c0_i32_258 = arith.constant 0 : i32
    %227 = tpu.memref_slice %arg13[%c4_i32_252, %c0_i32_257, %c0_i32_258] : memref<8x1x128xf32, #tpu.memory_space<vmem>> -> memref<1x1x128xf32, #tpu.memory_space<vmem>>
    %228 = tpu.memref_squeeze %227 : memref<1x1x128xf32, #tpu.memory_space<vmem>> -> memref<1x128xf32, #tpu.memory_space<vmem>>
    %229 = tpu.memref_slice %arg14[%c2_i32_253, %c4_i32_254] : memref<3x8x!tpu.dma_semaphore, #tpu.memory_space<semaphore_mem>> -> memref<1x1x!tpu.dma_semaphore, #tpu.memory_space<semaphore_mem>>
    %230 = tpu.memref_squeeze %229 : memref<1x1x!tpu.dma_semaphore, #tpu.memory_space<semaphore_mem>> -> memref<!tpu.dma_semaphore, #tpu.memory_space<semaphore_mem>>
    tpu.wait_dma2 semaphore(%230 : memref<!tpu.dma_semaphore, #tpu.memory_space<semaphore_mem>>) src(%226 : memref<1x128xf32, #tpu.memory_space<any>>) dst(%228 : memref<1x128xf32, #tpu.memory_space<vmem>>)
    %c0_i32_259 = arith.constant 0 : i32
    %c5_i32_260 = arith.constant 5 : i32
    %c0_i32_261 = arith.constant 0 : i32
    %c5_i32_262 = arith.constant 5 : i32
    %c0_i32_263 = arith.constant 0 : i32
    %c0_i32_264 = arith.constant 0 : i32
    %231 = tpu.memref_slice %arg3[%c0_i32_259, %c0_i32_263, %c0_i32_264] : memref<36x32x128xbf16, #tpu.memory_space<any>> -> memref<1x32x128xbf16, #tpu.memory_space<any>>
    %232 = tpu.memref_squeeze %231 : memref<1x32x128xbf16, #tpu.memory_space<any>> -> memref<32x128xbf16, #tpu.memory_space<any>>
    %c0_i32_265 = arith.constant 0 : i32
    %c0_i32_266 = arith.constant 0 : i32
    %233 = tpu.memref_slice %arg11[%c5_i32_260, %c0_i32_265, %c0_i32_266] : memref<8x32x128xbf16, #tpu.memory_space<vmem>> -> memref<1x32x128xbf16, #tpu.memory_space<vmem>>
    %234 = tpu.memref_squeeze %233 : memref<1x32x128xbf16, #tpu.memory_space<vmem>> -> memref<32x128xbf16, #tpu.memory_space<vmem>>
    %235 = tpu.memref_slice %arg14[%c0_i32_261, %c5_i32_262] : memref<3x8x!tpu.dma_semaphore, #tpu.memory_space<semaphore_mem>> -> memref<1x1x!tpu.dma_semaphore, #tpu.memory_space<semaphore_mem>>
    %236 = tpu.memref_squeeze %235 : memref<1x1x!tpu.dma_semaphore, #tpu.memory_space<semaphore_mem>> -> memref<!tpu.dma_semaphore, #tpu.memory_space<semaphore_mem>>
    tpu.wait_dma2 semaphore(%236 : memref<!tpu.dma_semaphore, #tpu.memory_space<semaphore_mem>>) src(%232 : memref<32x128xbf16, #tpu.memory_space<any>>) dst(%234 : memref<32x128xbf16, #tpu.memory_space<vmem>>)
    %c0_i32_267 = arith.constant 0 : i32
    %c5_i32_268 = arith.constant 5 : i32
    %c2_i32_269 = arith.constant 2 : i32
    %c5_i32_270 = arith.constant 5 : i32
    %c0_i32_271 = arith.constant 0 : i32
    %c0_i32_272 = arith.constant 0 : i32
    %237 = tpu.memref_slice %arg5[%c0_i32_267, %c0_i32_271, %c0_i32_272] : memref<36x1x128xf32, #tpu.memory_space<any>> -> memref<1x1x128xf32, #tpu.memory_space<any>>
    %238 = tpu.memref_squeeze %237 : memref<1x1x128xf32, #tpu.memory_space<any>> -> memref<1x128xf32, #tpu.memory_space<any>>
    %c0_i32_273 = arith.constant 0 : i32
    %c0_i32_274 = arith.constant 0 : i32
    %239 = tpu.memref_slice %arg13[%c5_i32_268, %c0_i32_273, %c0_i32_274] : memref<8x1x128xf32, #tpu.memory_space<vmem>> -> memref<1x1x128xf32, #tpu.memory_space<vmem>>
    %240 = tpu.memref_squeeze %239 : memref<1x1x128xf32, #tpu.memory_space<vmem>> -> memref<1x128xf32, #tpu.memory_space<vmem>>
    %241 = tpu.memref_slice %arg14[%c2_i32_269, %c5_i32_270] : memref<3x8x!tpu.dma_semaphore, #tpu.memory_space<semaphore_mem>> -> memref<1x1x!tpu.dma_semaphore, #tpu.memory_space<semaphore_mem>>
    %242 = tpu.memref_squeeze %241 : memref<1x1x!tpu.dma_semaphore, #tpu.memory_space<semaphore_mem>> -> memref<!tpu.dma_semaphore, #tpu.memory_space<semaphore_mem>>
    tpu.wait_dma2 semaphore(%242 : memref<!tpu.dma_semaphore, #tpu.memory_space<semaphore_mem>>) src(%238 : memref<1x128xf32, #tpu.memory_space<any>>) dst(%240 : memref<1x128xf32, #tpu.memory_space<vmem>>)
    %c0_i32_275 = arith.constant 0 : i32
    %c6_i32_276 = arith.constant 6 : i32
    %c0_i32_277 = arith.constant 0 : i32
    %c6_i32_278 = arith.constant 6 : i32
    %c0_i32_279 = arith.constant 0 : i32
    %c0_i32_280 = arith.constant 0 : i32
    %243 = tpu.memref_slice %arg3[%c0_i32_275, %c0_i32_279, %c0_i32_280] : memref<36x32x128xbf16, #tpu.memory_space<any>> -> memref<1x32x128xbf16, #tpu.memory_space<any>>
    %244 = tpu.memref_squeeze %243 : memref<1x32x128xbf16, #tpu.memory_space<any>> -> memref<32x128xbf16, #tpu.memory_space<any>>
    %c0_i32_281 = arith.constant 0 : i32
    %c0_i32_282 = arith.constant 0 : i32
    %245 = tpu.memref_slice %arg11[%c6_i32_276, %c0_i32_281, %c0_i32_282] : memref<8x32x128xbf16, #tpu.memory_space<vmem>> -> memref<1x32x128xbf16, #tpu.memory_space<vmem>>
    %246 = tpu.memref_squeeze %245 : memref<1x32x128xbf16, #tpu.memory_space<vmem>> -> memref<32x128xbf16, #tpu.memory_space<vmem>>
    %247 = tpu.memref_slice %arg14[%c0_i32_277, %c6_i32_278] : memref<3x8x!tpu.dma_semaphore, #tpu.memory_space<semaphore_mem>> -> memref<1x1x!tpu.dma_semaphore, #tpu.memory_space<semaphore_mem>>
    %248 = tpu.memref_squeeze %247 : memref<1x1x!tpu.dma_semaphore, #tpu.memory_space<semaphore_mem>> -> memref<!tpu.dma_semaphore, #tpu.memory_space<semaphore_mem>>
    tpu.wait_dma2 semaphore(%248 : memref<!tpu.dma_semaphore, #tpu.memory_space<semaphore_mem>>) src(%244 : memref<32x128xbf16, #tpu.memory_space<any>>) dst(%246 : memref<32x128xbf16, #tpu.memory_space<vmem>>)
    %c0_i32_283 = arith.constant 0 : i32
    %c6_i32_284 = arith.constant 6 : i32
    %c2_i32_285 = arith.constant 2 : i32
    %c6_i32_286 = arith.constant 6 : i32
    %c0_i32_287 = arith.constant 0 : i32
    %c0_i32_288 = arith.constant 0 : i32
    %249 = tpu.memref_slice %arg5[%c0_i32_283, %c0_i32_287, %c0_i32_288] : memref<36x1x128xf32, #tpu.memory_space<any>> -> memref<1x1x128xf32, #tpu.memory_space<any>>
    %250 = tpu.memref_squeeze %249 : memref<1x1x128xf32, #tpu.memory_space<any>> -> memref<1x128xf32, #tpu.memory_space<any>>
    %c0_i32_289 = arith.constant 0 : i32
    %c0_i32_290 = arith.constant 0 : i32
    %251 = tpu.memref_slice %arg13[%c6_i32_284, %c0_i32_289, %c0_i32_290] : memref<8x1x128xf32, #tpu.memory_space<vmem>> -> memref<1x1x128xf32, #tpu.memory_space<vmem>>
    %252 = tpu.memref_squeeze %251 : memref<1x1x128xf32, #tpu.memory_space<vmem>> -> memref<1x128xf32, #tpu.memory_space<vmem>>
    %253 = tpu.memref_slice %arg14[%c2_i32_285, %c6_i32_286] : memref<3x8x!tpu.dma_semaphore, #tpu.memory_space<semaphore_mem>> -> memref<1x1x!tpu.dma_semaphore, #tpu.memory_space<semaphore_mem>>
    %254 = tpu.memref_squeeze %253 : memref<1x1x!tpu.dma_semaphore, #tpu.memory_space<semaphore_mem>> -> memref<!tpu.dma_semaphore, #tpu.memory_space<semaphore_mem>>
    tpu.wait_dma2 semaphore(%254 : memref<!tpu.dma_semaphore, #tpu.memory_space<semaphore_mem>>) src(%250 : memref<1x128xf32, #tpu.memory_space<any>>) dst(%252 : memref<1x128xf32, #tpu.memory_space<vmem>>)
    %c0_i32_291 = arith.constant 0 : i32
    %c7_i32_292 = arith.constant 7 : i32
    %c0_i32_293 = arith.constant 0 : i32
    %c7_i32_294 = arith.constant 7 : i32
    %c0_i32_295 = arith.constant 0 : i32
    %c0_i32_296 = arith.constant 0 : i32
    %255 = tpu.memref_slice %arg3[%c0_i32_291, %c0_i32_295, %c0_i32_296] : memref<36x32x128xbf16, #tpu.memory_space<any>> -> memref<1x32x128xbf16, #tpu.memory_space<any>>
    %256 = tpu.memref_squeeze %255 : memref<1x32x128xbf16, #tpu.memory_space<any>> -> memref<32x128xbf16, #tpu.memory_space<any>>
    %c0_i32_297 = arith.constant 0 : i32
    %c0_i32_298 = arith.constant 0 : i32
    %257 = tpu.memref_slice %arg11[%c7_i32_292, %c0_i32_297, %c0_i32_298] : memref<8x32x128xbf16, #tpu.memory_space<vmem>> -> memref<1x32x128xbf16, #tpu.memory_space<vmem>>
    %258 = tpu.memref_squeeze %257 : memref<1x32x128xbf16, #tpu.memory_space<vmem>> -> memref<32x128xbf16, #tpu.memory_space<vmem>>
    %259 = tpu.memref_slice %arg14[%c0_i32_293, %c7_i32_294] : memref<3x8x!tpu.dma_semaphore, #tpu.memory_space<semaphore_mem>> -> memref<1x1x!tpu.dma_semaphore, #tpu.memory_space<semaphore_mem>>
    %260 = tpu.memref_squeeze %259 : memref<1x1x!tpu.dma_semaphore, #tpu.memory_space<semaphore_mem>> -> memref<!tpu.dma_semaphore, #tpu.memory_space<semaphore_mem>>
    tpu.wait_dma2 semaphore(%260 : memref<!tpu.dma_semaphore, #tpu.memory_space<semaphore_mem>>) src(%256 : memref<32x128xbf16, #tpu.memory_space<any>>) dst(%258 : memref<32x128xbf16, #tpu.memory_space<vmem>>)
    %c0_i32_299 = arith.constant 0 : i32
    %c7_i32_300 = arith.constant 7 : i32
    %c2_i32_301 = arith.constant 2 : i32
    %c7_i32_302 = arith.constant 7 : i32
    %c0_i32_303 = arith.constant 0 : i32
    %c0_i32_304 = arith.constant 0 : i32
    %261 = tpu.memref_slice %arg5[%c0_i32_299, %c0_i32_303, %c0_i32_304] : memref<36x1x128xf32, #tpu.memory_space<any>> -> memref<1x1x128xf32, #tpu.memory_space<any>>
    %262 = tpu.memref_squeeze %261 : memref<1x1x128xf32, #tpu.memory_space<any>> -> memref<1x128xf32, #tpu.memory_space<any>>
    %c0_i32_305 = arith.constant 0 : i32
    %c0_i32_306 = arith.constant 0 : i32
    %263 = tpu.memref_slice %arg13[%c7_i32_300, %c0_i32_305, %c0_i32_306] : memref<8x1x128xf32, #tpu.memory_space<vmem>> -> memref<1x1x128xf32, #tpu.memory_space<vmem>>
    %264 = tpu.memref_squeeze %263 : memref<1x1x128xf32, #tpu.memory_space<vmem>> -> memref<1x128xf32, #tpu.memory_space<vmem>>
    %265 = tpu.memref_slice %arg14[%c2_i32_301, %c7_i32_302] : memref<3x8x!tpu.dma_semaphore, #tpu.memory_space<semaphore_mem>> -> memref<1x1x!tpu.dma_semaphore, #tpu.memory_space<semaphore_mem>>
    %266 = tpu.memref_squeeze %265 : memref<1x1x!tpu.dma_semaphore, #tpu.memory_space<semaphore_mem>> -> memref<!tpu.dma_semaphore, #tpu.memory_space<semaphore_mem>>
    tpu.wait_dma2 semaphore(%266 : memref<!tpu.dma_semaphore, #tpu.memory_space<semaphore_mem>>) src(%262 : memref<1x128xf32, #tpu.memory_space<any>>) dst(%264 : memref<1x128xf32, #tpu.memory_space<vmem>>)
    %267 = arith.truncf %170 : vector<8x8x32xf32> to vector<8x8x32xbf16>
    %c0_307 = arith.constant 0 : index
    %c0_308 = arith.constant 0 : index
    %c0_309 = arith.constant 0 : index
    %268 = vector.load %arg11[%c0_307, %c0_308, %c0_309] : memref<8x32x128xbf16, #tpu.memory_space<vmem>>, vector<8x32x128xbf16>
    "tpu.trace_start"() <{level = 10 : i32, message = "tbe,teg->tbg"}> : () -> ()
    %cst_310 = arith.constant dense<0.000000e+00> : vector<8x8x128xf32>
    %269 = tpu.matmul %267, %268, %cst_310 {dimension_numbers = #tpu.dot_dimension_numbers<[2], [1], [1], [2], [0, 0, 0, 1, 1, 2], [0], [0]>} : vector<8x8x32xbf16>, vector<8x32x128xbf16>, vector<8x8x128xf32> -> vector<8x8x128xf32>
    "tpu.trace_stop"() : () -> ()
    %c0_311 = arith.constant 0 : index
    %c0_312 = arith.constant 0 : index
    %c0_313 = arith.constant 0 : index
    %270 = vector.load %arg13[%c0_311, %c0_312, %c0_313] : memref<8x1x128xf32, #tpu.memory_space<vmem>>, vector<8x1x128xf32>
    %271 = vector.broadcast %270 : vector<8x1x128xf32> to vector<8x8x128xf32>
    %272 = arith.addf %269, %271 : vector<8x8x128xf32>
    %c0_i32_314 = arith.constant 0 : i32
    %c0_i32_315 = arith.constant 0 : i32
    %c1_i32_316 = arith.constant 1 : i32
    %c0_i32_317 = arith.constant 0 : i32
    %c0_i32_318 = arith.constant 0 : i32
    %c0_i32_319 = arith.constant 0 : i32
    %273 = tpu.memref_slice %arg4[%c0_i32_314, %c0_i32_318, %c0_i32_319] : memref<36x32x128xbf16, #tpu.memory_space<any>> -> memref<1x32x128xbf16, #tpu.memory_space<any>>
    %274 = tpu.memref_squeeze %273 : memref<1x32x128xbf16, #tpu.memory_space<any>> -> memref<32x128xbf16, #tpu.memory_space<any>>
    %c0_i32_320 = arith.constant 0 : i32
    %c0_i32_321 = arith.constant 0 : i32
    %275 = tpu.memref_slice %arg12[%c0_i32_315, %c0_i32_320, %c0_i32_321] : memref<8x32x128xbf16, #tpu.memory_space<vmem>> -> memref<1x32x128xbf16, #tpu.memory_space<vmem>>
    %276 = tpu.memref_squeeze %275 : memref<1x32x128xbf16, #tpu.memory_space<vmem>> -> memref<32x128xbf16, #tpu.memory_space<vmem>>
    %277 = tpu.memref_slice %arg14[%c1_i32_316, %c0_i32_317] : memref<3x8x!tpu.dma_semaphore, #tpu.memory_space<semaphore_mem>> -> memref<1x1x!tpu.dma_semaphore, #tpu.memory_space<semaphore_mem>>
    %278 = tpu.memref_squeeze %277 : memref<1x1x!tpu.dma_semaphore, #tpu.memory_space<semaphore_mem>> -> memref<!tpu.dma_semaphore, #tpu.memory_space<semaphore_mem>>
    tpu.wait_dma2 semaphore(%278 : memref<!tpu.dma_semaphore, #tpu.memory_space<semaphore_mem>>) src(%274 : memref<32x128xbf16, #tpu.memory_space<any>>) dst(%276 : memref<32x128xbf16, #tpu.memory_space<vmem>>)
    %c0_i32_322 = arith.constant 0 : i32
    %c1_i32_323 = arith.constant 1 : i32
    %c1_i32_324 = arith.constant 1 : i32
    %c1_i32_325 = arith.constant 1 : i32
    %c0_i32_326 = arith.constant 0 : i32
    %c0_i32_327 = arith.constant 0 : i32
    %279 = tpu.memref_slice %arg4[%c0_i32_322, %c0_i32_326, %c0_i32_327] : memref<36x32x128xbf16, #tpu.memory_space<any>> -> memref<1x32x128xbf16, #tpu.memory_space<any>>
    %280 = tpu.memref_squeeze %279 : memref<1x32x128xbf16, #tpu.memory_space<any>> -> memref<32x128xbf16, #tpu.memory_space<any>>
    %c0_i32_328 = arith.constant 0 : i32
    %c0_i32_329 = arith.constant 0 : i32
    %281 = tpu.memref_slice %arg12[%c1_i32_323, %c0_i32_328, %c0_i32_329] : memref<8x32x128xbf16, #tpu.memory_space<vmem>> -> memref<1x32x128xbf16, #tpu.memory_space<vmem>>
    %282 = tpu.memref_squeeze %281 : memref<1x32x128xbf16, #tpu.memory_space<vmem>> -> memref<32x128xbf16, #tpu.memory_space<vmem>>
    %283 = tpu.memref_slice %arg14[%c1_i32_324, %c1_i32_325] : memref<3x8x!tpu.dma_semaphore, #tpu.memory_space<semaphore_mem>> -> memref<1x1x!tpu.dma_semaphore, #tpu.memory_space<semaphore_mem>>
    %284 = tpu.memref_squeeze %283 : memref<1x1x!tpu.dma_semaphore, #tpu.memory_space<semaphore_mem>> -> memref<!tpu.dma_semaphore, #tpu.memory_space<semaphore_mem>>
    tpu.wait_dma2 semaphore(%284 : memref<!tpu.dma_semaphore, #tpu.memory_space<semaphore_mem>>) src(%280 : memref<32x128xbf16, #tpu.memory_space<any>>) dst(%282 : memref<32x128xbf16, #tpu.memory_space<vmem>>)
    %c0_i32_330 = arith.constant 0 : i32
    %c2_i32_331 = arith.constant 2 : i32
    %c1_i32_332 = arith.constant 1 : i32
    %c2_i32_333 = arith.constant 2 : i32
    %c0_i32_334 = arith.constant 0 : i32
    %c0_i32_335 = arith.constant 0 : i32
    %285 = tpu.memref_slice %arg4[%c0_i32_330, %c0_i32_334, %c0_i32_335] : memref<36x32x128xbf16, #tpu.memory_space<any>> -> memref<1x32x128xbf16, #tpu.memory_space<any>>
    %286 = tpu.memref_squeeze %285 : memref<1x32x128xbf16, #tpu.memory_space<any>> -> memref<32x128xbf16, #tpu.memory_space<any>>
    %c0_i32_336 = arith.constant 0 : i32
    %c0_i32_337 = arith.constant 0 : i32
    %287 = tpu.memref_slice %arg12[%c2_i32_331, %c0_i32_336, %c0_i32_337] : memref<8x32x128xbf16, #tpu.memory_space<vmem>> -> memref<1x32x128xbf16, #tpu.memory_space<vmem>>
    %288 = tpu.memref_squeeze %287 : memref<1x32x128xbf16, #tpu.memory_space<vmem>> -> memref<32x128xbf16, #tpu.memory_space<vmem>>
    %289 = tpu.memref_slice %arg14[%c1_i32_332, %c2_i32_333] : memref<3x8x!tpu.dma_semaphore, #tpu.memory_space<semaphore_mem>> -> memref<1x1x!tpu.dma_semaphore, #tpu.memory_space<semaphore_mem>>
    %290 = tpu.memref_squeeze %289 : memref<1x1x!tpu.dma_semaphore, #tpu.memory_space<semaphore_mem>> -> memref<!tpu.dma_semaphore, #tpu.memory_space<semaphore_mem>>
    tpu.wait_dma2 semaphore(%290 : memref<!tpu.dma_semaphore, #tpu.memory_space<semaphore_mem>>) src(%286 : memref<32x128xbf16, #tpu.memory_space<any>>) dst(%288 : memref<32x128xbf16, #tpu.memory_space<vmem>>)
    %c0_i32_338 = arith.constant 0 : i32
    %c3_i32_339 = arith.constant 3 : i32
    %c1_i32_340 = arith.constant 1 : i32
    %c3_i32_341 = arith.constant 3 : i32
    %c0_i32_342 = arith.constant 0 : i32
    %c0_i32_343 = arith.constant 0 : i32
    %291 = tpu.memref_slice %arg4[%c0_i32_338, %c0_i32_342, %c0_i32_343] : memref<36x32x128xbf16, #tpu.memory_space<any>> -> memref<1x32x128xbf16, #tpu.memory_space<any>>
    %292 = tpu.memref_squeeze %291 : memref<1x32x128xbf16, #tpu.memory_space<any>> -> memref<32x128xbf16, #tpu.memory_space<any>>
    %c0_i32_344 = arith.constant 0 : i32
    %c0_i32_345 = arith.constant 0 : i32
    %293 = tpu.memref_slice %arg12[%c3_i32_339, %c0_i32_344, %c0_i32_345] : memref<8x32x128xbf16, #tpu.memory_space<vmem>> -> memref<1x32x128xbf16, #tpu.memory_space<vmem>>
    %294 = tpu.memref_squeeze %293 : memref<1x32x128xbf16, #tpu.memory_space<vmem>> -> memref<32x128xbf16, #tpu.memory_space<vmem>>
    %295 = tpu.memref_slice %arg14[%c1_i32_340, %c3_i32_341] : memref<3x8x!tpu.dma_semaphore, #tpu.memory_space<semaphore_mem>> -> memref<1x1x!tpu.dma_semaphore, #tpu.memory_space<semaphore_mem>>
    %296 = tpu.memref_squeeze %295 : memref<1x1x!tpu.dma_semaphore, #tpu.memory_space<semaphore_mem>> -> memref<!tpu.dma_semaphore, #tpu.memory_space<semaphore_mem>>
    tpu.wait_dma2 semaphore(%296 : memref<!tpu.dma_semaphore, #tpu.memory_space<semaphore_mem>>) src(%292 : memref<32x128xbf16, #tpu.memory_space<any>>) dst(%294 : memref<32x128xbf16, #tpu.memory_space<vmem>>)
    %c0_i32_346 = arith.constant 0 : i32
    %c4_i32_347 = arith.constant 4 : i32
    %c1_i32_348 = arith.constant 1 : i32
    %c4_i32_349 = arith.constant 4 : i32
    %c0_i32_350 = arith.constant 0 : i32
    %c0_i32_351 = arith.constant 0 : i32
    %297 = tpu.memref_slice %arg4[%c0_i32_346, %c0_i32_350, %c0_i32_351] : memref<36x32x128xbf16, #tpu.memory_space<any>> -> memref<1x32x128xbf16, #tpu.memory_space<any>>
    %298 = tpu.memref_squeeze %297 : memref<1x32x128xbf16, #tpu.memory_space<any>> -> memref<32x128xbf16, #tpu.memory_space<any>>
    %c0_i32_352 = arith.constant 0 : i32
    %c0_i32_353 = arith.constant 0 : i32
    %299 = tpu.memref_slice %arg12[%c4_i32_347, %c0_i32_352, %c0_i32_353] : memref<8x32x128xbf16, #tpu.memory_space<vmem>> -> memref<1x32x128xbf16, #tpu.memory_space<vmem>>
    %300 = tpu.memref_squeeze %299 : memref<1x32x128xbf16, #tpu.memory_space<vmem>> -> memref<32x128xbf16, #tpu.memory_space<vmem>>
    %301 = tpu.memref_slice %arg14[%c1_i32_348, %c4_i32_349] : memref<3x8x!tpu.dma_semaphore, #tpu.memory_space<semaphore_mem>> -> memref<1x1x!tpu.dma_semaphore, #tpu.memory_space<semaphore_mem>>
    %302 = tpu.memref_squeeze %301 : memref<1x1x!tpu.dma_semaphore, #tpu.memory_space<semaphore_mem>> -> memref<!tpu.dma_semaphore, #tpu.memory_space<semaphore_mem>>
    tpu.wait_dma2 semaphore(%302 : memref<!tpu.dma_semaphore, #tpu.memory_space<semaphore_mem>>) src(%298 : memref<32x128xbf16, #tpu.memory_space<any>>) dst(%300 : memref<32x128xbf16, #tpu.memory_space<vmem>>)
    %c0_i32_354 = arith.constant 0 : i32
    %c5_i32_355 = arith.constant 5 : i32
    %c1_i32_356 = arith.constant 1 : i32
    %c5_i32_357 = arith.constant 5 : i32
    %c0_i32_358 = arith.constant 0 : i32
    %c0_i32_359 = arith.constant 0 : i32
    %303 = tpu.memref_slice %arg4[%c0_i32_354, %c0_i32_358, %c0_i32_359] : memref<36x32x128xbf16, #tpu.memory_space<any>> -> memref<1x32x128xbf16, #tpu.memory_space<any>>
    %304 = tpu.memref_squeeze %303 : memref<1x32x128xbf16, #tpu.memory_space<any>> -> memref<32x128xbf16, #tpu.memory_space<any>>
    %c0_i32_360 = arith.constant 0 : i32
    %c0_i32_361 = arith.constant 0 : i32
    %305 = tpu.memref_slice %arg12[%c5_i32_355, %c0_i32_360, %c0_i32_361] : memref<8x32x128xbf16, #tpu.memory_space<vmem>> -> memref<1x32x128xbf16, #tpu.memory_space<vmem>>
    %306 = tpu.memref_squeeze %305 : memref<1x32x128xbf16, #tpu.memory_space<vmem>> -> memref<32x128xbf16, #tpu.memory_space<vmem>>
    %307 = tpu.memref_slice %arg14[%c1_i32_356, %c5_i32_357] : memref<3x8x!tpu.dma_semaphore, #tpu.memory_space<semaphore_mem>> -> memref<1x1x!tpu.dma_semaphore, #tpu.memory_space<semaphore_mem>>
    %308 = tpu.memref_squeeze %307 : memref<1x1x!tpu.dma_semaphore, #tpu.memory_space<semaphore_mem>> -> memref<!tpu.dma_semaphore, #tpu.memory_space<semaphore_mem>>
    tpu.wait_dma2 semaphore(%308 : memref<!tpu.dma_semaphore, #tpu.memory_space<semaphore_mem>>) src(%304 : memref<32x128xbf16, #tpu.memory_space<any>>) dst(%306 : memref<32x128xbf16, #tpu.memory_space<vmem>>)
    %c0_i32_362 = arith.constant 0 : i32
    %c6_i32_363 = arith.constant 6 : i32
    %c1_i32_364 = arith.constant 1 : i32
    %c6_i32_365 = arith.constant 6 : i32
    %c0_i32_366 = arith.constant 0 : i32
    %c0_i32_367 = arith.constant 0 : i32
    %309 = tpu.memref_slice %arg4[%c0_i32_362, %c0_i32_366, %c0_i32_367] : memref<36x32x128xbf16, #tpu.memory_space<any>> -> memref<1x32x128xbf16, #tpu.memory_space<any>>
    %310 = tpu.memref_squeeze %309 : memref<1x32x128xbf16, #tpu.memory_space<any>> -> memref<32x128xbf16, #tpu.memory_space<any>>
    %c0_i32_368 = arith.constant 0 : i32
    %c0_i32_369 = arith.constant 0 : i32
    %311 = tpu.memref_slice %arg12[%c6_i32_363, %c0_i32_368, %c0_i32_369] : memref<8x32x128xbf16, #tpu.memory_space<vmem>> -> memref<1x32x128xbf16, #tpu.memory_space<vmem>>
    %312 = tpu.memref_squeeze %311 : memref<1x32x128xbf16, #tpu.memory_space<vmem>> -> memref<32x128xbf16, #tpu.memory_space<vmem>>
    %313 = tpu.memref_slice %arg14[%c1_i32_364, %c6_i32_365] : memref<3x8x!tpu.dma_semaphore, #tpu.memory_space<semaphore_mem>> -> memref<1x1x!tpu.dma_semaphore, #tpu.memory_space<semaphore_mem>>
    %314 = tpu.memref_squeeze %313 : memref<1x1x!tpu.dma_semaphore, #tpu.memory_space<semaphore_mem>> -> memref<!tpu.dma_semaphore, #tpu.memory_space<semaphore_mem>>
    tpu.wait_dma2 semaphore(%314 : memref<!tpu.dma_semaphore, #tpu.memory_space<semaphore_mem>>) src(%310 : memref<32x128xbf16, #tpu.memory_space<any>>) dst(%312 : memref<32x128xbf16, #tpu.memory_space<vmem>>)
    %c0_i32_370 = arith.constant 0 : i32
    %c7_i32_371 = arith.constant 7 : i32
    %c1_i32_372 = arith.constant 1 : i32
    %c7_i32_373 = arith.constant 7 : i32
    %c0_i32_374 = arith.constant 0 : i32
    %c0_i32_375 = arith.constant 0 : i32
    %315 = tpu.memref_slice %arg4[%c0_i32_370, %c0_i32_374, %c0_i32_375] : memref<36x32x128xbf16, #tpu.memory_space<any>> -> memref<1x32x128xbf16, #tpu.memory_space<any>>
    %316 = tpu.memref_squeeze %315 : memref<1x32x128xbf16, #tpu.memory_space<any>> -> memref<32x128xbf16, #tpu.memory_space<any>>
    %c0_i32_376 = arith.constant 0 : i32
    %c0_i32_377 = arith.constant 0 : i32
    %317 = tpu.memref_slice %arg12[%c7_i32_371, %c0_i32_376, %c0_i32_377] : memref<8x32x128xbf16, #tpu.memory_space<vmem>> -> memref<1x32x128xbf16, #tpu.memory_space<vmem>>
    %318 = tpu.memref_squeeze %317 : memref<1x32x128xbf16, #tpu.memory_space<vmem>> -> memref<32x128xbf16, #tpu.memory_space<vmem>>
    %319 = tpu.memref_slice %arg14[%c1_i32_372, %c7_i32_373] : memref<3x8x!tpu.dma_semaphore, #tpu.memory_space<semaphore_mem>> -> memref<1x1x!tpu.dma_semaphore, #tpu.memory_space<semaphore_mem>>
    %320 = tpu.memref_squeeze %319 : memref<1x1x!tpu.dma_semaphore, #tpu.memory_space<semaphore_mem>> -> memref<!tpu.dma_semaphore, #tpu.memory_space<semaphore_mem>>
    tpu.wait_dma2 semaphore(%320 : memref<!tpu.dma_semaphore, #tpu.memory_space<semaphore_mem>>) src(%316 : memref<32x128xbf16, #tpu.memory_space<any>>) dst(%318 : memref<32x128xbf16, #tpu.memory_space<vmem>>)
    %cst_378 = arith.constant 0.000000e+00 : f32
    %321 = vector.broadcast %cst_378 : f32 to vector<8x32xf32>
    %cst_379 = arith.constant 0.000000e+00 : f32
    %322 = vector.broadcast %cst_379 : f32 to vector<8x32xf32>
    %323 = arith.truncf %321 : vector<8x32xf32> to vector<8x32xbf16>
    %c0_380 = arith.constant 0 : index
    %c0_381 = arith.constant 0 : index
    %c0_382 = arith.constant 0 : index
    %324 = vector.load %arg12[%c0_380, %c0_381, %c0_382] : memref<8x32x128xbf16, #tpu.memory_space<vmem>>, vector<1x32x128xbf16>
    %325 = vector.shape_cast %324 : vector<1x32x128xbf16> to vector<32x128xbf16>
    %cst_383 = arith.constant dense<0.000000e+00> : vector<8x128xf32>
    %326 = tpu.matmul %323, %325, %cst_383 {dimension_numbers = #tpu.dot_dimension_numbers<[1], [0], [0], [1], [0, 0, 1, 1], [], []>} : vector<8x32xbf16>, vector<32x128xbf16>, vector<8x128xf32> -> vector<8x128xf32>
    %327 = vector.extract_strided_slice %272 {offsets = [0, 0, 0], sizes = [1, 8, 128], strides = [1, 1, 1]} : vector<8x8x128xf32> to vector<1x8x128xf32>
    %328 = vector.shape_cast %327 : vector<1x8x128xf32> to vector<8x128xf32>
    %329 = arith.addf %326, %328 : vector<8x128xf32>
    %330 = arith.negf %329 : vector<8x128xf32>
    %331 = math.exp %330 : vector<8x128xf32>
    %cst_384 = arith.constant 1.000000e+00 : f32
    %332 = vector.broadcast %cst_384 : f32 to vector<8x128xf32>
    %333 = arith.addf %332, %331 : vector<8x128xf32>
    %334 = arith.divf %332, %333 : vector<8x128xf32>
    %335 = math.tanh %329 : vector<8x128xf32>
    %336 = vector.extract_strided_slice %334 {offsets = [0, 32], sizes = [8, 32], strides = [1, 1]} : vector<8x128xf32> to vector<8x32xf32>
    %337 = arith.mulf %336, %322 : vector<8x32xf32>
    %338 = vector.extract_strided_slice %334 {offsets = [0, 0], sizes = [8, 32], strides = [1, 1]} : vector<8x128xf32> to vector<8x32xf32>
    %339 = vector.extract_strided_slice %335 {offsets = [0, 64], sizes = [8, 32], strides = [1, 1]} : vector<8x128xf32> to vector<8x32xf32>
    %340 = arith.mulf %338, %339 : vector<8x32xf32>
    %341 = arith.addf %337, %340 : vector<8x32xf32>
    %342 = vector.extract_strided_slice %334 {offsets = [0, 96], sizes = [8, 32], strides = [1, 1]} : vector<8x128xf32> to vector<8x32xf32>
    %343 = math.tanh %341 : vector<8x32xf32>
    %344 = arith.mulf %342, %343 : vector<8x32xf32>
    %345 = arith.truncf %344 : vector<8x32xf32> to vector<8x32xbf16>
    %c1_385 = arith.constant 1 : index
    %c0_386 = arith.constant 0 : index
    %c0_387 = arith.constant 0 : index
    %346 = vector.load %arg12[%c1_385, %c0_386, %c0_387] : memref<8x32x128xbf16, #tpu.memory_space<vmem>>, vector<1x32x128xbf16>
    %347 = vector.shape_cast %346 : vector<1x32x128xbf16> to vector<32x128xbf16>
    %cst_388 = arith.constant dense<0.000000e+00> : vector<8x128xf32>
    %348 = tpu.matmul %345, %347, %cst_388 {dimension_numbers = #tpu.dot_dimension_numbers<[1], [0], [0], [1], [0, 0, 1, 1], [], []>} : vector<8x32xbf16>, vector<32x128xbf16>, vector<8x128xf32> -> vector<8x128xf32>
    %349 = vector.extract_strided_slice %272 {offsets = [1, 0, 0], sizes = [1, 8, 128], strides = [1, 1, 1]} : vector<8x8x128xf32> to vector<1x8x128xf32>
    %350 = vector.shape_cast %349 : vector<1x8x128xf32> to vector<8x128xf32>
    %351 = arith.addf %348, %350 : vector<8x128xf32>
    %352 = arith.negf %351 : vector<8x128xf32>
    %353 = math.exp %352 : vector<8x128xf32>
    %cst_389 = arith.constant 1.000000e+00 : f32
    %354 = vector.broadcast %cst_389 : f32 to vector<8x128xf32>
    %355 = arith.addf %354, %353 : vector<8x128xf32>
    %356 = arith.divf %354, %355 : vector<8x128xf32>
    %357 = math.tanh %351 : vector<8x128xf32>
    %358 = vector.extract_strided_slice %356 {offsets = [0, 32], sizes = [8, 32], strides = [1, 1]} : vector<8x128xf32> to vector<8x32xf32>
    %359 = arith.mulf %358, %341 : vector<8x32xf32>
    %360 = vector.extract_strided_slice %356 {offsets = [0, 0], sizes = [8, 32], strides = [1, 1]} : vector<8x128xf32> to vector<8x32xf32>
    %361 = vector.extract_strided_slice %357 {offsets = [0, 64], sizes = [8, 32], strides = [1, 1]} : vector<8x128xf32> to vector<8x32xf32>
    %362 = arith.mulf %360, %361 : vector<8x32xf32>
    %363 = arith.addf %359, %362 : vector<8x32xf32>
    %364 = vector.extract_strided_slice %356 {offsets = [0, 96], sizes = [8, 32], strides = [1, 1]} : vector<8x128xf32> to vector<8x32xf32>
    %365 = math.tanh %363 : vector<8x32xf32>
    %366 = arith.mulf %364, %365 : vector<8x32xf32>
    %367 = arith.truncf %366 : vector<8x32xf32> to vector<8x32xbf16>
    %c2_390 = arith.constant 2 : index
    %c0_391 = arith.constant 0 : index
    %c0_392 = arith.constant 0 : index
    %368 = vector.load %arg12[%c2_390, %c0_391, %c0_392] : memref<8x32x128xbf16, #tpu.memory_space<vmem>>, vector<1x32x128xbf16>
    %369 = vector.shape_cast %368 : vector<1x32x128xbf16> to vector<32x128xbf16>
    %cst_393 = arith.constant dense<0.000000e+00> : vector<8x128xf32>
    %370 = tpu.matmul %367, %369, %cst_393 {dimension_numbers = #tpu.dot_dimension_numbers<[1], [0], [0], [1], [0, 0, 1, 1], [], []>} : vector<8x32xbf16>, vector<32x128xbf16>, vector<8x128xf32> -> vector<8x128xf32>
    %371 = vector.extract_strided_slice %272 {offsets = [2, 0, 0], sizes = [1, 8, 128], strides = [1, 1, 1]} : vector<8x8x128xf32> to vector<1x8x128xf32>
    %372 = vector.shape_cast %371 : vector<1x8x128xf32> to vector<8x128xf32>
    %373 = arith.addf %370, %372 : vector<8x128xf32>
    %374 = arith.negf %373 : vector<8x128xf32>
    %375 = math.exp %374 : vector<8x128xf32>
    %cst_394 = arith.constant 1.000000e+00 : f32
    %376 = vector.broadcast %cst_394 : f32 to vector<8x128xf32>
    %377 = arith.addf %376, %375 : vector<8x128xf32>
    %378 = arith.divf %376, %377 : vector<8x128xf32>
    %379 = math.tanh %373 : vector<8x128xf32>
    %380 = vector.extract_strided_slice %378 {offsets = [0, 32], sizes = [8, 32], strides = [1, 1]} : vector<8x128xf32> to vector<8x32xf32>
    %381 = arith.mulf %380, %363 : vector<8x32xf32>
    %382 = vector.extract_strided_slice %378 {offsets = [0, 0], sizes = [8, 32], strides = [1, 1]} : vector<8x128xf32> to vector<8x32xf32>
    %383 = vector.extract_strided_slice %379 {offsets = [0, 64], sizes = [8, 32], strides = [1, 1]} : vector<8x128xf32> to vector<8x32xf32>
    %384 = arith.mulf %382, %383 : vector<8x32xf32>
    %385 = arith.addf %381, %384 : vector<8x32xf32>
    %386 = vector.extract_strided_slice %378 {offsets = [0, 96], sizes = [8, 32], strides = [1, 1]} : vector<8x128xf32> to vector<8x32xf32>
    %387 = math.tanh %385 : vector<8x32xf32>
    %388 = arith.mulf %386, %387 : vector<8x32xf32>
    %389 = arith.truncf %388 : vector<8x32xf32> to vector<8x32xbf16>
    %c3_395 = arith.constant 3 : index
    %c0_396 = arith.constant 0 : index
    %c0_397 = arith.constant 0 : index
    %390 = vector.load %arg12[%c3_395, %c0_396, %c0_397] : memref<8x32x128xbf16, #tpu.memory_space<vmem>>, vector<1x32x128xbf16>
    %391 = vector.shape_cast %390 : vector<1x32x128xbf16> to vector<32x128xbf16>
    %cst_398 = arith.constant dense<0.000000e+00> : vector<8x128xf32>
    %392 = tpu.matmul %389, %391, %cst_398 {dimension_numbers = #tpu.dot_dimension_numbers<[1], [0], [0], [1], [0, 0, 1, 1], [], []>} : vector<8x32xbf16>, vector<32x128xbf16>, vector<8x128xf32> -> vector<8x128xf32>
    %393 = vector.extract_strided_slice %272 {offsets = [3, 0, 0], sizes = [1, 8, 128], strides = [1, 1, 1]} : vector<8x8x128xf32> to vector<1x8x128xf32>
    %394 = vector.shape_cast %393 : vector<1x8x128xf32> to vector<8x128xf32>
    %395 = arith.addf %392, %394 : vector<8x128xf32>
    %396 = arith.negf %395 : vector<8x128xf32>
    %397 = math.exp %396 : vector<8x128xf32>
    %cst_399 = arith.constant 1.000000e+00 : f32
    %398 = vector.broadcast %cst_399 : f32 to vector<8x128xf32>
    %399 = arith.addf %398, %397 : vector<8x128xf32>
    %400 = arith.divf %398, %399 : vector<8x128xf32>
    %401 = math.tanh %395 : vector<8x128xf32>
    %402 = vector.extract_strided_slice %400 {offsets = [0, 32], sizes = [8, 32], strides = [1, 1]} : vector<8x128xf32> to vector<8x32xf32>
    %403 = arith.mulf %402, %385 : vector<8x32xf32>
    %404 = vector.extract_strided_slice %400 {offsets = [0, 0], sizes = [8, 32], strides = [1, 1]} : vector<8x128xf32> to vector<8x32xf32>
    %405 = vector.extract_strided_slice %401 {offsets = [0, 64], sizes = [8, 32], strides = [1, 1]} : vector<8x128xf32> to vector<8x32xf32>
    %406 = arith.mulf %404, %405 : vector<8x32xf32>
    %407 = arith.addf %403, %406 : vector<8x32xf32>
    %408 = vector.extract_strided_slice %400 {offsets = [0, 96], sizes = [8, 32], strides = [1, 1]} : vector<8x128xf32> to vector<8x32xf32>
    %409 = math.tanh %407 : vector<8x32xf32>
    %410 = arith.mulf %408, %409 : vector<8x32xf32>
    %411 = arith.truncf %410 : vector<8x32xf32> to vector<8x32xbf16>
    %c4_400 = arith.constant 4 : index
    %c0_401 = arith.constant 0 : index
    %c0_402 = arith.constant 0 : index
    %412 = vector.load %arg12[%c4_400, %c0_401, %c0_402] : memref<8x32x128xbf16, #tpu.memory_space<vmem>>, vector<1x32x128xbf16>
    %413 = vector.shape_cast %412 : vector<1x32x128xbf16> to vector<32x128xbf16>
    %cst_403 = arith.constant dense<0.000000e+00> : vector<8x128xf32>
    %414 = tpu.matmul %411, %413, %cst_403 {dimension_numbers = #tpu.dot_dimension_numbers<[1], [0], [0], [1], [0, 0, 1, 1], [], []>} : vector<8x32xbf16>, vector<32x128xbf16>, vector<8x128xf32> -> vector<8x128xf32>
    %415 = vector.extract_strided_slice %272 {offsets = [4, 0, 0], sizes = [1, 8, 128], strides = [1, 1, 1]} : vector<8x8x128xf32> to vector<1x8x128xf32>
    %416 = vector.shape_cast %415 : vector<1x8x128xf32> to vector<8x128xf32>
    %417 = arith.addf %414, %416 : vector<8x128xf32>
    %418 = arith.negf %417 : vector<8x128xf32>
    %419 = math.exp %418 : vector<8x128xf32>
    %cst_404 = arith.constant 1.000000e+00 : f32
    %420 = vector.broadcast %cst_404 : f32 to vector<8x128xf32>
    %421 = arith.addf %420, %419 : vector<8x128xf32>
    %422 = arith.divf %420, %421 : vector<8x128xf32>
    %423 = math.tanh %417 : vector<8x128xf32>
    %424 = vector.extract_strided_slice %422 {offsets = [0, 32], sizes = [8, 32], strides = [1, 1]} : vector<8x128xf32> to vector<8x32xf32>
    %425 = arith.mulf %424, %407 : vector<8x32xf32>
    %426 = vector.extract_strided_slice %422 {offsets = [0, 0], sizes = [8, 32], strides = [1, 1]} : vector<8x128xf32> to vector<8x32xf32>
    %427 = vector.extract_strided_slice %423 {offsets = [0, 64], sizes = [8, 32], strides = [1, 1]} : vector<8x128xf32> to vector<8x32xf32>
    %428 = arith.mulf %426, %427 : vector<8x32xf32>
    %429 = arith.addf %425, %428 : vector<8x32xf32>
    %430 = vector.extract_strided_slice %422 {offsets = [0, 96], sizes = [8, 32], strides = [1, 1]} : vector<8x128xf32> to vector<8x32xf32>
    %431 = math.tanh %429 : vector<8x32xf32>
    %432 = arith.mulf %430, %431 : vector<8x32xf32>
    %433 = arith.truncf %432 : vector<8x32xf32> to vector<8x32xbf16>
    %c5_405 = arith.constant 5 : index
    %c0_406 = arith.constant 0 : index
    %c0_407 = arith.constant 0 : index
    %434 = vector.load %arg12[%c5_405, %c0_406, %c0_407] : memref<8x32x128xbf16, #tpu.memory_space<vmem>>, vector<1x32x128xbf16>
    %435 = vector.shape_cast %434 : vector<1x32x128xbf16> to vector<32x128xbf16>
    %cst_408 = arith.constant dense<0.000000e+00> : vector<8x128xf32>
    %436 = tpu.matmul %433, %435, %cst_408 {dimension_numbers = #tpu.dot_dimension_numbers<[1], [0], [0], [1], [0, 0, 1, 1], [], []>} : vector<8x32xbf16>, vector<32x128xbf16>, vector<8x128xf32> -> vector<8x128xf32>
    %437 = vector.extract_strided_slice %272 {offsets = [5, 0, 0], sizes = [1, 8, 128], strides = [1, 1, 1]} : vector<8x8x128xf32> to vector<1x8x128xf32>
    %438 = vector.shape_cast %437 : vector<1x8x128xf32> to vector<8x128xf32>
    %439 = arith.addf %436, %438 : vector<8x128xf32>
    %440 = arith.negf %439 : vector<8x128xf32>
    %441 = math.exp %440 : vector<8x128xf32>
    %cst_409 = arith.constant 1.000000e+00 : f32
    %442 = vector.broadcast %cst_409 : f32 to vector<8x128xf32>
    %443 = arith.addf %442, %441 : vector<8x128xf32>
    %444 = arith.divf %442, %443 : vector<8x128xf32>
    %445 = math.tanh %439 : vector<8x128xf32>
    %446 = vector.extract_strided_slice %444 {offsets = [0, 32], sizes = [8, 32], strides = [1, 1]} : vector<8x128xf32> to vector<8x32xf32>
    %447 = arith.mulf %446, %429 : vector<8x32xf32>
    %448 = vector.extract_strided_slice %444 {offsets = [0, 0], sizes = [8, 32], strides = [1, 1]} : vector<8x128xf32> to vector<8x32xf32>
    %449 = vector.extract_strided_slice %445 {offsets = [0, 64], sizes = [8, 32], strides = [1, 1]} : vector<8x128xf32> to vector<8x32xf32>
    %450 = arith.mulf %448, %449 : vector<8x32xf32>
    %451 = arith.addf %447, %450 : vector<8x32xf32>
    %452 = vector.extract_strided_slice %444 {offsets = [0, 96], sizes = [8, 32], strides = [1, 1]} : vector<8x128xf32> to vector<8x32xf32>
    %453 = math.tanh %451 : vector<8x32xf32>
    %454 = arith.mulf %452, %453 : vector<8x32xf32>
    %455 = arith.truncf %454 : vector<8x32xf32> to vector<8x32xbf16>
    %c6_410 = arith.constant 6 : index
    %c0_411 = arith.constant 0 : index
    %c0_412 = arith.constant 0 : index
    %456 = vector.load %arg12[%c6_410, %c0_411, %c0_412] : memref<8x32x128xbf16, #tpu.memory_space<vmem>>, vector<1x32x128xbf16>
    %457 = vector.shape_cast %456 : vector<1x32x128xbf16> to vector<32x128xbf16>
    %cst_413 = arith.constant dense<0.000000e+00> : vector<8x128xf32>
    %458 = tpu.matmul %455, %457, %cst_413 {dimension_numbers = #tpu.dot_dimension_numbers<[1], [0], [0], [1], [0, 0, 1, 1], [], []>} : vector<8x32xbf16>, vector<32x128xbf16>, vector<8x128xf32> -> vector<8x128xf32>
    %459 = vector.extract_strided_slice %272 {offsets = [6, 0, 0], sizes = [1, 8, 128], strides = [1, 1, 1]} : vector<8x8x128xf32> to vector<1x8x128xf32>
    %460 = vector.shape_cast %459 : vector<1x8x128xf32> to vector<8x128xf32>
    %461 = arith.addf %458, %460 : vector<8x128xf32>
    %462 = arith.negf %461 : vector<8x128xf32>
    %463 = math.exp %462 : vector<8x128xf32>
    %cst_414 = arith.constant 1.000000e+00 : f32
    %464 = vector.broadcast %cst_414 : f32 to vector<8x128xf32>
    %465 = arith.addf %464, %463 : vector<8x128xf32>
    %466 = arith.divf %464, %465 : vector<8x128xf32>
    %467 = math.tanh %461 : vector<8x128xf32>
    %468 = vector.extract_strided_slice %466 {offsets = [0, 32], sizes = [8, 32], strides = [1, 1]} : vector<8x128xf32> to vector<8x32xf32>
    %469 = arith.mulf %468, %451 : vector<8x32xf32>
    %470 = vector.extract_strided_slice %466 {offsets = [0, 0], sizes = [8, 32], strides = [1, 1]} : vector<8x128xf32> to vector<8x32xf32>
    %471 = vector.extract_strided_slice %467 {offsets = [0, 64], sizes = [8, 32], strides = [1, 1]} : vector<8x128xf32> to vector<8x32xf32>
    %472 = arith.mulf %470, %471 : vector<8x32xf32>
    %473 = arith.addf %469, %472 : vector<8x32xf32>
    %474 = vector.extract_strided_slice %466 {offsets = [0, 96], sizes = [8, 32], strides = [1, 1]} : vector<8x128xf32> to vector<8x32xf32>
    %475 = math.tanh %473 : vector<8x32xf32>
    %476 = arith.mulf %474, %475 : vector<8x32xf32>
    %477 = arith.truncf %476 : vector<8x32xf32> to vector<8x32xbf16>
    %c7_415 = arith.constant 7 : index
    %c0_416 = arith.constant 0 : index
    %c0_417 = arith.constant 0 : index
    %478 = vector.load %arg12[%c7_415, %c0_416, %c0_417] : memref<8x32x128xbf16, #tpu.memory_space<vmem>>, vector<1x32x128xbf16>
    %479 = vector.shape_cast %478 : vector<1x32x128xbf16> to vector<32x128xbf16>
    %cst_418 = arith.constant dense<0.000000e+00> : vector<8x128xf32>
    %480 = tpu.matmul %477, %479, %cst_418 {dimension_numbers = #tpu.dot_dimension_numbers<[1], [0], [0], [1], [0, 0, 1, 1], [], []>} : vector<8x32xbf16>, vector<32x128xbf16>, vector<8x128xf32> -> vector<8x128xf32>
    %481 = vector.extract_strided_slice %272 {offsets = [7, 0, 0], sizes = [1, 8, 128], strides = [1, 1, 1]} : vector<8x8x128xf32> to vector<1x8x128xf32>
    %482 = vector.shape_cast %481 : vector<1x8x128xf32> to vector<8x128xf32>
    %483 = arith.addf %480, %482 : vector<8x128xf32>
    %484 = arith.negf %483 : vector<8x128xf32>
    %485 = math.exp %484 : vector<8x128xf32>
    %cst_419 = arith.constant 1.000000e+00 : f32
    %486 = vector.broadcast %cst_419 : f32 to vector<8x128xf32>
    %487 = arith.addf %486, %485 : vector<8x128xf32>
    %488 = arith.divf %486, %487 : vector<8x128xf32>
    %489 = math.tanh %483 : vector<8x128xf32>
    %490 = vector.extract_strided_slice %488 {offsets = [0, 32], sizes = [8, 32], strides = [1, 1]} : vector<8x128xf32> to vector<8x32xf32>
    %491 = arith.mulf %490, %473 : vector<8x32xf32>
    %492 = vector.extract_strided_slice %488 {offsets = [0, 0], sizes = [8, 32], strides = [1, 1]} : vector<8x128xf32> to vector<8x32xf32>
    %493 = vector.extract_strided_slice %489 {offsets = [0, 64], sizes = [8, 32], strides = [1, 1]} : vector<8x128xf32> to vector<8x32xf32>
    %494 = arith.mulf %492, %493 : vector<8x32xf32>
    %495 = arith.addf %491, %494 : vector<8x32xf32>
    %496 = vector.extract_strided_slice %488 {offsets = [0, 96], sizes = [8, 32], strides = [1, 1]} : vector<8x128xf32> to vector<8x32xf32>
    %497 = math.tanh %495 : vector<8x32xf32>
    %498 = arith.mulf %496, %497 : vector<8x32xf32>
    %499 = arith.truncf %498 : vector<8x32xf32> to vector<8x32xbf16>
    %c0_420 = arith.constant 0 : index
    %c0_421 = arith.constant 0 : index
    %500 = vector.load %arg6[%c0_420, %c0_421] : memref<32x256xbf16, #tpu.memory_space<vmem>>, vector<32x256xbf16>
    %cst_422 = arith.constant dense<0.000000e+00> : vector<8x256xf32>
    %501 = tpu.matmul %499, %500, %cst_422 {dimension_numbers = #tpu.dot_dimension_numbers<[1], [0], [0], [1], [0, 0, 1, 1], [], []>} : vector<8x32xbf16>, vector<32x256xbf16>, vector<8x256xf32> -> vector<8x256xf32>
    %c0_423 = arith.constant 0 : index
    %c0_424 = arith.constant 0 : index
    %502 = vector.load %arg7[%c0_423, %c0_424] : memref<1x256xf32, #tpu.memory_space<vmem>>, vector<1x256xf32>
    %503 = vector.broadcast %502 : vector<1x256xf32> to vector<8x256xf32>
    %504 = arith.addf %501, %503 : vector<8x256xf32>
    %cst_425 = arith.constant 0.000000e+00 : f32
    %505 = vector.broadcast %cst_425 : f32 to vector<8x256xf32>
    %506 = arith.maximumf %504, %505 : vector<8x256xf32>
    %c0_426 = arith.constant 0 : index
    %c0_427 = arith.constant 0 : index
    %507 = vector.load %arg8[%c0_426, %c0_427] : memref<1x256xf32, #tpu.memory_space<vmem>>, vector<1x256xf32>
    %508 = vector.broadcast %507 : vector<1x256xf32> to vector<8x256xf32>
    %509 = arith.mulf %506, %508 : vector<8x256xf32>
    %cst_428 = arith.constant dense<0.000000e+00> : vector<8xf32>
    %510 = vector.multi_reduction <add>, %509, %cst_428 [1] : vector<8x256xf32> to vector<8xf32>
    %511 = vector.shape_cast %510 : vector<8xf32> to vector<8x1xf32>
    %c0_429 = arith.constant 0 : index
    %512 = memref.load %arg9[%c0_429] : memref<1xf32, #tpu.memory_space<smem>>
    %513 = vector.broadcast %512 : f32 to vector<8x1xf32>
    %514 = arith.addf %511, %513 : vector<8x1xf32>
    %515 = arith.negf %514 : vector<8x1xf32>
    %516 = math.exp %515 : vector<8x1xf32>
    %cst_430 = arith.constant 1.000000e+00 : f32
    %517 = vector.broadcast %cst_430 : f32 to vector<8x1xf32>
    %518 = arith.addf %517, %516 : vector<8x1xf32>
    %519 = arith.divf %517, %518 : vector<8x1xf32>
    %c0_431 = arith.constant 0 : index
    %c0_432 = arith.constant 0 : index
    %520 = vector.load %arg10[%c0_431, %c0_432] : memref<8x1xf32, #tpu.memory_space<vmem>>, vector<8x1xf32>
    tpu.vector_store %arg10[%c0_431, %c0_432], %519 {strides = array<i32>} : memref<8x1xf32, #tpu.memory_space<vmem>>, vector<8x1xf32>,
    return
  }
}

</mosaic_0001>

<llo_original>
// kernel: lstm_pos_penn_forward.1
$region0: #{lstm_pos_penn_forward.1}
  #allocation0 [shape = 'u32[]', space=smem, size = 0x4, offset = 0x4, fixed_abs, tag = 'smem constant byte address 0x4 - core index']
  #allocation1 [shape = 'u32[144,128]{1,0:T(1,128)}', space=vmem, size = 0x12000, scoped, tag = 'internal scratch']
  #allocation2 [shape = 'bf16[8,32,128]{2,1,0:T(16,128)(2,1)}', space=vmem, size = 0x10000, scoped, tag = 'scratch operand']
  #allocation3 [shape = 'bf16[8,32,128]{2,1,0:T(16,128)(2,1)}', space=vmem, size = 0x10000, scoped, tag = 'scratch operand']
  #allocation4 [shape = 'f32[8,1,128]{2,1,0:T(1,128)}', space=vmem, size = 0x1000, scoped, tag = 'scratch operand']
  #allocation5 [shape = 's32[24]{0}', space=sflag, size = 0x60, scoped, tag = 'scratch operand']
  #allocation6 [shape = 'f32[1]{0:T(128)S(6)}', space=smem, size = 0x200, scoped, tag = 'scoped memory for lstm_pos_penn_forward.1']
  #allocation9 [shape = 's32[]', space=sflag, size = 0x4, offset = 0, fixed_abs, tag = 'sflag constant byte address 0x0 - dummy sync flag']
  #allocation10 [shape = 's32[]', space=sflag, size = 0x4, offset = 0, fixed_abs, tag = 'sflag constant byte address 0x0 - dummy sync flag']
  #allocation11 [shape = 'u32[]', space=smem, size = 0x4, offset = 0x44, fixed_abs, tag = 'smem constant byte address 0x44 - assertion arg 0']
  #allocation12 [shape = 'u32[]', space=smem, size = 0x4, offset = 0x48, fixed_abs, tag = 'smem constant byte address 0x48 - assertion arg 1']
  #allocation13 [shape = 's32[]', space=sflag, size = 0x4, offset = 0, fixed_abs, tag = 'sflag constant byte address 0x0 - dummy sync flag']
  #allocation14 [shape = 's32[]', space=sflag, size = 0x4, offset = 0, fixed_abs, tag = 'sflag constant byte address 0x0 - dummy sync flag']
  #allocation15 [shape = 's32[]', space=sflag, size = 0x4, offset = 0, fixed_abs, tag = 'sflag constant byte address 0x0 - dummy sync flag']
  #allocation16 [shape = 's32[]', space=sflag, size = 0x4, offset = 0, fixed_abs, tag = 'sflag constant byte address 0x0 - dummy sync flag']
  #allocation17 [shape = 's32[]', space=sflag, size = 0x4, offset = 0, fixed_abs, tag = 'sflag constant byte address 0x0 - dummy sync flag']
  #allocation18 [shape = 's32[]', space=sflag, size = 0x4, offset = 0, fixed_abs, tag = 'sflag constant byte address 0x0 - dummy sync flag']
  #allocation19 [shape = 's32[]', space=sflag, size = 0x4, offset = 0, fixed_abs, tag = 'sflag constant byte address 0x0 - dummy sync flag']
  #allocation20 [shape = 's32[]', space=sflag, size = 0x4, offset = 0, fixed_abs, tag = 'sflag constant byte address 0x0 - dummy sync flag']
  #allocation21 [shape = 's32[]', space=sflag, size = 0x4, offset = 0, fixed_abs, tag = 'sflag constant byte address 0x0 - dummy sync flag']
  #allocation22 [shape = 's32[]', space=sflag, size = 0x4, offset = 0, fixed_abs, tag = 'sflag constant byte address 0x0 - dummy sync flag']
  #allocation23 [shape = 's32[]', space=sflag, size = 0x4, offset = 0, fixed_abs, tag = 'sflag constant byte address 0x0 - dummy sync flag']
  #allocation24 [shape = 's32[]', space=sflag, size = 0x4, offset = 0, fixed_abs, tag = 'sflag constant byte address 0x0 - dummy sync flag']
  #allocation25 [shape = 's32[]', space=sflag, size = 0x4, offset = 0, fixed_abs, tag = 'sflag constant byte address 0x0 - dummy sync flag']
  #allocation26 [shape = 's32[]', space=sflag, size = 0x4, offset = 0, fixed_abs, tag = 'sflag constant byte address 0x0 - dummy sync flag']
  #allocation27 [shape = 's32[]', space=sflag, size = 0x4, offset = 0, fixed_abs, tag = 'sflag constant byte address 0x0 - dummy sync flag']
  #allocation28 [shape = 's32[]', space=sflag, size = 0x4, offset = 0, fixed_abs, tag = 'sflag constant byte address 0x0 - dummy sync flag']
  #allocation29 [shape = 's32[]', space=sflag, size = 0x4, offset = 0, fixed_abs, tag = 'sflag constant byte address 0x0 - dummy sync flag']
  #allocation30 [shape = 's32[]', space=sflag, size = 0x4, offset = 0, fixed_abs, tag = 'sflag constant byte address 0x0 - dummy sync flag']
  #allocation31 [shape = 's32[]', space=sflag, size = 0x4, offset = 0, fixed_abs, tag = 'sflag constant byte address 0x0 - dummy sync flag']
  #allocation32 [shape = 's32[]', space=sflag, size = 0x4, offset = 0, fixed_abs, tag = 'sflag constant byte address 0x0 - dummy sync flag']
  #allocation33 [shape = 's32[]', space=sflag, size = 0x4, offset = 0, fixed_abs, tag = 'sflag constant byte address 0x0 - dummy sync flag']
  #allocation34 [shape = 's32[]', space=sflag, size = 0x4, offset = 0, fixed_abs, tag = 'sflag constant byte address 0x0 - dummy sync flag']
  #allocation35 [shape = 's32[]', space=sflag, size = 0x4, offset = 0, fixed_abs, tag = 'sflag constant byte address 0x0 - dummy sync flag']
  #allocation36 [shape = 's32[]', space=sflag, size = 0x4, offset = 0, fixed_abs, tag = 'sflag constant byte address 0x0 - dummy sync flag']
  #allocation37 [shape = 's32[]', space=sflag, size = 0x4, offset = 0, fixed_abs, tag = 'sflag constant byte address 0x0 - dummy sync flag']
  #allocation38 [shape = 's32[]', space=sflag, size = 0x4, offset = 0, fixed_abs, tag = 'sflag constant byte address 0x0 - dummy sync flag']
  #allocation39 [shape = 's32[]', space=sflag, size = 0x4, offset = 0, fixed_abs, tag = 'sflag constant byte address 0x0 - dummy sync flag']
  #allocation40 [shape = 's32[]', space=sflag, size = 0x4, offset = 0, fixed_abs, tag = 'sflag constant byte address 0x0 - dummy sync flag']
  #allocation41 [shape = 's32[]', space=sflag, size = 0x4, offset = 0, fixed_abs, tag = 'sflag constant byte address 0x0 - dummy sync flag']
  #allocation42 [shape = 's32[]', space=sflag, size = 0x4, offset = 0, fixed_abs, tag = 'sflag constant byte address 0x0 - dummy sync flag']
  #allocation43 [shape = 's32[]', space=sflag, size = 0x4, offset = 0, fixed_abs, tag = 'sflag constant byte address 0x0 - dummy sync flag']
  #allocation44 [shape = 's32[]', space=sflag, size = 0x4, offset = 0, fixed_abs, tag = 'sflag constant byte address 0x0 - dummy sync flag']
  #allocation45 [shape = 's32[]', space=sflag, size = 0x4, offset = 0, fixed_abs, tag = 'sflag constant byte address 0x0 - dummy sync flag']
  #allocation46 [shape = 's32[]', space=sflag, size = 0x4, offset = 0, fixed_abs, tag = 'sflag constant byte address 0x0 - dummy sync flag']
  #allocation47 [shape = 's32[]', space=sflag, size = 0x4, offset = 0, fixed_abs, tag = 'sflag constant byte address 0x0 - dummy sync flag']
  #allocation48 [shape = 's32[]', space=sflag, size = 0x4, offset = 0, fixed_abs, tag = 'sflag constant byte address 0x0 - dummy sync flag']
  #allocation49 [shape = 's32[]', space=sflag, size = 0x4, offset = 0, fixed_abs, tag = 'sflag constant byte address 0x0 - dummy sync flag']
  #allocation50 [shape = 's32[]', space=sflag, size = 0x4, offset = 0, fixed_abs, tag = 'sflag constant byte address 0x0 - dummy sync flag']
  %s0 = inlined_call_operand.vmem [shape: s32[8,8], index: 0, kind: input, shape index: {}, may-alias: {0,1}]
  %s1 = inlined_call_operand.vmem [shape: s32[8,8], index: 1, kind: input, shape index: {}, may-alias: {0,1}]
  %s2 = inlined_call_operand.vmem [shape: f32[50,32], index: 2, kind: input, shape index: {}]
  %s3 = inlined_call_operand.hbm [shape: bf16[36,32,128], index: 3, kind: input, shape index: {}]
  %s4 = inlined_call_operand.hbm [shape: bf16[36,32,128], index: 4, kind: input, shape index: {}]
  %s5 = inlined_call_operand.vmem [shape: f32[36,1,128], index: 5, kind: input, shape index: {}]
  %s6 = inlined_call_operand.vmem [shape: bf16[32,256], index: 6, kind: input, shape index: {}]
  %s7 = inlined_call_operand.vmem [shape: f32[1,256], index: 7, kind: input, shape index: {}]
  %s8 = inlined_call_operand.vmem [shape: f32[1,256], index: 8, kind: input, shape index: {}]
  %s9 = inlined_call_operand.<no memory space> [shape: f32[1], index: 9, kind: input, shape index: {}]
  %s10 = inlined_call_operand.vmem [shape: f32[8,1], index: 10, kind: output, shape index: {}]
  %s11 = sld [smem:[#allocation0]]
  $region346: #{lstm_pos_penn_forward.1} parent=0
    _
  %s13 = ssub.s32 1, %s11
  %s14 = scalar_select 0, %s13, %s11
  %15 = sst [smem:[#allocation6]] %s9
  $region1: #{lstm_pos_penn_forward.1} parent=0
    #allocation7 [shape = 'u8[4096]{0}', space=smem, size = 0x1000, scoped, tag = 'input window, operand 0, single buffered']
    #allocation8 [shape = 's32[1]{0}', space=sflag, size = 0x4, scoped, tag = 'scoped memory for lstm_pos_penn_forward.1']
    %16 = vsyncpa [#allocation8], 0
    // Predicated region
    $region2: #{lstm_pos_penn_forward.1} parent=1 // pred_check
      _
    $region3: #{lstm_pos_penn_forward.1} parent=1 // pred_check_branch
      %18 = sbr.rel (0) target = $region5
    $region4: #{lstm_pos_penn_forward.1} parent=1 // pred_region
      %s20 = ssub.s32 128, 128
      %21 = vsyncadd [#allocation8], %s20
      %s23 = sshll.u32 %s0, 4
      %s24 = int_to_ptr.vmem [resolvable:$true] %s23
      %26 = dma.vmem_to_smem %s24, 128, [#allocation7], [#allocation8]
    $region5: #{lstm_pos_penn_forward.1} parent=1 // pred_fallthru
      _
    // Predicated region
    $region6: #{lstm_pos_penn_forward.1} parent=1 // pred_check
      _
    $region7: #{lstm_pos_penn_forward.1} parent=1 // pred_check_branch
      %28 = sbr.rel (0) target = $region9
    $region8: #{lstm_pos_penn_forward.1} parent=1 // pred_region
      _
    $region9: #{lstm_pos_penn_forward.1} parent=1 // pred_fallthru
      _
    // Predicated region
    $region10: #{lstm_pos_penn_forward.1} parent=1 // pred_check
      _
    $region11: #{lstm_pos_penn_forward.1} parent=1 // pred_check_branch
      %30 = sbr.rel (0) target = $region13
    $region12: #{lstm_pos_penn_forward.1} parent=1 // pred_region
      _
    $region13: #{lstm_pos_penn_forward.1} parent=1 // pred_fallthru
      _
    // Predicated region
    $region14: #{lstm_pos_penn_forward.1} parent=1 // pred_check
      _
    $region15: #{lstm_pos_penn_forward.1} parent=1 // pred_check_branch
      %32 = sbr.rel (0) target = $region17
    $region16: #{lstm_pos_penn_forward.1} parent=1 // pred_region
      _
    $region17: #{lstm_pos_penn_forward.1} parent=1 // pred_fallthru
      _
    // Predicated region
    $region18: #{lstm_pos_penn_forward.1} parent=1 // pred_check
      _
    $region19: #{lstm_pos_penn_forward.1} parent=1 // pred_check_branch
      %34 = sbr.rel (0) target = $region21
    $region20: #{lstm_pos_penn_forward.1} parent=1 // pred_region
      _
    $region21: #{lstm_pos_penn_forward.1} parent=1 // pred_fallthru
      _
    // Predicated region
    $region22: #{lstm_pos_penn_forward.1} parent=1 // pred_check
      _
    $region23: #{lstm_pos_penn_forward.1} parent=1 // pred_check_branch
      %36 = sbr.rel (0) target = $region25
    $region24: #{lstm_pos_penn_forward.1} parent=1 // pred_region
      _
    $region25: #{lstm_pos_penn_forward.1} parent=1 // pred_fallthru
      _
    // Predicated region
    $region26: #{lstm_pos_penn_forward.1} parent=1 // pred_check
      _
    $region27: #{lstm_pos_penn_forward.1} parent=1 // pred_check_branch
      %38 = sbr.rel (0) target = $region29
    $region28: #{lstm_pos_penn_forward.1} parent=1 // pred_region
      _
    $region29: #{lstm_pos_penn_forward.1} parent=1 // pred_fallthru
      _
    // Predicated region
    $region30: #{lstm_pos_penn_forward.1} parent=1 // pred_check
      _
    $region31: #{lstm_pos_penn_forward.1} parent=1 // pred_check_branch
      %40 = sbr.rel (0) target = $region33
    $region32: #{lstm_pos_penn_forward.1} parent=1 // pred_region
      %41 = dma.done [#allocation8], 128
    $region33: #{lstm_pos_penn_forward.1} parent=1 // pred_fallthru
      _
    %42 = sfence
    %s44 = sld [smem:[#allocation7]]
    %p45 = scmp.lt.s32.totalorder %s44, 0
    %s46 = ssub.s32 0, %s44
    %s47 = scalar_select %p45, %s46, %s44
    %s48 = sdiv.u32.pop %s47, 36
    %s49 = srem.u32.pop %s47, 36
    %s50 = ssub.s32 0, %s49
    %s51 = scalar_select %p45, %s50, %s49
    %s52 = smul.u32 %s51, 4
    %s53 = smul.addr %s52, 64
    %s54 = scalar_lea.hbm %s3, %s53
    // Predicated region
    $region34: #{lstm_pos_penn_forward.1} parent=1 // pred_check
      _
    $region35: #{lstm_pos_penn_forward.1} parent=1 // pred_check_branch
      %56 = sbr.rel target = $region37
    $region36: #{lstm_pos_penn_forward.1} parent=1 // pred_region
      %57 = sst [smem:[#allocation11]] [#allocation10]
      %58 = sst [smem:[#allocation12]] [#allocation9]
    $region37: #{lstm_pos_penn_forward.1} parent=1 // pred_fallthru
      _
    %60 = shalt.err (0)
    %s62 = sshll.u32 [#allocation2], 4
    %s63 = int_to_ptr.vmem [resolvable:$true] %s62
    %65 = dma.hbm_to_vmem [thread:$0]  %s54, 256, %s63, [#allocation5]
    %s66 = smul.addr %s52, 64
    %s67 = scalar_lea.hbm %s4, %s66
    %s68 = scalar_lea.sflag [#allocation5], 8
    // Predicated region
    $region38: #{lstm_pos_penn_forward.1} parent=1 // pred_check
      _
    $region39: #{lstm_pos_penn_forward.1} parent=1 // pred_check_branch
      %70 = sbr.rel target = $region41
    $region40: #{lstm_pos_penn_forward.1} parent=1 // pred_region
      %71 = sst [smem:[#allocation11]] [#allocation14]
      %72 = sst [smem:[#allocation12]] [#allocation13]
    $region41: #{lstm_pos_penn_forward.1} parent=1 // pred_fallthru
      _
    %74 = shalt.err (0)
    %s76 = sshll.u32 [#allocation3], 4
    %s77 = int_to_ptr.vmem [resolvable:$true] %s76
    %79 = dma.hbm_to_vmem [thread:$0]  %s67, 256, %s77, %s68
    %s80 = scalar_lea.vmem %s5, %s51
    %s81 = scalar_lea.sflag [#allocation5], 16
    %p83 = scmp.lt.u32.totalorder 1, 8
    %p84 = pneg %p83
    // Predicated region
    $region42: #{lstm_pos_penn_forward.1} parent=1 // pred_check
      _
    $region43: #{lstm_pos_penn_forward.1} parent=1 // pred_check_branch
      %86 = sbr.rel (%p83) target = $region45
    $region44: #{lstm_pos_penn_forward.1} parent=1 // pred_region
      %s101 = sand.u32 1, 7
      %p102 = scmp.eq.s32.totalorder %s101, 0
      %p103 = pneg %p102
      // Predicated region
      $region57: #{lstm_pos_penn_forward.1} parent=44 // pred_check
        _
      $region58: #{lstm_pos_penn_forward.1} parent=44 // pred_check_branch
        %105 = sbr.rel (%p102) target = $region60
      $region59: #{lstm_pos_penn_forward.1} parent=44 // pred_region
        %s106 = sand.u32 1, 7
        %s107 = ssub.s32 1, %s106
        %s108 = scalar_lea.vmem %s80, %s107
        %s109 = ssub.s32 1, %s106
        %s110 = scalar_lea.vmem [#allocation4], %s109
        %s111 = sshllo.u32 0, %s106
        loop: start=0, step=1, limit=1
        $region61: #{lstm_pos_penn_forward.1} parent=59 // loop_pre_header
          _
        $region62: #{lstm_pos_penn_forward.1} parent=59 // loop_header
          %s113 = sphi 0, %s117
          %p114 = scmp.ge.s32.totalorder %s113, 1
          %s118 = sphi %s108, %s108
          %s119 = sphi %s110, %s110
        $region63: #{lstm_pos_penn_forward.1} parent=59 // loop_header_branch
          %116 = sbr.rel (%p114) target = $region67
        $region64: #{lstm_pos_penn_forward.1} parent=59 // loop_body
          %v120 = vld [vmem:[%s118] sm:%s111]
          %121 = vst [vmem:[%s119] sm:%s111] %v120
        $region65: #{lstm_pos_penn_forward.1} parent=59 // loop_footer
          %s117 = sadd.s32 1, %s113
        $region66: #{lstm_pos_penn_forward.1} parent=59 // loop_footer_branch
          %112 = sbr.rel target = $region62
        $region67: #{lstm_pos_penn_forward.1} parent=59 // loop_exit
          _
      $region60: #{lstm_pos_penn_forward.1} parent=44 // pred_fallthru
        _
    $region45: #{lstm_pos_penn_forward.1} parent=1 // pred_fallthru
      _
    // Predicated region
    $region46: #{lstm_pos_penn_forward.1} parent=1 // pred_check
      %p87 = pneg %p83
    $region47: #{lstm_pos_penn_forward.1} parent=1 // pred_check_branch
      %89 = sbr.rel (%p87) target = $region49
    $region48: #{lstm_pos_penn_forward.1} parent=1 // pred_region
      %s90 = sshllo.u32 0, 1
      loop: start=0, step=1, limit=1
      $region50: #{lstm_pos_penn_forward.1} parent=48 // loop_pre_header
        _
      $region51: #{lstm_pos_penn_forward.1} parent=48 // loop_header
        %s92 = sphi 0, %s96
        %p93 = scmp.ge.s32.totalorder %s92, 1
        %s97 = sphi %s80, %s80
        %s98 = sphi [#allocation4], [#allocation4]
      $region52: #{lstm_pos_penn_forward.1} parent=48 // loop_header_branch
        %95 = sbr.rel (%p93) target = $region56
      $region53: #{lstm_pos_penn_forward.1} parent=48 // loop_body
        %v99 = vld [vmem:[%s97] sm:%s90]
        %100 = vst [vmem:[%s98] sm:%s90] %v99
      $region54: #{lstm_pos_penn_forward.1} parent=48 // loop_footer
        %s96 = sadd.s32 1, %s92
      $region55: #{lstm_pos_penn_forward.1} parent=48 // loop_footer_branch
        %91 = sbr.rel target = $region51
      $region56: #{lstm_pos_penn_forward.1} parent=48 // loop_exit
        _
    $region49: #{lstm_pos_penn_forward.1} parent=1 // pred_fallthru
      _
    // Predicated region
    $region68: #{lstm_pos_penn_forward.1} parent=1 // pred_check
      _
    $region69: #{lstm_pos_penn_forward.1} parent=1 // pred_check_branch
      %124 = sbr.rel (0) target = $region71
    $region70: #{lstm_pos_penn_forward.1} parent=1 // pred_region
      %125 = vsyncadd %s81, 16
    $region71: #{lstm_pos_penn_forward.1} parent=1 // pred_fallthru
      _
    %s126 = sld [smem:[#allocation7 + $0x80]]
    %p127 = scmp.lt.s32.totalorder %s126, 0
    %s128 = ssub.s32 0, %s126
    %s129 = scalar_select %p127, %s128, %s126
    %s130 = sdiv.u32.pop %s129, 36
    %s131 = srem.u32.pop %s129, 36
    %s132 = ssub.s32 0, %s131
    %s133 = scalar_select %p127, %s132, %s131
    %s134 = smul.u32 %s133, 4
    %s135 = smul.addr %s134, 64
    %s136 = scalar_lea.hbm %s3, %s135
    %s137 = scalar_lea.vmem [#allocation2], 16
    %s138 = scalar_lea.sflag [#allocation5], 1
    // Predicated region
    $region72: #{lstm_pos_penn_forward.1} parent=1 // pred_check
      _
    $region73: #{lstm_pos_penn_forward.1} parent=1 // pred_check_branch
      %140 = sbr.rel target = $region75
    $region74: #{lstm_pos_penn_forward.1} parent=1 // pred_region
      %141 = sst [smem:[#allocation11]] [#allocation17]
      %142 = sst [smem:[#allocation12]] [#allocation16]
    $region75: #{lstm_pos_penn_forward.1} parent=1 // pred_fallthru
      _
    %144 = shalt.err (0)
    %s146 = sshll.u32 %s137, 4
    %s147 = int_to_ptr.vmem [resolvable:$true] %s146
    %149 = dma.hbm_to_vmem [thread:$0]  %s136, 256, %s147, %s138
    %s150 = smul.addr %s134, 64
    %s151 = scalar_lea.hbm %s4, %s150
    %s152 = scalar_lea.vmem [#allocation3], 16
    %s153 = scalar_lea.sflag [#allocation5], 9
    // Predicated region
    $region76: #{lstm_pos_penn_forward.1} parent=1 // pred_check
      _
    $region77: #{lstm_pos_penn_forward.1} parent=1 // pred_check_branch
      %155 = sbr.rel target = $region79
    $region78: #{lstm_pos_penn_forward.1} parent=1 // pred_region
      %156 = sst [smem:[#allocation11]] [#allocation19]
      %157 = sst [smem:[#allocation12]] [#allocation18]
    $region79: #{lstm_pos_penn_forward.1} parent=1 // pred_fallthru
      _
    %159 = shalt.err (0)
    %s161 = sshll.u32 %s152, 4
    %s162 = int_to_ptr.vmem [resolvable:$true] %s161
    %164 = dma.hbm_to_vmem [thread:$0]  %s151, 256, %s162, %s153
    %s165 = scalar_lea.vmem %s5, %s133
    %s166 = scalar_lea.vmem [#allocation4], 1
    %s167 = scalar_lea.sflag [#allocation5], 17
    %p169 = scmp.lt.u32.totalorder 1, 8
    %p170 = pneg %p169
    // Predicated region
    $region80: #{lstm_pos_penn_forward.1} parent=1 // pred_check
      _
    $region81: #{lstm_pos_penn_forward.1} parent=1 // pred_check_branch
      %172 = sbr.rel (%p169) target = $region83
    $region82: #{lstm_pos_penn_forward.1} parent=1 // pred_region
      %s187 = sand.u32 1, 7
      %p188 = scmp.eq.s32.totalorder %s187, 0
      %p189 = pneg %p188
      // Predicated region
      $region95: #{lstm_pos_penn_forward.1} parent=82 // pred_check
        _
      $region96: #{lstm_pos_penn_forward.1} parent=82 // pred_check_branch
        %191 = sbr.rel (%p188) target = $region98
      $region97: #{lstm_pos_penn_forward.1} parent=82 // pred_region
        %s192 = sand.u32 1, 7
        %s193 = ssub.s32 1, %s192
        %s194 = scalar_lea.vmem %s165, %s193
        %s195 = ssub.s32 1, %s192
        %s196 = scalar_lea.vmem %s166, %s195 [#allocation4]
        %s197 = sshllo.u32 0, %s192
        loop: start=0, step=1, limit=1
        $region99: #{lstm_pos_penn_forward.1} parent=97 // loop_pre_header
          _
        $region100: #{lstm_pos_penn_forward.1} parent=97 // loop_header
          %s199 = sphi 0, %s203
          %p200 = scmp.ge.s32.totalorder %s199, 1
          %s204 = sphi %s194, %s194
          %s205 = sphi %s196, %s196
        $region101: #{lstm_pos_penn_forward.1} parent=97 // loop_header_branch
          %202 = sbr.rel (%p200) target = $region105
        $region102: #{lstm_pos_penn_forward.1} parent=97 // loop_body
          %v206 = vld [vmem:[%s204] sm:%s197]
          %207 = vst [vmem:[%s205] sm:%s197] %v206
        $region103: #{lstm_pos_penn_forward.1} parent=97 // loop_footer
          %s203 = sadd.s32 1, %s199
        $region104: #{lstm_pos_penn_forward.1} parent=97 // loop_footer_branch
          %198 = sbr.rel target = $region100
        $region105: #{lstm_pos_penn_forward.1} parent=97 // loop_exit
          _
      $region98: #{lstm_pos_penn_forward.1} parent=82 // pred_fallthru
        _
    $region83: #{lstm_pos_penn_forward.1} parent=1 // pred_fallthru
      _
    // Predicated region
    $region84: #{lstm_pos_penn_forward.1} parent=1 // pred_check
      %p173 = pneg %p169
    $region85: #{lstm_pos_penn_forward.1} parent=1 // pred_check_branch
      %175 = sbr.rel (%p173) target = $region87
    $region86: #{lstm_pos_penn_forward.1} parent=1 // pred_region
      %s176 = sshllo.u32 0, 1
      loop: start=0, step=1, limit=1
      $region88: #{lstm_pos_penn_forward.1} parent=86 // loop_pre_header
        _
      $region89: #{lstm_pos_penn_forward.1} parent=86 // loop_header
        %s178 = sphi 0, %s182
        %p179 = scmp.ge.s32.totalorder %s178, 1
        %s183 = sphi %s165, %s165
        %s184 = sphi %s166, %s166
      $region90: #{lstm_pos_penn_forward.1} parent=86 // loop_header_branch
        %181 = sbr.rel (%p179) target = $region94
      $region91: #{lstm_pos_penn_forward.1} parent=86 // loop_body
        %v185 = vld [vmem:[%s183] sm:%s176]
        %186 = vst [vmem:[%s184] sm:%s176] %v185
      $region92: #{lstm_pos_penn_forward.1} parent=86 // loop_footer
        %s182 = sadd.s32 1, %s178
      $region93: #{lstm_pos_penn_forward.1} parent=86 // loop_footer_branch
        %177 = sbr.rel target = $region89
      $region94: #{lstm_pos_penn_forward.1} parent=86 // loop_exit
        _
    $region87: #{lstm_pos_penn_forward.1} parent=1 // pred_fallthru
      _
    // Predicated region
    $region106: #{lstm_pos_penn_forward.1} parent=1 // pred_check
      _
    $region107: #{lstm_pos_penn_forward.1} parent=1 // pred_check_branch
      %210 = sbr.rel (0) target = $region109
    $region108: #{lstm_pos_penn_forward.1} parent=1 // pred_region
      %211 = vsyncadd %s167, 16
    $region109: #{lstm_pos_penn_forward.1} parent=1 // pred_fallthru
      _
    %s212 = sld [smem:[#allocation7 + $0x100]]
    %p213 = scmp.lt.s32.totalorder %s212, 0
    %s214 = ssub.s32 0, %s212
    %s215 = scalar_select %p213, %s214, %s212
    %s216 = sdiv.u32.pop %s215, 36
    %s217 = srem.u32.pop %s215, 36
    %s218 = ssub.s32 0, %s217
    %s219 = scalar_select %p213, %s218, %s217
    %s220 = smul.u32 %s219, 4
    %s221 = smul.addr %s220, 64
    %s222 = scalar_lea.hbm %s3, %s221
    %s223 = scalar_lea.vmem [#allocation2], 32
    %s224 = scalar_lea.sflag [#allocation5], 2
    // Predicated region
    $region110: #{lstm_pos_penn_forward.1} parent=1 // pred_check
      _
    $region111: #{lstm_pos_penn_forward.1} parent=1 // pred_check_branch
      %226 = sbr.rel target = $region113
    $region112: #{lstm_pos_penn_forward.1} parent=1 // pred_region
      %227 = sst [smem:[#allocation11]] [#allocation22]
      %228 = sst [smem:[#allocation12]] [#allocation21]
    $region113: #{lstm_pos_penn_forward.1} parent=1 // pred_fallthru
      _
    %230 = shalt.err (0)
    %s232 = sshll.u32 %s223, 4
    %s233 = int_to_ptr.vmem [resolvable:$true] %s232
    %235 = dma.hbm_to_vmem [thread:$0]  %s222, 256, %s233, %s224
    %s236 = smul.addr %s220, 64
    %s237 = scalar_lea.hbm %s4, %s236
    %s238 = scalar_lea.vmem [#allocation3], 32
    %s239 = scalar_lea.sflag [#allocation5], 10
    // Predicated region
    $region114: #{lstm_pos_penn_forward.1} parent=1 // pred_check
      _
    $region115: #{lstm_pos_penn_forward.1} parent=1 // pred_check_branch
      %241 = sbr.rel target = $region117
    $region116: #{lstm_pos_penn_forward.1} parent=1 // pred_region
      %242 = sst [smem:[#allocation11]] [#allocation24]
      %243 = sst [smem:[#allocation12]] [#allocation23]
    $region117: #{lstm_pos_penn_forward.1} parent=1 // pred_fallthru
      _
    %245 = shalt.err (0)
    %s247 = sshll.u32 %s238, 4
    %s248 = int_to_ptr.vmem [resolvable:$true] %s247
    %250 = dma.hbm_to_vmem [thread:$0]  %s237, 256, %s248, %s239
    %s251 = scalar_lea.vmem %s5, %s219
    %s252 = scalar_lea.vmem [#allocation4], 2
    %s253 = scalar_lea.sflag [#allocation5], 18
    %p255 = scmp.lt.u32.totalorder 1, 8
    %p256 = pneg %p255
    // Predicated region
    $region118: #{lstm_pos_penn_forward.1} parent=1 // pred_check
      _
    $region119: #{lstm_pos_penn_forward.1} parent=1 // pred_check_branch
      %258 = sbr.rel (%p255) target = $region121
    $region120: #{lstm_pos_penn_forward.1} parent=1 // pred_region
      %s273 = sand.u32 1, 7
      %p274 = scmp.eq.s32.totalorder %s273, 0
      %p275 = pneg %p274
      // Predicated region
      $region133: #{lstm_pos_penn_forward.1} parent=120 // pred_check
        _
      $region134: #{lstm_pos_penn_forward.1} parent=120 // pred_check_branch
        %277 = sbr.rel (%p274) target = $region136
      $region135: #{lstm_pos_penn_forward.1} parent=120 // pred_region
        %s278 = sand.u32 1, 7
        %s279 = ssub.s32 1, %s278
        %s280 = scalar_lea.vmem %s251, %s279
        %s281 = ssub.s32 1, %s278
        %s282 = scalar_lea.vmem %s252, %s281 [#allocation4]
        %s283 = sshllo.u32 0, %s278
        loop: start=0, step=1, limit=1
        $region137: #{lstm_pos_penn_forward.1} parent=135 // loop_pre_header
          _
        $region138: #{lstm_pos_penn_forward.1} parent=135 // loop_header
          %s285 = sphi 0, %s289
          %p286 = scmp.ge.s32.totalorder %s285, 1
          %s290 = sphi %s280, %s280
          %s291 = sphi %s282, %s282
        $region139: #{lstm_pos_penn_forward.1} parent=135 // loop_header_branch
          %288 = sbr.rel (%p286) target = $region143
        $region140: #{lstm_pos_penn_forward.1} parent=135 // loop_body
          %v292 = vld [vmem:[%s290] sm:%s283]
          %293 = vst [vmem:[%s291] sm:%s283] %v292
        $region141: #{lstm_pos_penn_forward.1} parent=135 // loop_footer
          %s289 = sadd.s32 1, %s285
        $region142: #{lstm_pos_penn_forward.1} parent=135 // loop_footer_branch
          %284 = sbr.rel target = $region138
        $region143: #{lstm_pos_penn_forward.1} parent=135 // loop_exit
          _
      $region136: #{lstm_pos_penn_forward.1} parent=120 // pred_fallthru
        _
    $region121: #{lstm_pos_penn_forward.1} parent=1 // pred_fallthru
      _
    // Predicated region
    $region122: #{lstm_pos_penn_forward.1} parent=1 // pred_check
      %p259 = pneg %p255
    $region123: #{lstm_pos_penn_forward.1} parent=1 // pred_check_branch
      %261 = sbr.rel (%p259) target = $region125
    $region124: #{lstm_pos_penn_forward.1} parent=1 // pred_region
      %s262 = sshllo.u32 0, 1
      loop: start=0, step=1, limit=1
      $region126: #{lstm_pos_penn_forward.1} parent=124 // loop_pre_header
        _
      $region127: #{lstm_pos_penn_forward.1} parent=124 // loop_header
        %s264 = sphi 0, %s268
        %p265 = scmp.ge.s32.totalorder %s264, 1
        %s269 = sphi %s251, %s251
        %s270 = sphi %s252, %s252
      $region128: #{lstm_pos_penn_forward.1} parent=124 // loop_header_branch
        %267 = sbr.rel (%p265) target = $region132
      $region129: #{lstm_pos_penn_forward.1} parent=124 // loop_body
        %v271 = vld [vmem:[%s269] sm:%s262]
        %272 = vst [vmem:[%s270] sm:%s262] %v271
      $region130: #{lstm_pos_penn_forward.1} parent=124 // loop_footer
        %s268 = sadd.s32 1, %s264
      $region131: #{lstm_pos_penn_forward.1} parent=124 // loop_footer_branch
        %263 = sbr.rel target = $region127
      $region132: #{lstm_pos_penn_forward.1} parent=124 // loop_exit
        _
    $region125: #{lstm_pos_penn_forward.1} parent=1 // pred_fallthru
      _
    // Predicated region
    $region144: #{lstm_pos_penn_forward.1} parent=1 // pred_check
      _
    $region145: #{lstm_pos_penn_forward.1} parent=1 // pred_check_branch
      %296 = sbr.rel (0) target = $region147
    $region146: #{lstm_pos_penn_forward.1} parent=1 // pred_region
      %297 = vsyncadd %s253, 16
    $region147: #{lstm_pos_penn_forward.1} parent=1 // pred_fallthru
      _
    %s298 = sld [smem:[#allocation7 + $0x180]]
    %p299 = scmp.lt.s32.totalorder %s298, 0
    %s300 = ssub.s32 0, %s298
    %s301 = scalar_select %p299, %s300, %s298
    %s302 = sdiv.u32.pop %s301, 36
    %s303 = srem.u32.pop %s301, 36
    %s304 = ssub.s32 0, %s303
    %s305 = scalar_select %p299, %s304, %s303
    %s306 = smul.u32 %s305, 4
    %s307 = smul.addr %s306, 64
    %s308 = scalar_lea.hbm %s3, %s307
    %s309 = scalar_lea.vmem [#allocation2], 48
    %s310 = scalar_lea.sflag [#allocation5], 3
    // Predicated region
    $region148: #{lstm_pos_penn_forward.1} parent=1 // pred_check
      _
    $region149: #{lstm_pos_penn_forward.1} parent=1 // pred_check_branch
      %312 = sbr.rel target = $region151
    $region150: #{lstm_pos_penn_forward.1} parent=1 // pred_region
      %313 = sst [smem:[#allocation11]] [#allocation27]
      %314 = sst [smem:[#allocation12]] [#allocation26]
    $region151: #{lstm_pos_penn_forward.1} parent=1 // pred_fallthru
      _
    %316 = shalt.err (0)
    %s318 = sshll.u32 %s309, 4
    %s319 = int_to_ptr.vmem [resolvable:$true] %s318
    %321 = dma.hbm_to_vmem [thread:$0]  %s308, 256, %s319, %s310
    %s322 = smul.addr %s306, 64
    %s323 = scalar_lea.hbm %s4, %s322
    %s324 = scalar_lea.vmem [#allocation3], 48
    %s325 = scalar_lea.sflag [#allocation5], 11
    // Predicated region
    $region152: #{lstm_pos_penn_forward.1} parent=1 // pred_check
      _
    $region153: #{lstm_pos_penn_forward.1} parent=1 // pred_check_branch
      %327 = sbr.rel target = $region155
    $region154: #{lstm_pos_penn_forward.1} parent=1 // pred_region
      %328 = sst [smem:[#allocation11]] [#allocation29]
      %329 = sst [smem:[#allocation12]] [#allocation28]
    $region155: #{lstm_pos_penn_forward.1} parent=1 // pred_fallthru
      _
    %331 = shalt.err (0)
    %s333 = sshll.u32 %s324, 4
    %s334 = int_to_ptr.vmem [resolvable:$true] %s333
    %336 = dma.hbm_to_vmem [thread:$0]  %s323, 256, %s334, %s325
    %s337 = scalar_lea.vmem %s5, %s305
    %s338 = scalar_lea.vmem [#allocation4], 3
    %s339 = scalar_lea.sflag [#allocation5], 19
    %p341 = scmp.lt.u32.totalorder 1, 8
    %p342 = pneg %p341
    // Predicated region
    $region156: #{lstm_pos_penn_forward.1} parent=1 // pred_check
      _
    $region157: #{lstm_pos_penn_forward.1} parent=1 // pred_check_branch
      %344 = sbr.rel (%p341) target = $region159
    $region158: #{lstm_pos_penn_forward.1} parent=1 // pred_region
      %s359 = sand.u32 1, 7
      %p360 = scmp.eq.s32.totalorder %s359, 0
      %p361 = pneg %p360
      // Predicated region
      $region171: #{lstm_pos_penn_forward.1} parent=158 // pred_check
        _
      $region172: #{lstm_pos_penn_forward.1} parent=158 // pred_check_branch
        %363 = sbr.rel (%p360) target = $region174
      $region173: #{lstm_pos_penn_forward.1} parent=158 // pred_region
        %s364 = sand.u32 1, 7
        %s365 = ssub.s32 1, %s364
        %s366 = scalar_lea.vmem %s337, %s365
        %s367 = ssub.s32 1, %s364
        %s368 = scalar_lea.vmem %s338, %s367 [#allocation4]
        %s369 = sshllo.u32 0, %s364
        loop: start=0, step=1, limit=1
        $region175: #{lstm_pos_penn_forward.1} parent=173 // loop_pre_header
          _
        $region176: #{lstm_pos_penn_forward.1} parent=173 // loop_header
          %s371 = sphi 0, %s375
          %p372 = scmp.ge.s32.totalorder %s371, 1
          %s376 = sphi %s366, %s366
          %s377 = sphi %s368, %s368
        $region177: #{lstm_pos_penn_forward.1} parent=173 // loop_header_branch
          %374 = sbr.rel (%p372) target = $region181
        $region178: #{lstm_pos_penn_forward.1} parent=173 // loop_body
          %v378 = vld [vmem:[%s376] sm:%s369]
          %379 = vst [vmem:[%s377] sm:%s369] %v378
        $region179: #{lstm_pos_penn_forward.1} parent=173 // loop_footer
          %s375 = sadd.s32 1, %s371
        $region180: #{lstm_pos_penn_forward.1} parent=173 // loop_footer_branch
          %370 = sbr.rel target = $region176
        $region181: #{lstm_pos_penn_forward.1} parent=173 // loop_exit
          _
      $region174: #{lstm_pos_penn_forward.1} parent=158 // pred_fallthru
        _
    $region159: #{lstm_pos_penn_forward.1} parent=1 // pred_fallthru
      _
    // Predicated region
    $region160: #{lstm_pos_penn_forward.1} parent=1 // pred_check
      %p345 = pneg %p341
    $region161: #{lstm_pos_penn_forward.1} parent=1 // pred_check_branch
      %347 = sbr.rel (%p345) target = $region163
    $region162: #{lstm_pos_penn_forward.1} parent=1 // pred_region
      %s348 = sshllo.u32 0, 1
      loop: start=0, step=1, limit=1
      $region164: #{lstm_pos_penn_forward.1} parent=162 // loop_pre_header
        _
      $region165: #{lstm_pos_penn_forward.1} parent=162 // loop_header
        %s350 = sphi 0, %s354
        %p351 = scmp.ge.s32.totalorder %s350, 1
        %s355 = sphi %s337, %s337
        %s356 = sphi %s338, %s338
      $region166: #{lstm_pos_penn_forward.1} parent=162 // loop_header_branch
        %353 = sbr.rel (%p351) target = $region170
      $region167: #{lstm_pos_penn_forward.1} parent=162 // loop_body
        %v357 = vld [vmem:[%s355] sm:%s348]
        %358 = vst [vmem:[%s356] sm:%s348] %v357
      $region168: #{lstm_pos_penn_forward.1} parent=162 // loop_footer
        %s354 = sadd.s32 1, %s350
      $region169: #{lstm_pos_penn_forward.1} parent=162 // loop_footer_branch
        %349 = sbr.rel target = $region165
      $region170: #{lstm_pos_penn_forward.1} parent=162 // loop_exit
        _
    $region163: #{lstm_pos_penn_forward.1} parent=1 // pred_fallthru
      _
    // Predicated region
    $region182: #{lstm_pos_penn_forward.1} parent=1 // pred_check
      _
    $region183: #{lstm_pos_penn_forward.1} parent=1 // pred_check_branch
      %382 = sbr.rel (0) target = $region185
    $region184: #{lstm_pos_penn_forward.1} parent=1 // pred_region
      %383 = vsyncadd %s339, 16
    $region185: #{lstm_pos_penn_forward.1} parent=1 // pred_fallthru
      _
    %s384 = sld [smem:[#allocation7 + $0x200]]
    %p385 = scmp.lt.s32.totalorder %s384, 0
    %s386 = ssub.s32 0, %s384
    %s387 = scalar_select %p385, %s386, %s384
    %s388 = sdiv.u32.pop %s387, 36
    %s389 = srem.u32.pop %s387, 36
    %s390 = ssub.s32 0, %s389
    %s391 = scalar_select %p385, %s390, %s389
    %s392 = smul.u32 %s391, 4
    %s393 = smul.addr %s392, 64
    %s394 = scalar_lea.hbm %s3, %s393
    %s395 = scalar_lea.vmem [#allocation2], 64
    %s396 = scalar_lea.sflag [#allocation5], 4
    // Predicated region
    $region186: #{lstm_pos_penn_forward.1} parent=1 // pred_check
      _
    $region187: #{lstm_pos_penn_forward.1} parent=1 // pred_check_branch
      %398 = sbr.rel target = $region189
    $region188: #{lstm_pos_penn_forward.1} parent=1 // pred_region
      %399 = sst [smem:[#allocation11]] [#allocation32]
      %400 = sst [smem:[#allocation12]] [#allocation31]
    $region189: #{lstm_pos_penn_forward.1} parent=1 // pred_fallthru
      _
    %402 = shalt.err (0)
    %s404 = sshll.u32 %s395, 4
    %s405 = int_to_ptr.vmem [resolvable:$true] %s404
    %407 = dma.hbm_to_vmem [thread:$0]  %s394, 256, %s405, %s396
    %s408 = smul.addr %s392, 64
    %s409 = scalar_lea.hbm %s4, %s408
    %s410 = scalar_lea.vmem [#allocation3], 64
    %s411 = scalar_lea.sflag [#allocation5], 12
    // Predicated region
    $region190: #{lstm_pos_penn_forward.1} parent=1 // pred_check
      _
    $region191: #{lstm_pos_penn_forward.1} parent=1 // pred_check_branch
      %413 = sbr.rel target = $region193
    $region192: #{lstm_pos_penn_forward.1} parent=1 // pred_region
      %414 = sst [smem:[#allocation11]] [#allocation34]
      %415 = sst [smem:[#allocation12]] [#allocation33]
    $region193: #{lstm_pos_penn_forward.1} parent=1 // pred_fallthru
      _
    %417 = shalt.err (0)
    %s419 = sshll.u32 %s410, 4
    %s420 = int_to_ptr.vmem [resolvable:$true] %s419
    %422 = dma.hbm_to_vmem [thread:$0]  %s409, 256, %s420, %s411
    %s423 = scalar_lea.vmem %s5, %s391
    %s424 = scalar_lea.vmem [#allocation4], 4
    %s425 = scalar_lea.sflag [#allocation5], 20
    %p427 = scmp.lt.u32.totalorder 1, 8
    %p428 = pneg %p427
    // Predicated region
    $region194: #{lstm_pos_penn_forward.1} parent=1 // pred_check
      _
    $region195: #{lstm_pos_penn_forward.1} parent=1 // pred_check_branch
      %430 = sbr.rel (%p427) target = $region197
    $region196: #{lstm_pos_penn_forward.1} parent=1 // pred_region
      %s445 = sand.u32 1, 7
      %p446 = scmp.eq.s32.totalorder %s445, 0
      %p447 = pneg %p446
      // Predicated region
      $region209: #{lstm_pos_penn_forward.1} parent=196 // pred_check
        _
      $region210: #{lstm_pos_penn_forward.1} parent=196 // pred_check_branch
        %449 = sbr.rel (%p446) target = $region212
      $region211: #{lstm_pos_penn_forward.1} parent=196 // pred_region
        %s450 = sand.u32 1, 7
        %s451 = ssub.s32 1, %s450
        %s452 = scalar_lea.vmem %s423, %s451
        %s453 = ssub.s32 1, %s450
        %s454 = scalar_lea.vmem %s424, %s453 [#allocation4]
        %s455 = sshllo.u32 0, %s450
        loop: start=0, step=1, limit=1
        $region213: #{lstm_pos_penn_forward.1} parent=211 // loop_pre_header
          _
        $region214: #{lstm_pos_penn_forward.1} parent=211 // loop_header
          %s457 = sphi 0, %s461
          %p458 = scmp.ge.s32.totalorder %s457, 1
          %s462 = sphi %s452, %s452
          %s463 = sphi %s454, %s454
        $region215: #{lstm_pos_penn_forward.1} parent=211 // loop_header_branch
          %460 = sbr.rel (%p458) target = $region219
        $region216: #{lstm_pos_penn_forward.1} parent=211 // loop_body
          %v464 = vld [vmem:[%s462] sm:%s455]
          %465 = vst [vmem:[%s463] sm:%s455] %v464
        $region217: #{lstm_pos_penn_forward.1} parent=211 // loop_footer
          %s461 = sadd.s32 1, %s457
        $region218: #{lstm_pos_penn_forward.1} parent=211 // loop_footer_branch
          %456 = sbr.rel target = $region214
        $region219: #{lstm_pos_penn_forward.1} parent=211 // loop_exit
          _
      $region212: #{lstm_pos_penn_forward.1} parent=196 // pred_fallthru
        _
    $region197: #{lstm_pos_penn_forward.1} parent=1 // pred_fallthru
      _
    // Predicated region
    $region198: #{lstm_pos_penn_forward.1} parent=1 // pred_check
      %p431 = pneg %p427
    $region199: #{lstm_pos_penn_forward.1} parent=1 // pred_check_branch
      %433 = sbr.rel (%p431) target = $region201
    $region200: #{lstm_pos_penn_forward.1} parent=1 // pred_region
      %s434 = sshllo.u32 0, 1
      loop: start=0, step=1, limit=1
      $region202: #{lstm_pos_penn_forward.1} parent=200 // loop_pre_header
        _
      $region203: #{lstm_pos_penn_forward.1} parent=200 // loop_header
        %s436 = sphi 0, %s440
        %p437 = scmp.ge.s32.totalorder %s436, 1
        %s441 = sphi %s423, %s423
        %s442 = sphi %s424, %s424
      $region204: #{lstm_pos_penn_forward.1} parent=200 // loop_header_branch
        %439 = sbr.rel (%p437) target = $region208
      $region205: #{lstm_pos_penn_forward.1} parent=200 // loop_body
        %v443 = vld [vmem:[%s441] sm:%s434]
        %444 = vst [vmem:[%s442] sm:%s434] %v443
      $region206: #{lstm_pos_penn_forward.1} parent=200 // loop_footer
        %s440 = sadd.s32 1, %s436
      $region207: #{lstm_pos_penn_forward.1} parent=200 // loop_footer_branch
        %435 = sbr.rel target = $region203
      $region208: #{lstm_pos_penn_forward.1} parent=200 // loop_exit
        _
    $region201: #{lstm_pos_penn_forward.1} parent=1 // pred_fallthru
      _
    // Predicated region
    $region220: #{lstm_pos_penn_forward.1} parent=1 // pred_check
      _
    $region221: #{lstm_pos_penn_forward.1} parent=1 // pred_check_branch
      %468 = sbr.rel (0) target = $region223
    $region222: #{lstm_pos_penn_forward.1} parent=1 // pred_region
      %469 = vsyncadd %s425, 16
    $region223: #{lstm_pos_penn_forward.1} parent=1 // pred_fallthru
      _
    %s470 = sld [smem:[#allocation7 + $0x280]]
    %p471 = scmp.lt.s32.totalorder %s470, 0
    %s472 = ssub.s32 0, %s470
    %s473 = scalar_select %p471, %s472, %s470
    %s474 = sdiv.u32.pop %s473, 36
    %s475 = srem.u32.pop %s473, 36
    %s476 = ssub.s32 0, %s475
    %s477 = scalar_select %p471, %s476, %s475
    %s478 = smul.u32 %s477, 4
    %s479 = smul.addr %s478, 64
    %s480 = scalar_lea.hbm %s3, %s479
    %s481 = scalar_lea.vmem [#allocation2], 80
    %s482 = scalar_lea.sflag [#allocation5], 5
    // Predicated region
    $region224: #{lstm_pos_penn_forward.1} parent=1 // pred_check
      _
    $region225: #{lstm_pos_penn_forward.1} parent=1 // pred_check_branch
      %484 = sbr.rel target = $region227
    $region226: #{lstm_pos_penn_forward.1} parent=1 // pred_region
      %485 = sst [smem:[#allocation11]] [#allocation37]
      %486 = sst [smem:[#allocation12]] [#allocation36]
    $region227: #{lstm_pos_penn_forward.1} parent=1 // pred_fallthru
      _
    %488 = shalt.err (0)
    %s490 = sshll.u32 %s481, 4
    %s491 = int_to_ptr.vmem [resolvable:$true] %s490
    %493 = dma.hbm_to_vmem [thread:$0]  %s480, 256, %s491, %s482
    %s494 = smul.addr %s478, 64
    %s495 = scalar_lea.hbm %s4, %s494
    %s496 = scalar_lea.vmem [#allocation3], 80
    %s497 = scalar_lea.sflag [#allocation5], 13
    // Predicated region
    $region228: #{lstm_pos_penn_forward.1} parent=1 // pred_check
      _
    $region229: #{lstm_pos_penn_forward.1} parent=1 // pred_check_branch
      %499 = sbr.rel target = $region231
    $region230: #{lstm_pos_penn_forward.1} parent=1 // pred_region
      %500 = sst [smem:[#allocation11]] [#allocation39]
      %501 = sst [smem:[#allocation12]] [#allocation38]
    $region231: #{lstm_pos_penn_forward.1} parent=1 // pred_fallthru
      _
    %503 = shalt.err (0)
    %s505 = sshll.u32 %s496, 4
    %s506 = int_to_ptr.vmem [resolvable:$true] %s505
    %508 = dma.hbm_to_vmem [thread:$0]  %s495, 256, %s506, %s497
    %s509 = scalar_lea.vmem %s5, %s477
    %s510 = scalar_lea.vmem [#allocation4], 5
    %s511 = scalar_lea.sflag [#allocation5], 21
    %p513 = scmp.lt.u32.totalorder 1, 8
    %p514 = pneg %p513
    // Predicated region
    $region232: #{lstm_pos_penn_forward.1} parent=1 // pred_check
      _
    $region233: #{lstm_pos_penn_forward.1} parent=1 // pred_check_branch
      %516 = sbr.rel (%p513) target = $region235
    $region234: #{lstm_pos_penn_forward.1} parent=1 // pred_region
      %s531 = sand.u32 1, 7
      %p532 = scmp.eq.s32.totalorder %s531, 0
      %p533 = pneg %p532
      // Predicated region
      $region247: #{lstm_pos_penn_forward.1} parent=234 // pred_check
        _
      $region248: #{lstm_pos_penn_forward.1} parent=234 // pred_check_branch
        %535 = sbr.rel (%p532) target = $region250
      $region249: #{lstm_pos_penn_forward.1} parent=234 // pred_region
        %s536 = sand.u32 1, 7
        %s537 = ssub.s32 1, %s536
        %s538 = scalar_lea.vmem %s509, %s537
        %s539 = ssub.s32 1, %s536
        %s540 = scalar_lea.vmem %s510, %s539 [#allocation4]
        %s541 = sshllo.u32 0, %s536
        loop: start=0, step=1, limit=1
        $region251: #{lstm_pos_penn_forward.1} parent=249 // loop_pre_header
          _
        $region252: #{lstm_pos_penn_forward.1} parent=249 // loop_header
          %s543 = sphi 0, %s547
          %p544 = scmp.ge.s32.totalorder %s543, 1
          %s548 = sphi %s538, %s538
          %s549 = sphi %s540, %s540
        $region253: #{lstm_pos_penn_forward.1} parent=249 // loop_header_branch
          %546 = sbr.rel (%p544) target = $region257
        $region254: #{lstm_pos_penn_forward.1} parent=249 // loop_body
          %v550 = vld [vmem:[%s548] sm:%s541]
          %551 = vst [vmem:[%s549] sm:%s541] %v550
        $region255: #{lstm_pos_penn_forward.1} parent=249 // loop_footer
          %s547 = sadd.s32 1, %s543
        $region256: #{lstm_pos_penn_forward.1} parent=249 // loop_footer_branch
          %542 = sbr.rel target = $region252
        $region257: #{lstm_pos_penn_forward.1} parent=249 // loop_exit
          _
      $region250: #{lstm_pos_penn_forward.1} parent=234 // pred_fallthru
        _
    $region235: #{lstm_pos_penn_forward.1} parent=1 // pred_fallthru
      _
    // Predicated region
    $region236: #{lstm_pos_penn_forward.1} parent=1 // pred_check
      %p517 = pneg %p513
    $region237: #{lstm_pos_penn_forward.1} parent=1 // pred_check_branch
      %519 = sbr.rel (%p517) target = $region239
    $region238: #{lstm_pos_penn_forward.1} parent=1 // pred_region
      %s520 = sshllo.u32 0, 1
      loop: start=0, step=1, limit=1
      $region240: #{lstm_pos_penn_forward.1} parent=238 // loop_pre_header
        _
      $region241: #{lstm_pos_penn_forward.1} parent=238 // loop_header
        %s522 = sphi 0, %s526
        %p523 = scmp.ge.s32.totalorder %s522, 1
        %s527 = sphi %s509, %s509
        %s528 = sphi %s510, %s510
      $region242: #{lstm_pos_penn_forward.1} parent=238 // loop_header_branch
        %525 = sbr.rel (%p523) target = $region246
      $region243: #{lstm_pos_penn_forward.1} parent=238 // loop_body
        %v529 = vld [vmem:[%s527] sm:%s520]
        %530 = vst [vmem:[%s528] sm:%s520] %v529
      $region244: #{lstm_pos_penn_forward.1} parent=238 // loop_footer
        %s526 = sadd.s32 1, %s522
      $region245: #{lstm_pos_penn_forward.1} parent=238 // loop_footer_branch
        %521 = sbr.rel target = $region241
      $region246: #{lstm_pos_penn_forward.1} parent=238 // loop_exit
        _
    $region239: #{lstm_pos_penn_forward.1} parent=1 // pred_fallthru
      _
    // Predicated region
    $region258: #{lstm_pos_penn_forward.1} parent=1 // pred_check
      _
    $region259: #{lstm_pos_penn_forward.1} parent=1 // pred_check_branch
      %554 = sbr.rel (0) target = $region261
    $region260: #{lstm_pos_penn_forward.1} parent=1 // pred_region
      %555 = vsyncadd %s511, 16
    $region261: #{lstm_pos_penn_forward.1} parent=1 // pred_fallthru
      _
    %s556 = sld [smem:[#allocation7 + $0x300]]
    %p557 = scmp.lt.s32.totalorder %s556, 0
    %s558 = ssub.s32 0, %s556
    %s559 = scalar_select %p557, %s558, %s556
    %s560 = sdiv.u32.pop %s559, 36
    %s561 = srem.u32.pop %s559, 36
    %s562 = ssub.s32 0, %s561
    %s563 = scalar_select %p557, %s562, %s561
    %s564 = smul.u32 %s563, 4
    %s565 = smul.addr %s564, 64
    %s566 = scalar_lea.hbm %s3, %s565
    %s567 = scalar_lea.vmem [#allocation2], 96
    %s568 = scalar_lea.sflag [#allocation5], 6
    // Predicated region
    $region262: #{lstm_pos_penn_forward.1} parent=1 // pred_check
      _
    $region263: #{lstm_pos_penn_forward.1} parent=1 // pred_check_branch
      %570 = sbr.rel target = $region265
    $region264: #{lstm_pos_penn_forward.1} parent=1 // pred_region
      %571 = sst [smem:[#allocation11]] [#allocation42]
      %572 = sst [smem:[#allocation12]] [#allocation41]
    $region265: #{lstm_pos_penn_forward.1} parent=1 // pred_fallthru
      _
    %574 = shalt.err (0)
    %s576 = sshll.u32 %s567, 4
    %s577 = int_to_ptr.vmem [resolvable:$true] %s576
    %579 = dma.hbm_to_vmem [thread:$0]  %s566, 256, %s577, %s568
    %s580 = smul.addr %s564, 64
    %s581 = scalar_lea.hbm %s4, %s580
    %s582 = scalar_lea.vmem [#allocation3], 96
    %s583 = scalar_lea.sflag [#allocation5], 14
    // Predicated region
    $region266: #{lstm_pos_penn_forward.1} parent=1 // pred_check
      _
    $region267: #{lstm_pos_penn_forward.1} parent=1 // pred_check_branch
      %585 = sbr.rel target = $region269
    $region268: #{lstm_pos_penn_forward.1} parent=1 // pred_region
      %586 = sst [smem:[#allocation11]] [#allocation44]
      %587 = sst [smem:[#allocation12]] [#allocation43]
    $region269: #{lstm_pos_penn_forward.1} parent=1 // pred_fallthru
      _
    %589 = shalt.err (0)
    %s591 = sshll.u32 %s582, 4
    %s592 = int_to_ptr.vmem [resolvable:$true] %s591
    %594 = dma.hbm_to_vmem [thread:$0]  %s581, 256, %s592, %s583
    %s595 = scalar_lea.vmem %s5, %s563
    %s596 = scalar_lea.vmem [#allocation4], 6
    %s597 = scalar_lea.sflag [#allocation5], 22
    %p599 = scmp.lt.u32.totalorder 1, 8
    %p600 = pneg %p599
    // Predicated region
    $region270: #{lstm_pos_penn_forward.1} parent=1 // pred_check
      _
    $region271: #{lstm_pos_penn_forward.1} parent=1 // pred_check_branch
      %602 = sbr.rel (%p599) target = $region273
    $region272: #{lstm_pos_penn_forward.1} parent=1 // pred_region
      %s617 = sand.u32 1, 7
      %p618 = scmp.eq.s32.totalorder %s617, 0
      %p619 = pneg %p618
      // Predicated region
      $region285: #{lstm_pos_penn_forward.1} parent=272 // pred_check
        _
      $region286: #{lstm_pos_penn_forward.1} parent=272 // pred_check_branch
        %621 = sbr.rel (%p618) target = $region288
      $region287: #{lstm_pos_penn_forward.1} parent=272 // pred_region
        %s622 = sand.u32 1, 7
        %s623 = ssub.s32 1, %s622
        %s624 = scalar_lea.vmem %s595, %s623
        %s625 = ssub.s32 1, %s622
        %s626 = scalar_lea.vmem %s596, %s625 [#allocation4]
        %s627 = sshllo.u32 0, %s622
        loop: start=0, step=1, limit=1
        $region289: #{lstm_pos_penn_forward.1} parent=287 // loop_pre_header
          _
        $region290: #{lstm_pos_penn_forward.1} parent=287 // loop_header
          %s629 = sphi 0, %s633
          %p630 = scmp.ge.s32.totalorder %s629, 1
          %s634 = sphi %s624, %s624
          %s635 = sphi %s626, %s626
        $region291: #{lstm_pos_penn_forward.1} parent=287 // loop_header_branch
          %632 = sbr.rel (%p630) target = $region295
        $region292: #{lstm_pos_penn_forward.1} parent=287 // loop_body
          %v636 = vld [vmem:[%s634] sm:%s627]
          %637 = vst [vmem:[%s635] sm:%s627] %v636
        $region293: #{lstm_pos_penn_forward.1} parent=287 // loop_footer
          %s633 = sadd.s32 1, %s629
        $region294: #{lstm_pos_penn_forward.1} parent=287 // loop_footer_branch
          %628 = sbr.rel target = $region290
        $region295: #{lstm_pos_penn_forward.1} parent=287 // loop_exit
          _
      $region288: #{lstm_pos_penn_forward.1} parent=272 // pred_fallthru
        _
    $region273: #{lstm_pos_penn_forward.1} parent=1 // pred_fallthru
      _
    // Predicated region
    $region274: #{lstm_pos_penn_forward.1} parent=1 // pred_check
      %p603 = pneg %p599
    $region275: #{lstm_pos_penn_forward.1} parent=1 // pred_check_branch
      %605 = sbr.rel (%p603) target = $region277
    $region276: #{lstm_pos_penn_forward.1} parent=1 // pred_region
      %s606 = sshllo.u32 0, 1
      loop: start=0, step=1, limit=1
      $region278: #{lstm_pos_penn_forward.1} parent=276 // loop_pre_header
        _
      $region279: #{lstm_pos_penn_forward.1} parent=276 // loop_header
        %s608 = sphi 0, %s612
        %p609 = scmp.ge.s32.totalorder %s608, 1
        %s613 = sphi %s595, %s595
        %s614 = sphi %s596, %s596
      $region280: #{lstm_pos_penn_forward.1} parent=276 // loop_header_branch
        %611 = sbr.rel (%p609) target = $region284
      $region281: #{lstm_pos_penn_forward.1} parent=276 // loop_body
        %v615 = vld [vmem:[%s613] sm:%s606]
        %616 = vst [vmem:[%s614] sm:%s606] %v615
      $region282: #{lstm_pos_penn_forward.1} parent=276 // loop_footer
        %s612 = sadd.s32 1, %s608
      $region283: #{lstm_pos_penn_forward.1} parent=276 // loop_footer_branch
        %607 = sbr.rel target = $region279
      $region284: #{lstm_pos_penn_forward.1} parent=276 // loop_exit
        _
    $region277: #{lstm_pos_penn_forward.1} parent=1 // pred_fallthru
      _
    // Predicated region
    $region296: #{lstm_pos_penn_forward.1} parent=1 // pred_check
      _
    $region297: #{lstm_pos_penn_forward.1} parent=1 // pred_check_branch
      %640 = sbr.rel (0) target = $region299
    $region298: #{lstm_pos_penn_forward.1} parent=1 // pred_region
      %641 = vsyncadd %s597, 16
    $region299: #{lstm_pos_penn_forward.1} parent=1 // pred_fallthru
      _
    %s642 = sld [smem:[#allocation7 + $0x380]]
    %p643 = scmp.lt.s32.totalorder %s642, 0
    %s644 = ssub.s32 0, %s642
    %s645 = scalar_select %p643, %s644, %s642
    %s646 = sdiv.u32.pop %s645, 36
    %s647 = srem.u32.pop %s645, 36
    %s648 = ssub.s32 0, %s647
    %s649 = scalar_select %p643, %s648, %s647
    %s650 = smul.u32 %s649, 4
    %s651 = smul.addr %s650, 64
    %s652 = scalar_lea.hbm %s3, %s651
    %s653 = scalar_lea.vmem [#allocation2], 112
    %s654 = scalar_lea.sflag [#allocation5], 7
    // Predicated region
    $region300: #{lstm_pos_penn_forward.1} parent=1 // pred_check
      _
    $region301: #{lstm_pos_penn_forward.1} parent=1 // pred_check_branch
      %656 = sbr.rel target = $region303
    $region302: #{lstm_pos_penn_forward.1} parent=1 // pred_region
      %657 = sst [smem:[#allocation11]] [#allocation47]
      %658 = sst [smem:[#allocation12]] [#allocation46]
    $region303: #{lstm_pos_penn_forward.1} parent=1 // pred_fallthru
      _
    %660 = shalt.err (0)
    %s662 = sshll.u32 %s653, 4
    %s663 = int_to_ptr.vmem [resolvable:$true] %s662
    %665 = dma.hbm_to_vmem [thread:$0]  %s652, 256, %s663, %s654
    %s666 = smul.addr %s650, 64
    %s667 = scalar_lea.hbm %s4, %s666
    %s668 = scalar_lea.vmem [#allocation3], 112
    %s669 = scalar_lea.sflag [#allocation5], 15
    // Predicated region
    $region304: #{lstm_pos_penn_forward.1} parent=1 // pred_check
      _
    $region305: #{lstm_pos_penn_forward.1} parent=1 // pred_check_branch
      %671 = sbr.rel target = $region307
    $region306: #{lstm_pos_penn_forward.1} parent=1 // pred_region
      %672 = sst [smem:[#allocation11]] [#allocation49]
      %673 = sst [smem:[#allocation12]] [#allocation48]
    $region307: #{lstm_pos_penn_forward.1} parent=1 // pred_fallthru
      _
    %675 = shalt.err (0)
    %s677 = sshll.u32 %s668, 4
    %s678 = int_to_ptr.vmem [resolvable:$true] %s677
    %680 = dma.hbm_to_vmem [thread:$0]  %s667, 256, %s678, %s669
    %s681 = scalar_lea.vmem %s5, %s649
    %s682 = scalar_lea.vmem [#allocation4], 7
    %s683 = scalar_lea.sflag [#allocation5], 23
    %p685 = scmp.lt.u32.totalorder 1, 8
    %p686 = pneg %p685
    // Predicated region
    $region308: #{lstm_pos_penn_forward.1} parent=1 // pred_check
      _
    $region309: #{lstm_pos_penn_forward.1} parent=1 // pred_check_branch
      %688 = sbr.rel (%p685) target = $region311
    $region310: #{lstm_pos_penn_forward.1} parent=1 // pred_region
      %s703 = sand.u32 1, 7
      %p704 = scmp.eq.s32.totalorder %s703, 0
      %p705 = pneg %p704
      // Predicated region
      $region323: #{lstm_pos_penn_forward.1} parent=310 // pred_check
        _
      $region324: #{lstm_pos_penn_forward.1} parent=310 // pred_check_branch
        %707 = sbr.rel (%p704) target = $region326
      $region325: #{lstm_pos_penn_forward.1} parent=310 // pred_region
        %s708 = sand.u32 1, 7
        %s709 = ssub.s32 1, %s708
        %s710 = scalar_lea.vmem %s681, %s709
        %s711 = ssub.s32 1, %s708
        %s712 = scalar_lea.vmem %s682, %s711 [#allocation4]
        %s713 = sshllo.u32 0, %s708
        loop: start=0, step=1, limit=1
        $region327: #{lstm_pos_penn_forward.1} parent=325 // loop_pre_header
          _
        $region328: #{lstm_pos_penn_forward.1} parent=325 // loop_header
          %s715 = sphi 0, %s719
          %p716 = scmp.ge.s32.totalorder %s715, 1
          %s720 = sphi %s710, %s710
          %s721 = sphi %s712, %s712
        $region329: #{lstm_pos_penn_forward.1} parent=325 // loop_header_branch
          %718 = sbr.rel (%p716) target = $region333
        $region330: #{lstm_pos_penn_forward.1} parent=325 // loop_body
          %v722 = vld [vmem:[%s720] sm:%s713]
          %723 = vst [vmem:[%s721] sm:%s713] %v722
        $region331: #{lstm_pos_penn_forward.1} parent=325 // loop_footer
          %s719 = sadd.s32 1, %s715
        $region332: #{lstm_pos_penn_forward.1} parent=325 // loop_footer_branch
          %714 = sbr.rel target = $region328
        $region333: #{lstm_pos_penn_forward.1} parent=325 // loop_exit
          _
      $region326: #{lstm_pos_penn_forward.1} parent=310 // pred_fallthru
        _
    $region311: #{lstm_pos_penn_forward.1} parent=1 // pred_fallthru
      _
    // Predicated region
    $region312: #{lstm_pos_penn_forward.1} parent=1 // pred_check
      %p689 = pneg %p685
    $region313: #{lstm_pos_penn_forward.1} parent=1 // pred_check_branch
      %691 = sbr.rel (%p689) target = $region315
    $region314: #{lstm_pos_penn_forward.1} parent=1 // pred_region
      %s692 = sshllo.u32 0, 1
      loop: start=0, step=1, limit=1
      $region316: #{lstm_pos_penn_forward.1} parent=314 // loop_pre_header
        _
      $region317: #{lstm_pos_penn_forward.1} parent=314 // loop_header
        %s694 = sphi 0, %s698
        %p695 = scmp.ge.s32.totalorder %s694, 1
        %s699 = sphi %s681, %s681
        %s700 = sphi %s682, %s682
      $region318: #{lstm_pos_penn_forward.1} parent=314 // loop_header_branch
        %697 = sbr.rel (%p695) target = $region322
      $region319: #{lstm_pos_penn_forward.1} parent=314 // loop_body
        %v701 = vld [vmem:[%s699] sm:%s692]
        %702 = vst [vmem:[%s700] sm:%s692] %v701
      $region320: #{lstm_pos_penn_forward.1} parent=314 // loop_footer
        %s698 = sadd.s32 1, %s694
      $region321: #{lstm_pos_penn_forward.1} parent=314 // loop_footer_branch
        %693 = sbr.rel target = $region317
      $region322: #{lstm_pos_penn_forward.1} parent=314 // loop_exit
        _
    $region315: #{lstm_pos_penn_forward.1} parent=1 // pred_fallthru
      _
    // Predicated region
    $region334: #{lstm_pos_penn_forward.1} parent=1 // pred_check
      _
    $region335: #{lstm_pos_penn_forward.1} parent=1 // pred_check_branch
      %726 = sbr.rel (0) target = $region337
    $region336: #{lstm_pos_penn_forward.1} parent=1 // pred_region
      %727 = vsyncadd %s683, 16
    $region337: #{lstm_pos_penn_forward.1} parent=1 // pred_fallthru
      _
    %v728 = vld [vmem:[%s1] sm:$0xff]
    %v729 = vlaneseq
    %v730 = vshrl.u32 %v729, 7
    %v731 = vsub.s32 0, %v730
    %v732 = vrot.slane %v728, %v731
    %734 = vbcast.lane.b32.xlu0 %v732, 256
    %v735 = vpop.permute.xlu0 %734
    %v736 = vlaneseq
    %v737 = vshrl.u32 %v736, 7
    %v738 = vsub.s32 1, %v737
    %v739 = vrot.slane %v728, %v738
    %741 = vbcast.lane.b32.xlu0 %v739, 256
    %v742 = vpop.permute.xlu0 %741
    %v743 = vlaneseq
    %v744 = vshrl.u32 %v743, 7
    %v745 = vsub.s32 2, %v744
    %v746 = vrot.slane %v728, %v745
    %748 = vbcast.lane.b32.xlu0 %v746, 256
    %v749 = vpop.permute.xlu0 %748
    %v750 = vlaneseq
    %v751 = vshrl.u32 %v750, 7
    %v752 = vsub.s32 3, %v751
    %v753 = vrot.slane %v728, %v752
    %755 = vbcast.lane.b32.xlu0 %v753, 256
    %v756 = vpop.permute.xlu0 %755
    %v757 = vlaneseq
    %v758 = vshrl.u32 %v757, 7
    %v759 = vsub.s32 4, %v758
    %v760 = vrot.slane %v728, %v759
    %762 = vbcast.lane.b32.xlu0 %v760, 256
    %v763 = vpop.permute.xlu0 %762
    %v764 = vlaneseq
    %v765 = vshrl.u32 %v764, 7
    %v766 = vsub.s32 5, %v765
    %v767 = vrot.slane %v728, %v766
    %769 = vbcast.lane.b32.xlu0 %v767, 256
    %v770 = vpop.permute.xlu0 %769
    %v771 = vlaneseq
    %v772 = vshrl.u32 %v771, 7
    %v773 = vsub.s32 6, %v772
    %v774 = vrot.slane %v728, %v773
    %776 = vbcast.lane.b32.xlu0 %v774, 256
    %v777 = vpop.permute.xlu0 %776
    %v778 = vlaneseq
    %v779 = vshrl.u32 %v778, 7
    %v780 = vsub.s32 7, %v779
    %v781 = vrot.slane %v728, %v780
    %783 = vbcast.lane.b32.xlu0 %v781, 256
    %v784 = vpop.permute.xlu0 %783
    %v785 = vlaneseq
    %v786 = vand.u32 %v785, 127
    %vm787 = vcmp.eq.s32.totalorder %v735, %v786
    %vm788 = vcmp.eq.s32.totalorder %v742, %v786
    %vm789 = vcmp.eq.s32.totalorder %v749, %v786
    %vm790 = vcmp.eq.s32.totalorder %v756, %v786
    %vm791 = vcmp.eq.s32.totalorder %v763, %v786
    %vm792 = vcmp.eq.s32.totalorder %v770, %v786
    %vm793 = vcmp.eq.s32.totalorder %v777, %v786
    %vm794 = vcmp.eq.s32.totalorder %v784, %v786
    %v795 = vsel %vm787, 1, 0
    %v796 = vsel %vm788, 1, 0
    %v797 = vsel %vm789, 1, 0
    %v798 = vsel %vm790, 1, 0
    %v799 = vsel %vm791, 1, 0
    %v800 = vsel %vm792, 1, 0
    %v801 = vsel %vm793, 1, 0
    %v802 = vsel %vm794, 1, 0
    %v803 = vcvt.s32.f32 %v795
    %v804 = vcvt.s32.f32 %v796
    %v805 = vcvt.s32.f32 %v797
    %v806 = vcvt.s32.f32 %v798
    %v807 = vcvt.s32.f32 %v799
    %v808 = vcvt.s32.f32 %v800
    %v809 = vcvt.s32.f32 %v801
    %v810 = vcvt.s32.f32 %v802
    %v811 = vld [vmem:[%s2] sm:$0xff]
    %v812 = vld [vmem:[%s2 + $0x8] sm:$0xff]
    %v813 = vld [vmem:[%s2 + $0x10] sm:$0xff]
    %v814 = vld [vmem:[%s2 + $0x18] sm:$0xff]
    %v815 = vld [vmem:[%s2 + $0x20] sm:$0xff]
    %v816 = vld [vmem:[%s2 + $0x28] sm:$0xff]
    %v817 = vld [vmem:[%s2 + $0x30] sm:$0x3]
    %vm818 = vcmask 408576
    %v820 = vsel %vm818, %v803, 0
    %v823 = vsel %vm818, %v804, 0
    %v826 = vsel %vm818, %v805, 0
    %v829 = vsel %vm818, %v806, 0
    %v832 = vsel %vm818, %v807, 0
    %v835 = vsel %vm818, %v808, 0
    %v838 = vsel %vm818, %v809, 0
    %v841 = vsel %vm818, %v810, 0
    %vm843 = vcmask 1041408
    %v845 = vsel %vm843, %v817, 0
    %847 = vmatprep.subr.mxu0 0.0
    %848 = vmatpush1.msra.mxu0 %v811
    %849 = vmatprep.subr.mxu0 0.0
    %850 = vmatpush1.msra.mxu0 %v812
    %851 = vmatprep.subr.mxu0 0.0
    %852 = vmatpush1.msra.mxu0 %v813
    %853 = vmatprep.subr.mxu0 0.0
    %854 = vmatpush1.msra.mxu0 %v814
    %855 = vmatprep.subr.mxu0 0.0
    %856 = vmatpush1.msra.mxu0 %v815
    %857 = vmatprep.subr.mxu0 0.0
    %858 = vmatpush1.msra.mxu0 %v816
    %859 = vmatprep.subr.mxu0 0.0
    %860 = vmatpush1.msra.mxu0 %v845
    %861 = vmatprep.subr.mxu0 0.0
    %862 = vmatpush1.msra.mxu0 0.0
    %863 = vmatprep.subr.mxu0 0.0
    %864 = vmatpush1.msra.mxu0 0.0
    %865 = vmatprep.subr.mxu0 0.0
    %866 = vmatpush1.msra.mxu0 0.0
    %867 = vmatprep.subr.mxu0 0.0
    %868 = vmatpush1.msra.mxu0 0.0
    %869 = vmatprep.subr.mxu0 0.0
    %870 = vmatpush1.msra.mxu0 0.0
    %871 = vmatprep.subr.mxu0 0.0
    %872 = vmatpush1.msra.mxu0 0.0
    %873 = vmatprep.subr.mxu0 0.0
    %874 = vmatpush1.msra.mxu0 0.0
    %875 = vmatprep.subr.mxu0 0.0
    %876 = vmatpush1.msra.mxu0 0.0
    %877 = vmatprep.subr.mxu0 0.0
    %878 = vmatpush1.msra.mxu0 0.0
    %879 = vmatprep.subr.mxu0 0.0
    %880 = vmatpush1.msra.mxu0 0.0
    %881 = vmatprep.subr.mxu0 0.0
    %882 = vmatpush1.msra.mxu0 0.0
    %883 = vmatprep.subr.mxu0 0.0
    %884 = vmatpush1.msra.mxu0 0.0
    %885 = vmatprep.subr.mxu0 0.0
    %886 = vmatpush1.msra.mxu0 0.0
    %887 = vmatprep.subr.mxu0 0.0
    %888 = vmatpush1.msra.mxu0 0.0
    %889 = vmatprep.subr.mxu0 0.0
    %890 = vmatpush1.msra.mxu0 0.0
    %891 = vmatprep.subr.mxu0 0.0
    %892 = vmatpush1.msra.mxu0 0.0
    %893 = vmatprep.subr.mxu0 0.0
    %894 = vmatpush1.msra.mxu0 0.0
    %895 = vmatprep.subr.mxu0 0.0
    %896 = vmatpush1.msra.mxu0 0.0
    %897 = vmatprep.subr.mxu0 0.0
    %898 = vmatpush1.msra.mxu0 0.0
    %899 = vmatprep.subr.mxu0 0.0
    %900 = vmatpush1.msra.mxu0 0.0
    %901 = vmatprep.subr.mxu0 0.0
    %902 = vmatpush1.msra.mxu0 0.0
    %903 = vmatprep.subr.mxu0 0.0
    %904 = vmatpush1.msra.mxu0 0.0
    %905 = vmatprep.subr.mxu0 0.0
    %906 = vmatpush1.msra.mxu0 0.0
    %907 = vmatprep.subr.mxu0 0.0
    %908 = vmatpush1.msra.mxu0 0.0
    %909 = vmatprep.subr.mxu0 0.0
    %910 = vmatpush1.msra.mxu0 0.0
    %911 = vmatprep.mubr.f32.mxu0 0.0
    %912 = vmatmul.mubr.f32.gmra.mrb[0].mxu0 %v820
    %v913 = vpop.f32.mrb[0].mxu0
    %v914 = vadd.f32 0.0, %v913
    %v915 = vpop.f32.mrb[0].mxu0
    %916 = vmatprep.mubr.f32.mxu0 0.0
    %917 = vmatmul.mubr.f32.gmra.mrb[0].mxu0 %v823
    %v918 = vpop.f32.mrb[0].mxu0
    %v919 = vadd.f32 0.0, %v918
    %v920 = vpop.f32.mrb[0].mxu0
    %921 = vmatprep.mubr.f32.mxu0 0.0
    %922 = vmatmul.mubr.f32.gmra.mrb[0].mxu0 %v826
    %v923 = vpop.f32.mrb[0].mxu0
    %v924 = vadd.f32 0.0, %v923
    %v925 = vpop.f32.mrb[0].mxu0
    %926 = vmatprep.mubr.f32.mxu0 0.0
    %927 = vmatmul.mubr.f32.gmra.mrb[0].mxu0 %v829
    %v928 = vpop.f32.mrb[0].mxu0
    %v929 = vadd.f32 0.0, %v928
    %v930 = vpop.f32.mrb[0].mxu0
    %931 = vmatprep.mubr.f32.mxu0 0.0
    %932 = vmatmul.mubr.f32.gmra.mrb[0].mxu0 %v832
    %v933 = vpop.f32.mrb[0].mxu0
    %v934 = vadd.f32 0.0, %v933
    %v935 = vpop.f32.mrb[0].mxu0
    %936 = vmatprep.mubr.f32.mxu0 0.0
    %937 = vmatmul.mubr.f32.gmra.mrb[0].mxu0 %v835
    %v938 = vpop.f32.mrb[0].mxu0
    %v939 = vadd.f32 0.0, %v938
    %v940 = vpop.f32.mrb[0].mxu0
    %941 = vmatprep.mubr.f32.mxu0 0.0
    %942 = vmatmul.mubr.f32.gmra.mrb[0].mxu0 %v838
    %v943 = vpop.f32.mrb[0].mxu0
    %v944 = vadd.f32 0.0, %v943
    %v945 = vpop.f32.mrb[0].mxu0
    %946 = vmatprep.mubr.f32.mxu0 0.0
    %947 = vmatmul.mubr.f32.gmra.mrb[0].mxu0 %v841
    %v948 = vpop.f32.mrb[0].mxu0
    %v949 = vadd.f32 0.0, %v948
    %v950 = vpop.f32.mrb[0].mxu0
    %951 = vdwg.mxu0
    %s952 = smul.u32 4, 4
    %s953 = smul.u32 %s952, 1
    %s954 = sshll.u32 %s953, 4
    %955 = dma.done [#allocation5], %s954
    %s956 = smul.u32 1, 1
    %s957 = sshll.u32 %s956, 4
    %958 = dma.done %s81, %s957
    %s959 = sshll.u32 %s953, 4
    %960 = dma.done %s138, %s959
    %s961 = sshll.u32 %s956, 4
    %962 = dma.done %s167, %s961
    %s963 = sshll.u32 %s953, 4
    %964 = dma.done %s224, %s963
    %s965 = sshll.u32 %s956, 4
    %966 = dma.done %s253, %s965
    %s967 = sshll.u32 %s953, 4
    %968 = dma.done %s310, %s967
    %s969 = sshll.u32 %s956, 4
    %970 = dma.done %s339, %s969
    %s971 = sshll.u32 %s953, 4
    %972 = dma.done %s396, %s971
    %s973 = sshll.u32 %s956, 4
    %974 = dma.done %s425, %s973
    %s975 = sshll.u32 %s953, 4
    %976 = dma.done %s482, %s975
    %s977 = sshll.u32 %s956, 4
    %978 = dma.done %s511, %s977
    %s979 = sshll.u32 %s953, 4
    %980 = dma.done %s568, %s979
    %s981 = sshll.u32 %s956, 4
    %982 = dma.done %s597, %s981
    %s983 = sshll.u32 %s953, 4
    %984 = dma.done %s654, %s983
    %s985 = sshll.u32 %s956, 4
    %986 = dma.done %s683, %s985
    %v987 = vpack.c.bf16 %v914, %v914
    %v988 = vpack.c.bf16 %v919, %v919
    %v989 = vpack.c.bf16 %v924, %v924
    %v990 = vpack.c.bf16 %v929, %v929
    %v991 = vpack.c.bf16 %v934, %v934
    %v992 = vpack.c.bf16 %v939, %v939
    %v993 = vpack.c.bf16 %v944, %v944
    %v994 = vpack.c.bf16 %v949, %v949
    %v995 = vld [vmem:[#allocation2] sm:$0xff]
    %v996 = vld [vmem:[#allocation2 + $0x8] sm:$0xff]
    %v997 = vld [vmem:[#allocation2 + $0x10] sm:$0xff]
    %v998 = vld [vmem:[#allocation2 + $0x18] sm:$0xff]
    %v999 = vld [vmem:[#allocation2 + $0x20] sm:$0xff]
    %v1000 = vld [vmem:[#allocation2 + $0x28] sm:$0xff]
    %v1001 = vld [vmem:[#allocation2 + $0x30] sm:$0xff]
    %v1002 = vld [vmem:[#allocation2 + $0x38] sm:$0xff]
    %v1003 = vld [vmem:[#allocation2 + $0x40] sm:$0xff]
    %v1004 = vld [vmem:[#allocation2 + $0x48] sm:$0xff]
    %v1005 = vld [vmem:[#allocation2 + $0x50] sm:$0xff]
    %v1006 = vld [vmem:[#allocation2 + $0x58] sm:$0xff]
    %v1007 = vld [vmem:[#allocation2 + $0x60] sm:$0xff]
    %v1008 = vld [vmem:[#allocation2 + $0x68] sm:$0xff]
    %v1009 = vld [vmem:[#allocation2 + $0x70] sm:$0xff]
    %v1010 = vld [vmem:[#allocation2 + $0x78] sm:$0xff]
    %v1011 = vld [vmem:[#allocation4] sm:$0x1]
    %v1012 = vld [vmem:[#allocation4 + $0x1] sm:$0x1]
    %v1013 = vld [vmem:[#allocation4 + $0x2] sm:$0x1]
    %v1014 = vld [vmem:[#allocation4 + $0x3] sm:$0x1]
    %v1015 = vld [vmem:[#allocation4 + $0x4] sm:$0x1]
    %v1016 = vld [vmem:[#allocation4 + $0x5] sm:$0x1]
    %v1017 = vld [vmem:[#allocation4 + $0x6] sm:$0x1]
    %v1018 = vld [vmem:[#allocation4 + $0x7] sm:$0x1]
    %v1027 = vlaneseq
    %v1028 = vshrl.u32 %v1027, 7
    %v1029 = vsub.s32 0, %v1028
    %v1030 = vrot.slane %v1011, %v1029
    %v1031 = vlaneseq
    %v1032 = vshrl.u32 %v1031, 7
    %v1033 = vsub.s32 0, %v1032
    %v1034 = vrot.slane %v1012, %v1033
    %v1035 = vlaneseq
    %v1036 = vshrl.u32 %v1035, 7
    %v1037 = vsub.s32 0, %v1036
    %v1038 = vrot.slane %v1013, %v1037
    %v1039 = vlaneseq
    %v1040 = vshrl.u32 %v1039, 7
    %v1041 = vsub.s32 0, %v1040
    %v1042 = vrot.slane %v1014, %v1041
    %v1043 = vlaneseq
    %v1044 = vshrl.u32 %v1043, 7
    %v1045 = vsub.s32 0, %v1044
    %v1046 = vrot.slane %v1015, %v1045
    %v1047 = vlaneseq
    %v1048 = vshrl.u32 %v1047, 7
    %v1049 = vsub.s32 0, %v1048
    %v1050 = vrot.slane %v1016, %v1049
    %v1051 = vlaneseq
    %v1052 = vshrl.u32 %v1051, 7
    %v1053 = vsub.s32 0, %v1052
    %v1054 = vrot.slane %v1017, %v1053
    %v1055 = vlaneseq
    %v1056 = vshrl.u32 %v1055, 7
    %v1057 = vsub.s32 0, %v1056
    %v1058 = vrot.slane %v1018, %v1057
    %vm1067 = vcmask 261120
    %v1069 = vsel %vm1067, %v987, 0
    %1071 = vmatprep.subr.bf16.mxu0 0
    %1072 = vmatpush1.bf16.msra.mxu0 %v995
    %1073 = vmatprep.subr.bf16.mxu0 0
    %1074 = vmatpush1.bf16.msra.mxu0 %v996
    %1075 = vmatprep.subr.bf16.mxu0 0
    %1076 = vmatpush1.bf16.msra.mxu0 0
    %1077 = vmatprep.subr.bf16.mxu0 0
    %1078 = vmatpush1.bf16.msra.mxu0 0
    %1079 = vmatprep.subr.bf16.mxu0 0
    %1080 = vmatpush1.bf16.msra.mxu0 0
    %1081 = vmatprep.subr.bf16.mxu0 0
    %1082 = vmatpush1.bf16.msra.mxu0 0
    %1083 = vmatprep.subr.bf16.mxu0 0
    %1084 = vmatpush1.bf16.msra.mxu0 0
    %1085 = vmatprep.subr.bf16.mxu0 0
    %1086 = vmatpush1.bf16.msra.mxu0 0
    %1087 = vmatprep.subr.bf16.mxu0 0
    %1088 = vmatpush1.bf16.msra.mxu0 0
    %1089 = vmatprep.subr.bf16.mxu0 0
    %1090 = vmatpush1.bf16.msra.mxu0 0
    %1091 = vmatprep.subr.bf16.mxu0 0
    %1092 = vmatpush1.bf16.msra.mxu0 0
    %1093 = vmatprep.subr.bf16.mxu0 0
    %1094 = vmatpush1.bf16.msra.mxu0 0
    %1095 = vmatprep.subr.bf16.mxu0 0
    %1096 = vmatpush1.bf16.msra.mxu0 0
    %1097 = vmatprep.subr.bf16.mxu0 0
    %1098 = vmatpush1.bf16.msra.mxu0 0
    %1099 = vmatprep.subr.bf16.mxu0 0
    %1100 = vmatpush1.bf16.msra.mxu0 0
    %1101 = vmatprep.subr.bf16.mxu0 0
    %1102 = vmatpush1.bf16.msra.mxu0 0
    %1103 = vmatprep.mubr.bf16.mxu0 0
    %1104 = vmatmul.mubr.bf16.gmra.mrb[0].mxu0 %v1069
    %v1105 = vpop.f32.mrb[0].mxu0
    %v1106 = vadd.f32 %v1030, %v1105
    %v1107 = vpop.f32.mrb[0].mxu0
    %v1108 = vpop.f32.mrb[0].mxu0
    %v1109 = vpop.f32.mrb[0].mxu0
    %1110 = vdwg.mxu0
    %v1112 = vsel %vm1067, %v988, 0
    %1114 = vmatprep.subr.bf16.mxu0 0
    %1115 = vmatpush1.bf16.msra.mxu0 %v997
    %1116 = vmatprep.subr.bf16.mxu0 0
    %1117 = vmatpush1.bf16.msra.mxu0 %v998
    %1118 = vmatprep.subr.bf16.mxu0 0
    %1119 = vmatpush1.bf16.msra.mxu0 0
    %1120 = vmatprep.subr.bf16.mxu0 0
    %1121 = vmatpush1.bf16.msra.mxu0 0
    %1122 = vmatprep.subr.bf16.mxu0 0
    %1123 = vmatpush1.bf16.msra.mxu0 0
    %1124 = vmatprep.subr.bf16.mxu0 0
    %1125 = vmatpush1.bf16.msra.mxu0 0
    %1126 = vmatprep.subr.bf16.mxu0 0
    %1127 = vmatpush1.bf16.msra.mxu0 0
    %1128 = vmatprep.subr.bf16.mxu0 0
    %1129 = vmatpush1.bf16.msra.mxu0 0
    %1130 = vmatprep.subr.bf16.mxu0 0
    %1131 = vmatpush1.bf16.msra.mxu0 0
    %1132 = vmatprep.subr.bf16.mxu0 0
    %1133 = vmatpush1.bf16.msra.mxu0 0
    %1134 = vmatprep.subr.bf16.mxu0 0
    %1135 = vmatpush1.bf16.msra.mxu0 0
    %1136 = vmatprep.subr.bf16.mxu0 0
    %1137 = vmatpush1.bf16.msra.mxu0 0
    %1138 = vmatprep.subr.bf16.mxu0 0
    %1139 = vmatpush1.bf16.msra.mxu0 0
    %1140 = vmatprep.subr.bf16.mxu0 0
    %1141 = vmatpush1.bf16.msra.mxu0 0
    %1142 = vmatprep.subr.bf16.mxu0 0
    %1143 = vmatpush1.bf16.msra.mxu0 0
    %1144 = vmatprep.subr.bf16.mxu0 0
    %1145 = vmatpush1.bf16.msra.mxu0 0
    %1146 = vmatprep.mubr.bf16.mxu0 0
    %1147 = vmatmul.mubr.bf16.gmra.mrb[0].mxu0 %v1112
    %v1148 = vpop.f32.mrb[0].mxu0
    %v1149 = vadd.f32 %v1034, %v1148
    %v1150 = vpop.f32.mrb[0].mxu0
    %v1151 = vpop.f32.mrb[0].mxu0
    %v1152 = vpop.f32.mrb[0].mxu0
    %1153 = vdwg.mxu0
    %v1155 = vsel %vm1067, %v989, 0
    %1157 = vmatprep.subr.bf16.mxu0 0
    %1158 = vmatpush1.bf16.msra.mxu0 %v999
    %1159 = vmatprep.subr.bf16.mxu0 0
    %1160 = vmatpush1.bf16.msra.mxu0 %v1000
    %1161 = vmatprep.subr.bf16.mxu0 0
    %1162 = vmatpush1.bf16.msra.mxu0 0
    %1163 = vmatprep.subr.bf16.mxu0 0
    %1164 = vmatpush1.bf16.msra.mxu0 0
    %1165 = vmatprep.subr.bf16.mxu0 0
    %1166 = vmatpush1.bf16.msra.mxu0 0
    %1167 = vmatprep.subr.bf16.mxu0 0
    %1168 = vmatpush1.bf16.msra.mxu0 0
    %1169 = vmatprep.subr.bf16.mxu0 0
    %1170 = vmatpush1.bf16.msra.mxu0 0
    %1171 = vmatprep.subr.bf16.mxu0 0
    %1172 = vmatpush1.bf16.msra.mxu0 0
    %1173 = vmatprep.subr.bf16.mxu0 0
    %1174 = vmatpush1.bf16.msra.mxu0 0
    %1175 = vmatprep.subr.bf16.mxu0 0
    %1176 = vmatpush1.bf16.msra.mxu0 0
    %1177 = vmatprep.subr.bf16.mxu0 0
    %1178 = vmatpush1.bf16.msra.mxu0 0
    %1179 = vmatprep.subr.bf16.mxu0 0
    %1180 = vmatpush1.bf16.msra.mxu0 0
    %1181 = vmatprep.subr.bf16.mxu0 0
    %1182 = vmatpush1.bf16.msra.mxu0 0
    %1183 = vmatprep.subr.bf16.mxu0 0
    %1184 = vmatpush1.bf16.msra.mxu0 0
    %1185 = vmatprep.subr.bf16.mxu0 0
    %1186 = vmatpush1.bf16.msra.mxu0 0
    %1187 = vmatprep.subr.bf16.mxu0 0
    %1188 = vmatpush1.bf16.msra.mxu0 0
    %1189 = vmatprep.mubr.bf16.mxu0 0
    %1190 = vmatmul.mubr.bf16.gmra.mrb[0].mxu0 %v1155
    %v1191 = vpop.f32.mrb[0].mxu0
    %v1192 = vadd.f32 %v1038, %v1191
    %v1193 = vpop.f32.mrb[0].mxu0
    %v1194 = vpop.f32.mrb[0].mxu0
    %v1195 = vpop.f32.mrb[0].mxu0
    %1196 = vdwg.mxu0
    %v1198 = vsel %vm1067, %v990, 0
    %1200 = vmatprep.subr.bf16.mxu0 0
    %1201 = vmatpush1.bf16.msra.mxu0 %v1001
    %1202 = vmatprep.subr.bf16.mxu0 0
    %1203 = vmatpush1.bf16.msra.mxu0 %v1002
    %1204 = vmatprep.subr.bf16.mxu0 0
    %1205 = vmatpush1.bf16.msra.mxu0 0
    %1206 = vmatprep.subr.bf16.mxu0 0
    %1207 = vmatpush1.bf16.msra.mxu0 0
    %1208 = vmatprep.subr.bf16.mxu0 0
    %1209 = vmatpush1.bf16.msra.mxu0 0
    %1210 = vmatprep.subr.bf16.mxu0 0
    %1211 = vmatpush1.bf16.msra.mxu0 0
    %1212 = vmatprep.subr.bf16.mxu0 0
    %1213 = vmatpush1.bf16.msra.mxu0 0
    %1214 = vmatprep.subr.bf16.mxu0 0
    %1215 = vmatpush1.bf16.msra.mxu0 0
    %1216 = vmatprep.subr.bf16.mxu0 0
    %1217 = vmatpush1.bf16.msra.mxu0 0
    %1218 = vmatprep.subr.bf16.mxu0 0
    %1219 = vmatpush1.bf16.msra.mxu0 0
    %1220 = vmatprep.subr.bf16.mxu0 0
    %1221 = vmatpush1.bf16.msra.mxu0 0
    %1222 = vmatprep.subr.bf16.mxu0 0
    %1223 = vmatpush1.bf16.msra.mxu0 0
    %1224 = vmatprep.subr.bf16.mxu0 0
    %1225 = vmatpush1.bf16.msra.mxu0 0
    %1226 = vmatprep.subr.bf16.mxu0 0
    %1227 = vmatpush1.bf16.msra.mxu0 0
    %1228 = vmatprep.subr.bf16.mxu0 0
    %1229 = vmatpush1.bf16.msra.mxu0 0
    %1230 = vmatprep.subr.bf16.mxu0 0
    %1231 = vmatpush1.bf16.msra.mxu0 0
    %1232 = vmatprep.mubr.bf16.mxu0 0
    %1233 = vmatmul.mubr.bf16.gmra.mrb[0].mxu0 %v1198
    %v1234 = vpop.f32.mrb[0].mxu0
    %v1235 = vadd.f32 %v1042, %v1234
    %v1236 = vpop.f32.mrb[0].mxu0
    %v1237 = vpop.f32.mrb[0].mxu0
    %v1238 = vpop.f32.mrb[0].mxu0
    %1239 = vdwg.mxu0
    %v1241 = vsel %vm1067, %v991, 0
    %1243 = vmatprep.subr.bf16.mxu0 0
    %1244 = vmatpush1.bf16.msra.mxu0 %v1003
    %1245 = vmatprep.subr.bf16.mxu0 0
    %1246 = vmatpush1.bf16.msra.mxu0 %v1004
    %1247 = vmatprep.subr.bf16.mxu0 0
    %1248 = vmatpush1.bf16.msra.mxu0 0
    %1249 = vmatprep.subr.bf16.mxu0 0
    %1250 = vmatpush1.bf16.msra.mxu0 0
    %1251 = vmatprep.subr.bf16.mxu0 0
    %1252 = vmatpush1.bf16.msra.mxu0 0
    %1253 = vmatprep.subr.bf16.mxu0 0
    %1254 = vmatpush1.bf16.msra.mxu0 0
    %1255 = vmatprep.subr.bf16.mxu0 0
    %1256 = vmatpush1.bf16.msra.mxu0 0
    %1257 = vmatprep.subr.bf16.mxu0 0
    %1258 = vmatpush1.bf16.msra.mxu0 0
    %1259 = vmatprep.subr.bf16.mxu0 0
    %1260 = vmatpush1.bf16.msra.mxu0 0
    %1261 = vmatprep.subr.bf16.mxu0 0
    %1262 = vmatpush1.bf16.msra.mxu0 0
    %1263 = vmatprep.subr.bf16.mxu0 0
    %1264 = vmatpush1.bf16.msra.mxu0 0
    %1265 = vmatprep.subr.bf16.mxu0 0
    %1266 = vmatpush1.bf16.msra.mxu0 0
    %1267 = vmatprep.subr.bf16.mxu0 0
    %1268 = vmatpush1.bf16.msra.mxu0 0
    %1269 = vmatprep.subr.bf16.mxu0 0
    %1270 = vmatpush1.bf16.msra.mxu0 0
    %1271 = vmatprep.subr.bf16.mxu0 0
    %1272 = vmatpush1.bf16.msra.mxu0 0
    %1273 = vmatprep.subr.bf16.mxu0 0
    %1274 = vmatpush1.bf16.msra.mxu0 0
    %1275 = vmatprep.mubr.bf16.mxu0 0
    %1276 = vmatmul.mubr.bf16.gmra.mrb[0].mxu0 %v1241
    %v1277 = vpop.f32.mrb[0].mxu0
    %v1278 = vadd.f32 %v1046, %v1277
    %v1279 = vpop.f32.mrb[0].mxu0
    %v1280 = vpop.f32.mrb[0].mxu0
    %v1281 = vpop.f32.mrb[0].mxu0
    %1282 = vdwg.mxu0
    %v1284 = vsel %vm1067, %v992, 0
    %1286 = vmatprep.subr.bf16.mxu0 0
    %1287 = vmatpush1.bf16.msra.mxu0 %v1005
    %1288 = vmatprep.subr.bf16.mxu0 0
    %1289 = vmatpush1.bf16.msra.mxu0 %v1006
    %1290 = vmatprep.subr.bf16.mxu0 0
    %1291 = vmatpush1.bf16.msra.mxu0 0
    %1292 = vmatprep.subr.bf16.mxu0 0
    %1293 = vmatpush1.bf16.msra.mxu0 0
    %1294 = vmatprep.subr.bf16.mxu0 0
    %1295 = vmatpush1.bf16.msra.mxu0 0
    %1296 = vmatprep.subr.bf16.mxu0 0
    %1297 = vmatpush1.bf16.msra.mxu0 0
    %1298 = vmatprep.subr.bf16.mxu0 0
    %1299 = vmatpush1.bf16.msra.mxu0 0
    %1300 = vmatprep.subr.bf16.mxu0 0
    %1301 = vmatpush1.bf16.msra.mxu0 0
    %1302 = vmatprep.subr.bf16.mxu0 0
    %1303 = vmatpush1.bf16.msra.mxu0 0
    %1304 = vmatprep.subr.bf16.mxu0 0
    %1305 = vmatpush1.bf16.msra.mxu0 0
    %1306 = vmatprep.subr.bf16.mxu0 0
    %1307 = vmatpush1.bf16.msra.mxu0 0
    %1308 = vmatprep.subr.bf16.mxu0 0
    %1309 = vmatpush1.bf16.msra.mxu0 0
    %1310 = vmatprep.subr.bf16.mxu0 0
    %1311 = vmatpush1.bf16.msra.mxu0 0
    %1312 = vmatprep.subr.bf16.mxu0 0
    %1313 = vmatpush1.bf16.msra.mxu0 0
    %1314 = vmatprep.subr.bf16.mxu0 0
    %1315 = vmatpush1.bf16.msra.mxu0 0
    %1316 = vmatprep.subr.bf16.mxu0 0
    %1317 = vmatpush1.bf16.msra.mxu0 0
    %1318 = vmatprep.mubr.bf16.mxu0 0
    %1319 = vmatmul.mubr.bf16.gmra.mrb[0].mxu0 %v1284
    %v1320 = vpop.f32.mrb[0].mxu0
    %v1321 = vadd.f32 %v1050, %v1320
    %v1322 = vpop.f32.mrb[0].mxu0
    %v1323 = vpop.f32.mrb[0].mxu0
    %v1324 = vpop.f32.mrb[0].mxu0
    %1325 = vdwg.mxu0
    %v1327 = vsel %vm1067, %v993, 0
    %1329 = vmatprep.subr.bf16.mxu0 0
    %1330 = vmatpush1.bf16.msra.mxu0 %v1007
    %1331 = vmatprep.subr.bf16.mxu0 0
    %1332 = vmatpush1.bf16.msra.mxu0 %v1008
    %1333 = vmatprep.subr.bf16.mxu0 0
    %1334 = vmatpush1.bf16.msra.mxu0 0
    %1335 = vmatprep.subr.bf16.mxu0 0
    %1336 = vmatpush1.bf16.msra.mxu0 0
    %1337 = vmatprep.subr.bf16.mxu0 0
    %1338 = vmatpush1.bf16.msra.mxu0 0
    %1339 = vmatprep.subr.bf16.mxu0 0
    %1340 = vmatpush1.bf16.msra.mxu0 0
    %1341 = vmatprep.subr.bf16.mxu0 0
    %1342 = vmatpush1.bf16.msra.mxu0 0
    %1343 = vmatprep.subr.bf16.mxu0 0
    %1344 = vmatpush1.bf16.msra.mxu0 0
    %1345 = vmatprep.subr.bf16.mxu0 0
    %1346 = vmatpush1.bf16.msra.mxu0 0
    %1347 = vmatprep.subr.bf16.mxu0 0
    %1348 = vmatpush1.bf16.msra.mxu0 0
    %1349 = vmatprep.subr.bf16.mxu0 0
    %1350 = vmatpush1.bf16.msra.mxu0 0
    %1351 = vmatprep.subr.bf16.mxu0 0
    %1352 = vmatpush1.bf16.msra.mxu0 0
    %1353 = vmatprep.subr.bf16.mxu0 0
    %1354 = vmatpush1.bf16.msra.mxu0 0
    %1355 = vmatprep.subr.bf16.mxu0 0
    %1356 = vmatpush1.bf16.msra.mxu0 0
    %1357 = vmatprep.subr.bf16.mxu0 0
    %1358 = vmatpush1.bf16.msra.mxu0 0
    %1359 = vmatprep.subr.bf16.mxu0 0
    %1360 = vmatpush1.bf16.msra.mxu0 0
    %1361 = vmatprep.mubr.bf16.mxu0 0
    %1362 = vmatmul.mubr.bf16.gmra.mrb[0].mxu0 %v1327
    %v1363 = vpop.f32.mrb[0].mxu0
    %v1364 = vadd.f32 %v1054, %v1363
    %v1365 = vpop.f32.mrb[0].mxu0
    %v1366 = vpop.f32.mrb[0].mxu0
    %v1367 = vpop.f32.mrb[0].mxu0
    %1368 = vdwg.mxu0
    %v1370 = vsel %vm1067, %v994, 0
    %1372 = vmatprep.subr.bf16.mxu0 0
    %1373 = vmatpush1.bf16.msra.mxu0 %v1009
    %1374 = vmatprep.subr.bf16.mxu0 0
    %1375 = vmatpush1.bf16.msra.mxu0 %v1010
    %1376 = vmatprep.subr.bf16.mxu0 0
    %1377 = vmatpush1.bf16.msra.mxu0 0
    %1378 = vmatprep.subr.bf16.mxu0 0
    %1379 = vmatpush1.bf16.msra.mxu0 0
    %1380 = vmatprep.subr.bf16.mxu0 0
    %1381 = vmatpush1.bf16.msra.mxu0 0
    %1382 = vmatprep.subr.bf16.mxu0 0
    %1383 = vmatpush1.bf16.msra.mxu0 0
    %1384 = vmatprep.subr.bf16.mxu0 0
    %1385 = vmatpush1.bf16.msra.mxu0 0
    %1386 = vmatprep.subr.bf16.mxu0 0
    %1387 = vmatpush1.bf16.msra.mxu0 0
    %1388 = vmatprep.subr.bf16.mxu0 0
    %1389 = vmatpush1.bf16.msra.mxu0 0
    %1390 = vmatprep.subr.bf16.mxu0 0
    %1391 = vmatpush1.bf16.msra.mxu0 0
    %1392 = vmatprep.subr.bf16.mxu0 0
    %1393 = vmatpush1.bf16.msra.mxu0 0
    %1394 = vmatprep.subr.bf16.mxu0 0
    %1395 = vmatpush1.bf16.msra.mxu0 0
    %1396 = vmatprep.subr.bf16.mxu0 0
    %1397 = vmatpush1.bf16.msra.mxu0 0
    %1398 = vmatprep.subr.bf16.mxu0 0
    %1399 = vmatpush1.bf16.msra.mxu0 0
    %1400 = vmatprep.subr.bf16.mxu0 0
    %1401 = vmatpush1.bf16.msra.mxu0 0
    %1402 = vmatprep.subr.bf16.mxu0 0
    %1403 = vmatpush1.bf16.msra.mxu0 0
    %1404 = vmatprep.mubr.bf16.mxu0 0
    %1405 = vmatmul.mubr.bf16.gmra.mrb[0].mxu0 %v1370
    %v1406 = vpop.f32.mrb[0].mxu0
    %v1407 = vadd.f32 %v1058, %v1406
    %v1408 = vpop.f32.mrb[0].mxu0
    %v1409 = vpop.f32.mrb[0].mxu0
    %v1410 = vpop.f32.mrb[0].mxu0
    %1411 = vdwg.mxu0
    %s1412 = sshll.u32 %s953, 4
    %1413 = dma.done %s68, %s1412
    %s1414 = sshll.u32 %s953, 4
    %1415 = dma.done %s153, %s1414
    %s1416 = sshll.u32 %s953, 4
    %1417 = dma.done %s239, %s1416
    %s1418 = sshll.u32 %s953, 4
    %1419 = dma.done %s325, %s1418
    %s1420 = sshll.u32 %s953, 4
    %1421 = dma.done %s411, %s1420
    %s1422 = sshll.u32 %s953, 4
    %1423 = dma.done %s497, %s1422
    %s1424 = sshll.u32 %s953, 4
    %1425 = dma.done %s583, %s1424
    %s1426 = sshll.u32 %s953, 4
    %1427 = dma.done %s669, %s1426
    %v1428 = vld [vmem:[#allocation3] sm:$0xff]
    %v1429 = vld [vmem:[#allocation3 + $0x8] sm:$0xff]
    %v1431 = vsel %vm1067, 0, 0
    %1433 = vmatprep.subr.bf16.mxu0 0
    %1434 = vmatpush1.bf16.msra.mxu0 %v1428
    %1435 = vmatprep.subr.bf16.mxu0 0
    %1436 = vmatpush1.bf16.msra.mxu0 %v1429
    %1437 = vmatprep.subr.bf16.mxu0 0
    %1438 = vmatpush1.bf16.msra.mxu0 0
    %1439 = vmatprep.subr.bf16.mxu0 0
    %1440 = vmatpush1.bf16.msra.mxu0 0
    %1441 = vmatprep.subr.bf16.mxu0 0
    %1442 = vmatpush1.bf16.msra.mxu0 0
    %1443 = vmatprep.subr.bf16.mxu0 0
    %1444 = vmatpush1.bf16.msra.mxu0 0
    %1445 = vmatprep.subr.bf16.mxu0 0
    %1446 = vmatpush1.bf16.msra.mxu0 0
    %1447 = vmatprep.subr.bf16.mxu0 0
    %1448 = vmatpush1.bf16.msra.mxu0 0
    %1449 = vmatprep.subr.bf16.mxu0 0
    %1450 = vmatpush1.bf16.msra.mxu0 0
    %1451 = vmatprep.subr.bf16.mxu0 0
    %1452 = vmatpush1.bf16.msra.mxu0 0
    %1453 = vmatprep.subr.bf16.mxu0 0
    %1454 = vmatpush1.bf16.msra.mxu0 0
    %1455 = vmatprep.subr.bf16.mxu0 0
    %1456 = vmatpush1.bf16.msra.mxu0 0
    %1457 = vmatprep.subr.bf16.mxu0 0
    %1458 = vmatpush1.bf16.msra.mxu0 0
    %1459 = vmatprep.subr.bf16.mxu0 0
    %1460 = vmatpush1.bf16.msra.mxu0 0
    %1461 = vmatprep.subr.bf16.mxu0 0
    %1462 = vmatpush1.bf16.msra.mxu0 0
    %1463 = vmatprep.subr.bf16.mxu0 0
    %1464 = vmatpush1.bf16.msra.mxu0 0
    %1465 = vmatprep.mubr.bf16.mxu0 0
    %1466 = vmatmul.mubr.bf16.gmra.mrb[0].mxu0 %v1431
    %v1467 = vpop.f32.mrb[0].mxu0
    %v1468 = vadd.f32 %v1106, %v1467
    %v1469 = vpop.f32.mrb[0].mxu0
    %v1470 = vpop.f32.mrb[0].mxu0
    %v1471 = vpop.f32.mrb[0].mxu0
    %1472 = vdwg.mxu0
    %v1473 = vxor.u32 %v1468, 2147483648
    %v1474 = vmul.f32 %v1473, 1.442695
    %v1475 = vpow.pop %v1474
    %v1476 = vadd.f32 %v1475, 1.0
    %v1477 = vrcp.pop %v1476
    %v1478 = vmul.f32 1.0, %v1477
    %v1479 = vtanh.pop %v1468
    %v1480 = vmul.f32 %v1478, 0.0
    %1482 = vrot.lane.b32.xlu0 %v1479, 64
    %v1483 = vpop.permute.xlu0 %1482
    %v1485 = vmul.f32 %v1478, %v1483
    %1487 = vrot.lane.b32.xlu0 %v1485, 32
    %v1488 = vpop.permute.xlu0 %1487
    %v1490 = vadd.f32 %v1480, %v1488
    %v1491 = vtanh.pop %v1490
    %1493 = vrot.lane.b32.xlu0 %v1491, 64
    %v1494 = vpop.permute.xlu0 %1493
    %v1496 = vmul.f32 %v1478, %v1494
    %v1497 = vpack.c.bf16 %v1496, %v1496
    %v1498 = vld [vmem:[%s152] sm:$0xff]
    %v1499 = vld [vmem:[%s152 + $0x8] sm:$0xff]
    %1501 = vrot.lane.b32.xlu0 %v1497, 32
    %v1502 = vpop.permute.xlu0 %1501
    %v1504 = vsel %vm1067, %v1502, 0
    %1506 = vmatprep.subr.bf16.mxu0 0
    %1507 = vmatpush1.bf16.msra.mxu0 %v1498
    %1508 = vmatprep.subr.bf16.mxu0 0
    %1509 = vmatpush1.bf16.msra.mxu0 %v1499
    %1510 = vmatprep.subr.bf16.mxu0 0
    %1511 = vmatpush1.bf16.msra.mxu0 0
    %1512 = vmatprep.subr.bf16.mxu0 0
    %1513 = vmatpush1.bf16.msra.mxu0 0
    %1514 = vmatprep.subr.bf16.mxu0 0
    %1515 = vmatpush1.bf16.msra.mxu0 0
    %1516 = vmatprep.subr.bf16.mxu0 0
    %1517 = vmatpush1.bf16.msra.mxu0 0
    %1518 = vmatprep.subr.bf16.mxu0 0
    %1519 = vmatpush1.bf16.msra.mxu0 0
    %1520 = vmatprep.subr.bf16.mxu0 0
    %1521 = vmatpush1.bf16.msra.mxu0 0
    %1522 = vmatprep.subr.bf16.mxu0 0
    %1523 = vmatpush1.bf16.msra.mxu0 0
    %1524 = vmatprep.subr.bf16.mxu0 0
    %1525 = vmatpush1.bf16.msra.mxu0 0
    %1526 = vmatprep.subr.bf16.mxu0 0
    %1527 = vmatpush1.bf16.msra.mxu0 0
    %1528 = vmatprep.subr.bf16.mxu0 0
    %1529 = vmatpush1.bf16.msra.mxu0 0
    %1530 = vmatprep.subr.bf16.mxu0 0
    %1531 = vmatpush1.bf16.msra.mxu0 0
    %1532 = vmatprep.subr.bf16.mxu0 0
    %1533 = vmatpush1.bf16.msra.mxu0 0
    %1534 = vmatprep.subr.bf16.mxu0 0
    %1535 = vmatpush1.bf16.msra.mxu0 0
    %1536 = vmatprep.subr.bf16.mxu0 0
    %1537 = vmatpush1.bf16.msra.mxu0 0
    %1538 = vmatprep.mubr.bf16.mxu0 0
    %1539 = vmatmul.mubr.bf16.gmra.mrb[0].mxu0 %v1504
    %v1540 = vpop.f32.mrb[0].mxu0
    %v1541 = vadd.f32 %v1149, %v1540
    %v1542 = vpop.f32.mrb[0].mxu0
    %v1543 = vpop.f32.mrb[0].mxu0
    %v1544 = vpop.f32.mrb[0].mxu0
    %1545 = vdwg.mxu0
    %v1546 = vxor.u32 %v1541, 2147483648
    %v1547 = vmul.f32 %v1546, 1.442695
    %v1548 = vpow.pop %v1547
    %v1549 = vadd.f32 %v1548, 1.0
    %v1550 = vrcp.pop %v1549
    %v1551 = vmul.f32 1.0, %v1550
    %v1552 = vtanh.pop %v1541
    %v1553 = vmul.f32 %v1551, %v1490
    %1555 = vrot.lane.b32.xlu0 %v1552, 64
    %v1556 = vpop.permute.xlu0 %1555
    %v1558 = vmul.f32 %v1551, %v1556
    %1560 = vrot.lane.b32.xlu0 %v1558, 32
    %v1561 = vpop.permute.xlu0 %1560
    %v1563 = vadd.f32 %v1553, %v1561
    %v1564 = vtanh.pop %v1563
    %1566 = vrot.lane.b32.xlu0 %v1564, 64
    %v1567 = vpop.permute.xlu0 %1566
    %v1569 = vmul.f32 %v1551, %v1567
    %v1570 = vpack.c.bf16 %v1569, %v1569
    %v1571 = vld [vmem:[%s238] sm:$0xff]
    %v1572 = vld [vmem:[%s238 + $0x8] sm:$0xff]
    %1574 = vrot.lane.b32.xlu0 %v1570, 32
    %v1575 = vpop.permute.xlu0 %1574
    %v1577 = vsel %vm1067, %v1575, 0
    %1579 = vmatprep.subr.bf16.mxu0 0
    %1580 = vmatpush1.bf16.msra.mxu0 %v1571
    %1581 = vmatprep.subr.bf16.mxu0 0
    %1582 = vmatpush1.bf16.msra.mxu0 %v1572
    %1583 = vmatprep.subr.bf16.mxu0 0
    %1584 = vmatpush1.bf16.msra.mxu0 0
    %1585 = vmatprep.subr.bf16.mxu0 0
    %1586 = vmatpush1.bf16.msra.mxu0 0
    %1587 = vmatprep.subr.bf16.mxu0 0
    %1588 = vmatpush1.bf16.msra.mxu0 0
    %1589 = vmatprep.subr.bf16.mxu0 0
    %1590 = vmatpush1.bf16.msra.mxu0 0
    %1591 = vmatprep.subr.bf16.mxu0 0
    %1592 = vmatpush1.bf16.msra.mxu0 0
    %1593 = vmatprep.subr.bf16.mxu0 0
    %1594 = vmatpush1.bf16.msra.mxu0 0
    %1595 = vmatprep.subr.bf16.mxu0 0
    %1596 = vmatpush1.bf16.msra.mxu0 0
    %1597 = vmatprep.subr.bf16.mxu0 0
    %1598 = vmatpush1.bf16.msra.mxu0 0
    %1599 = vmatprep.subr.bf16.mxu0 0
    %1600 = vmatpush1.bf16.msra.mxu0 0
    %1601 = vmatprep.subr.bf16.mxu0 0
    %1602 = vmatpush1.bf16.msra.mxu0 0
    %1603 = vmatprep.subr.bf16.mxu0 0
    %1604 = vmatpush1.bf16.msra.mxu0 0
    %1605 = vmatprep.subr.bf16.mxu0 0
    %1606 = vmatpush1.bf16.msra.mxu0 0
    %1607 = vmatprep.subr.bf16.mxu0 0
    %1608 = vmatpush1.bf16.msra.mxu0 0
    %1609 = vmatprep.subr.bf16.mxu0 0
    %1610 = vmatpush1.bf16.msra.mxu0 0
    %1611 = vmatprep.mubr.bf16.mxu0 0
    %1612 = vmatmul.mubr.bf16.gmra.mrb[0].mxu0 %v1577
    %v1613 = vpop.f32.mrb[0].mxu0
    %v1614 = vadd.f32 %v1192, %v1613
    %v1615 = vpop.f32.mrb[0].mxu0
    %v1616 = vpop.f32.mrb[0].mxu0
    %v1617 = vpop.f32.mrb[0].mxu0
    %1618 = vdwg.mxu0
    %v1619 = vxor.u32 %v1614, 2147483648
    %v1620 = vmul.f32 %v1619, 1.442695
    %v1621 = vpow.pop %v1620
    %v1622 = vadd.f32 %v1621, 1.0
    %v1623 = vrcp.pop %v1622
    %v1624 = vmul.f32 1.0, %v1623
    %v1625 = vtanh.pop %v1614
    %v1626 = vmul.f32 %v1624, %v1563
    %1628 = vrot.lane.b32.xlu0 %v1625, 64
    %v1629 = vpop.permute.xlu0 %1628
    %v1631 = vmul.f32 %v1624, %v1629
    %1633 = vrot.lane.b32.xlu0 %v1631, 32
    %v1634 = vpop.permute.xlu0 %1633
    %v1636 = vadd.f32 %v1626, %v1634
    %v1637 = vtanh.pop %v1636
    %1639 = vrot.lane.b32.xlu0 %v1637, 64
    %v1640 = vpop.permute.xlu0 %1639
    %v1642 = vmul.f32 %v1624, %v1640
    %v1643 = vpack.c.bf16 %v1642, %v1642
    %v1644 = vld [vmem:[%s324] sm:$0xff]
    %v1645 = vld [vmem:[%s324 + $0x8] sm:$0xff]
    %1647 = vrot.lane.b32.xlu0 %v1643, 32
    %v1648 = vpop.permute.xlu0 %1647
    %v1650 = vsel %vm1067, %v1648, 0
    %1652 = vmatprep.subr.bf16.mxu0 0
    %1653 = vmatpush1.bf16.msra.mxu0 %v1644
    %1654 = vmatprep.subr.bf16.mxu0 0
    %1655 = vmatpush1.bf16.msra.mxu0 %v1645
    %1656 = vmatprep.subr.bf16.mxu0 0
    %1657 = vmatpush1.bf16.msra.mxu0 0
    %1658 = vmatprep.subr.bf16.mxu0 0
    %1659 = vmatpush1.bf16.msra.mxu0 0
    %1660 = vmatprep.subr.bf16.mxu0 0
    %1661 = vmatpush1.bf16.msra.mxu0 0
    %1662 = vmatprep.subr.bf16.mxu0 0
    %1663 = vmatpush1.bf16.msra.mxu0 0
    %1664 = vmatprep.subr.bf16.mxu0 0
    %1665 = vmatpush1.bf16.msra.mxu0 0
    %1666 = vmatprep.subr.bf16.mxu0 0
    %1667 = vmatpush1.bf16.msra.mxu0 0
    %1668 = vmatprep.subr.bf16.mxu0 0
    %1669 = vmatpush1.bf16.msra.mxu0 0
    %1670 = vmatprep.subr.bf16.mxu0 0
    %1671 = vmatpush1.bf16.msra.mxu0 0
    %1672 = vmatprep.subr.bf16.mxu0 0
    %1673 = vmatpush1.bf16.msra.mxu0 0
    %1674 = vmatprep.subr.bf16.mxu0 0
    %1675 = vmatpush1.bf16.msra.mxu0 0
    %1676 = vmatprep.subr.bf16.mxu0 0
    %1677 = vmatpush1.bf16.msra.mxu0 0
    %1678 = vmatprep.subr.bf16.mxu0 0
    %1679 = vmatpush1.bf16.msra.mxu0 0
    %1680 = vmatprep.subr.bf16.mxu0 0
    %1681 = vmatpush1.bf16.msra.mxu0 0
    %1682 = vmatprep.subr.bf16.mxu0 0
    %1683 = vmatpush1.bf16.msra.mxu0 0
    %1684 = vmatprep.mubr.bf16.mxu0 0
    %1685 = vmatmul.mubr.bf16.gmra.mrb[0].mxu0 %v1650
    %v1686 = vpop.f32.mrb[0].mxu0
    %v1687 = vadd.f32 %v1235, %v1686
    %v1688 = vpop.f32.mrb[0].mxu0
    %v1689 = vpop.f32.mrb[0].mxu0
    %v1690 = vpop.f32.mrb[0].mxu0
    %1691 = vdwg.mxu0
    %v1692 = vxor.u32 %v1687, 2147483648
    %v1693 = vmul.f32 %v1692, 1.442695
    %v1694 = vpow.pop %v1693
    %v1695 = vadd.f32 %v1694, 1.0
    %v1696 = vrcp.pop %v1695
    %v1697 = vmul.f32 1.0, %v1696
    %v1698 = vtanh.pop %v1687
    %v1699 = vmul.f32 %v1697, %v1636
    %1701 = vrot.lane.b32.xlu0 %v1698, 64
    %v1702 = vpop.permute.xlu0 %1701
    %v1704 = vmul.f32 %v1697, %v1702
    %1706 = vrot.lane.b32.xlu0 %v1704, 32
    %v1707 = vpop.permute.xlu0 %1706
    %v1709 = vadd.f32 %v1699, %v1707
    %v1710 = vtanh.pop %v1709
    %1712 = vrot.lane.b32.xlu0 %v1710, 64
    %v1713 = vpop.permute.xlu0 %1712
    %v1715 = vmul.f32 %v1697, %v1713
    %v1716 = vpack.c.bf16 %v1715, %v1715
    %v1717 = vld [vmem:[%s410] sm:$0xff]
    %v1718 = vld [vmem:[%s410 + $0x8] sm:$0xff]
    %1720 = vrot.lane.b32.xlu0 %v1716, 32
    %v1721 = vpop.permute.xlu0 %1720
    %v1723 = vsel %vm1067, %v1721, 0
    %1725 = vmatprep.subr.bf16.mxu0 0
    %1726 = vmatpush1.bf16.msra.mxu0 %v1717
    %1727 = vmatprep.subr.bf16.mxu0 0
    %1728 = vmatpush1.bf16.msra.mxu0 %v1718
    %1729 = vmatprep.subr.bf16.mxu0 0
    %1730 = vmatpush1.bf16.msra.mxu0 0
    %1731 = vmatprep.subr.bf16.mxu0 0
    %1732 = vmatpush1.bf16.msra.mxu0 0
    %1733 = vmatprep.subr.bf16.mxu0 0
    %1734 = vmatpush1.bf16.msra.mxu0 0
    %1735 = vmatprep.subr.bf16.mxu0 0
    %1736 = vmatpush1.bf16.msra.mxu0 0
    %1737 = vmatprep.subr.bf16.mxu0 0
    %1738 = vmatpush1.bf16.msra.mxu0 0
    %1739 = vmatprep.subr.bf16.mxu0 0
    %1740 = vmatpush1.bf16.msra.mxu0 0
    %1741 = vmatprep.subr.bf16.mxu0 0
    %1742 = vmatpush1.bf16.msra.mxu0 0
    %1743 = vmatprep.subr.bf16.mxu0 0
    %1744 = vmatpush1.bf16.msra.mxu0 0
    %1745 = vmatprep.subr.bf16.mxu0 0
    %1746 = vmatpush1.bf16.msra.mxu0 0
    %1747 = vmatprep.subr.bf16.mxu0 0
    %1748 = vmatpush1.bf16.msra.mxu0 0
    %1749 = vmatprep.subr.bf16.mxu0 0
    %1750 = vmatpush1.bf16.msra.mxu0 0
    %1751 = vmatprep.subr.bf16.mxu0 0
    %1752 = vmatpush1.bf16.msra.mxu0 0
    %1753 = vmatprep.subr.bf16.mxu0 0
    %1754 = vmatpush1.bf16.msra.mxu0 0
    %1755 = vmatprep.subr.bf16.mxu0 0
    %1756 = vmatpush1.bf16.msra.mxu0 0
    %1757 = vmatprep.mubr.bf16.mxu0 0
    %1758 = vmatmul.mubr.bf16.gmra.mrb[0].mxu0 %v1723
    %v1759 = vpop.f32.mrb[0].mxu0
    %v1760 = vadd.f32 %v1278, %v1759
    %v1761 = vpop.f32.mrb[0].mxu0
    %v1762 = vpop.f32.mrb[0].mxu0
    %v1763 = vpop.f32.mrb[0].mxu0
    %1764 = vdwg.mxu0
    %v1765 = vxor.u32 %v1760, 2147483648
    %v1766 = vmul.f32 %v1765, 1.442695
    %v1767 = vpow.pop %v1766
    %v1768 = vadd.f32 %v1767, 1.0
    %v1769 = vrcp.pop %v1768
    %v1770 = vmul.f32 1.0, %v1769
    %v1771 = vtanh.pop %v1760
    %v1772 = vmul.f32 %v1770, %v1709
    %1774 = vrot.lane.b32.xlu0 %v1771, 64
    %v1775 = vpop.permute.xlu0 %1774
    %v1777 = vmul.f32 %v1770, %v1775
    %1779 = vrot.lane.b32.xlu0 %v1777, 32
    %v1780 = vpop.permute.xlu0 %1779
    %v1782 = vadd.f32 %v1772, %v1780
    %v1783 = vtanh.pop %v1782
    %1785 = vrot.lane.b32.xlu0 %v1783, 64
    %v1786 = vpop.permute.xlu0 %1785
    %v1788 = vmul.f32 %v1770, %v1786
    %v1789 = vpack.c.bf16 %v1788, %v1788
    %v1790 = vld [vmem:[%s496] sm:$0xff]
    %v1791 = vld [vmem:[%s496 + $0x8] sm:$0xff]
    %1793 = vrot.lane.b32.xlu0 %v1789, 32
    %v1794 = vpop.permute.xlu0 %1793
    %v1796 = vsel %vm1067, %v1794, 0
    %1798 = vmatprep.subr.bf16.mxu0 0
    %1799 = vmatpush1.bf16.msra.mxu0 %v1790
    %1800 = vmatprep.subr.bf16.mxu0 0
    %1801 = vmatpush1.bf16.msra.mxu0 %v1791
    %1802 = vmatprep.subr.bf16.mxu0 0
    %1803 = vmatpush1.bf16.msra.mxu0 0
    %1804 = vmatprep.subr.bf16.mxu0 0
    %1805 = vmatpush1.bf16.msra.mxu0 0
    %1806 = vmatprep.subr.bf16.mxu0 0
    %1807 = vmatpush1.bf16.msra.mxu0 0
    %1808 = vmatprep.subr.bf16.mxu0 0
    %1809 = vmatpush1.bf16.msra.mxu0 0
    %1810 = vmatprep.subr.bf16.mxu0 0
    %1811 = vmatpush1.bf16.msra.mxu0 0
    %1812 = vmatprep.subr.bf16.mxu0 0
    %1813 = vmatpush1.bf16.msra.mxu0 0
    %1814 = vmatprep.subr.bf16.mxu0 0
    %1815 = vmatpush1.bf16.msra.mxu0 0
    %1816 = vmatprep.subr.bf16.mxu0 0
    %1817 = vmatpush1.bf16.msra.mxu0 0
    %1818 = vmatprep.subr.bf16.mxu0 0
    %1819 = vmatpush1.bf16.msra.mxu0 0
    %1820 = vmatprep.subr.bf16.mxu0 0
    %1821 = vmatpush1.bf16.msra.mxu0 0
    %1822 = vmatprep.subr.bf16.mxu0 0
    %1823 = vmatpush1.bf16.msra.mxu0 0
    %1824 = vmatprep.subr.bf16.mxu0 0
    %1825 = vmatpush1.bf16.msra.mxu0 0
    %1826 = vmatprep.subr.bf16.mxu0 0
    %1827 = vmatpush1.bf16.msra.mxu0 0
    %1828 = vmatprep.subr.bf16.mxu0 0
    %1829 = vmatpush1.bf16.msra.mxu0 0
    %1830 = vmatprep.mubr.bf16.mxu0 0
    %1831 = vmatmul.mubr.bf16.gmra.mrb[0].mxu0 %v1796
    %v1832 = vpop.f32.mrb[0].mxu0
    %v1833 = vadd.f32 %v1321, %v1832
    %v1834 = vpop.f32.mrb[0].mxu0
    %v1835 = vpop.f32.mrb[0].mxu0
    %v1836 = vpop.f32.mrb[0].mxu0
    %1837 = vdwg.mxu0
    %v1838 = vxor.u32 %v1833, 2147483648
    %v1839 = vmul.f32 %v1838, 1.442695
    %v1840 = vpow.pop %v1839
    %v1841 = vadd.f32 %v1840, 1.0
    %v1842 = vrcp.pop %v1841
    %v1843 = vmul.f32 1.0, %v1842
    %v1844 = vtanh.pop %v1833
    %v1845 = vmul.f32 %v1843, %v1782
    %1847 = vrot.lane.b32.xlu0 %v1844, 64
    %v1848 = vpop.permute.xlu0 %1847
    %v1850 = vmul.f32 %v1843, %v1848
    %1852 = vrot.lane.b32.xlu0 %v1850, 32
    %v1853 = vpop.permute.xlu0 %1852
    %v1855 = vadd.f32 %v1845, %v1853
    %v1856 = vtanh.pop %v1855
    %1858 = vrot.lane.b32.xlu0 %v1856, 64
    %v1859 = vpop.permute.xlu0 %1858
    %v1861 = vmul.f32 %v1843, %v1859
    %v1862 = vpack.c.bf16 %v1861, %v1861
    %v1863 = vld [vmem:[%s582] sm:$0xff]
    %v1864 = vld [vmem:[%s582 + $0x8] sm:$0xff]
    %1866 = vrot.lane.b32.xlu0 %v1862, 32
    %v1867 = vpop.permute.xlu0 %1866
    %v1869 = vsel %vm1067, %v1867, 0
    %1871 = vmatprep.subr.bf16.mxu0 0
    %1872 = vmatpush1.bf16.msra.mxu0 %v1863
    %1873 = vmatprep.subr.bf16.mxu0 0
    %1874 = vmatpush1.bf16.msra.mxu0 %v1864
    %1875 = vmatprep.subr.bf16.mxu0 0
    %1876 = vmatpush1.bf16.msra.mxu0 0
    %1877 = vmatprep.subr.bf16.mxu0 0
    %1878 = vmatpush1.bf16.msra.mxu0 0
    %1879 = vmatprep.subr.bf16.mxu0 0
    %1880 = vmatpush1.bf16.msra.mxu0 0
    %1881 = vmatprep.subr.bf16.mxu0 0
    %1882 = vmatpush1.bf16.msra.mxu0 0
    %1883 = vmatprep.subr.bf16.mxu0 0
    %1884 = vmatpush1.bf16.msra.mxu0 0
    %1885 = vmatprep.subr.bf16.mxu0 0
    %1886 = vmatpush1.bf16.msra.mxu0 0
    %1887 = vmatprep.subr.bf16.mxu0 0
    %1888 = vmatpush1.bf16.msra.mxu0 0
    %1889 = vmatprep.subr.bf16.mxu0 0
    %1890 = vmatpush1.bf16.msra.mxu0 0
    %1891 = vmatprep.subr.bf16.mxu0 0
    %1892 = vmatpush1.bf16.msra.mxu0 0
    %1893 = vmatprep.subr.bf16.mxu0 0
    %1894 = vmatpush1.bf16.msra.mxu0 0
    %1895 = vmatprep.subr.bf16.mxu0 0
    %1896 = vmatpush1.bf16.msra.mxu0 0
    %1897 = vmatprep.subr.bf16.mxu0 0
    %1898 = vmatpush1.bf16.msra.mxu0 0
    %1899 = vmatprep.subr.bf16.mxu0 0
    %1900 = vmatpush1.bf16.msra.mxu0 0
    %1901 = vmatprep.subr.bf16.mxu0 0
    %1902 = vmatpush1.bf16.msra.mxu0 0
    %1903 = vmatprep.mubr.bf16.mxu0 0
    %1904 = vmatmul.mubr.bf16.gmra.mrb[0].mxu0 %v1869
    %v1905 = vpop.f32.mrb[0].mxu0
    %v1906 = vadd.f32 %v1364, %v1905
    %v1907 = vpop.f32.mrb[0].mxu0
    %v1908 = vpop.f32.mrb[0].mxu0
    %v1909 = vpop.f32.mrb[0].mxu0
    %1910 = vdwg.mxu0
    %v1911 = vxor.u32 %v1906, 2147483648
    %v1912 = vmul.f32 %v1911, 1.442695
    %v1913 = vpow.pop %v1912
    %v1914 = vadd.f32 %v1913, 1.0
    %v1915 = vrcp.pop %v1914
    %v1916 = vmul.f32 1.0, %v1915
    %v1917 = vtanh.pop %v1906
    %v1918 = vmul.f32 %v1916, %v1855
    %1920 = vrot.lane.b32.xlu0 %v1917, 64
    %v1921 = vpop.permute.xlu0 %1920
    %v1923 = vmul.f32 %v1916, %v1921
    %1925 = vrot.lane.b32.xlu0 %v1923, 32
    %v1926 = vpop.permute.xlu0 %1925
    %v1928 = vadd.f32 %v1918, %v1926
    %v1929 = vtanh.pop %v1928
    %1931 = vrot.lane.b32.xlu0 %v1929, 64
    %v1932 = vpop.permute.xlu0 %1931
    %v1934 = vmul.f32 %v1916, %v1932
    %v1935 = vpack.c.bf16 %v1934, %v1934
    %v1936 = vld [vmem:[%s668] sm:$0xff]
    %v1937 = vld [vmem:[%s668 + $0x8] sm:$0xff]
    %1939 = vrot.lane.b32.xlu0 %v1935, 32
    %v1940 = vpop.permute.xlu0 %1939
    %v1942 = vsel %vm1067, %v1940, 0
    %1944 = vmatprep.subr.bf16.mxu0 0
    %1945 = vmatpush1.bf16.msra.mxu0 %v1936
    %1946 = vmatprep.subr.bf16.mxu0 0
    %1947 = vmatpush1.bf16.msra.mxu0 %v1937
    %1948 = vmatprep.subr.bf16.mxu0 0
    %1949 = vmatpush1.bf16.msra.mxu0 0
    %1950 = vmatprep.subr.bf16.mxu0 0
    %1951 = vmatpush1.bf16.msra.mxu0 0
    %1952 = vmatprep.subr.bf16.mxu0 0
    %1953 = vmatpush1.bf16.msra.mxu0 0
    %1954 = vmatprep.subr.bf16.mxu0 0
    %1955 = vmatpush1.bf16.msra.mxu0 0
    %1956 = vmatprep.subr.bf16.mxu0 0
    %1957 = vmatpush1.bf16.msra.mxu0 0
    %1958 = vmatprep.subr.bf16.mxu0 0
    %1959 = vmatpush1.bf16.msra.mxu0 0
    %1960 = vmatprep.subr.bf16.mxu0 0
    %1961 = vmatpush1.bf16.msra.mxu0 0
    %1962 = vmatprep.subr.bf16.mxu0 0
    %1963 = vmatpush1.bf16.msra.mxu0 0
    %1964 = vmatprep.subr.bf16.mxu0 0
    %1965 = vmatpush1.bf16.msra.mxu0 0
    %1966 = vmatprep.subr.bf16.mxu0 0
    %1967 = vmatpush1.bf16.msra.mxu0 0
    %1968 = vmatprep.subr.bf16.mxu0 0
    %1969 = vmatpush1.bf16.msra.mxu0 0
    %1970 = vmatprep.subr.bf16.mxu0 0
    %1971 = vmatpush1.bf16.msra.mxu0 0
    %1972 = vmatprep.subr.bf16.mxu0 0
    %1973 = vmatpush1.bf16.msra.mxu0 0
    %1974 = vmatprep.subr.bf16.mxu0 0
    %1975 = vmatpush1.bf16.msra.mxu0 0
    %1976 = vmatprep.mubr.bf16.mxu0 0
    %1977 = vmatmul.mubr.bf16.gmra.mrb[0].mxu0 %v1942
    %v1978 = vpop.f32.mrb[0].mxu0
    %v1979 = vadd.f32 %v1407, %v1978
    %v1980 = vpop.f32.mrb[0].mxu0
    %v1981 = vpop.f32.mrb[0].mxu0
    %v1982 = vpop.f32.mrb[0].mxu0
    %1983 = vdwg.mxu0
    %v1984 = vxor.u32 %v1979, 2147483648
    %v1985 = vmul.f32 %v1984, 1.442695
    %v1986 = vpow.pop %v1985
    %v1987 = vadd.f32 %v1986, 1.0
    %v1988 = vrcp.pop %v1987
    %v1989 = vmul.f32 1.0, %v1988
    %v1990 = vtanh.pop %v1979
    %v1991 = vmul.f32 %v1989, %v1928
    %1993 = vrot.lane.b32.xlu0 %v1990, 64
    %v1994 = vpop.permute.xlu0 %1993
    %v1996 = vmul.f32 %v1989, %v1994
    %1998 = vrot.lane.b32.xlu0 %v1996, 32
    %v1999 = vpop.permute.xlu0 %1998
    %v2001 = vadd.f32 %v1991, %v1999
    %v2002 = vtanh.pop %v2001
    %2004 = vrot.lane.b32.xlu0 %v2002, 64
    %v2005 = vpop.permute.xlu0 %2004
    %v2007 = vmul.f32 %v1989, %v2005
    %v2008 = vpack.c.bf16 %v2007, %v2007
    %v2009 = vld [vmem:[%s6] sm:$0xff]
    %v2010 = vld [vmem:[%s6 + $0x8] sm:$0xff]
    %v2011 = vld [vmem:[%s6 + $0x10] sm:$0xff]
    %v2012 = vld [vmem:[%s6 + $0x18] sm:$0xff]
    %v2013 = vld [vmem:[%s7] sm:$0x3]
    %v2015 = vlaneseq
    %v2016 = vshrl.u32 %v2015, 7
    %v2017 = vsub.s32 0, %v2016
    %v2018 = vrot.slane %v2013, %v2017
    %v2019 = vlaneseq
    %v2020 = vshrl.u32 %v2019, 7
    %v2021 = vsub.s32 1, %v2020
    %v2022 = vrot.slane %v2013, %v2021
    %2026 = vrot.lane.b32.xlu0 %v2008, 32
    %v2027 = vpop.permute.xlu0 %2026
    %v2032 = vunpack.c.l.b16 %v2009
    %v2033 = vunpack.c.h.b16 %v2009
    %v2034 = vunpack.c.l.b16 %v2010
    %v2035 = vunpack.c.h.b16 %v2010
    %v2036 = vunpack.c.l.b16 %v2011
    %v2037 = vunpack.c.h.b16 %v2011
    %v2038 = vunpack.c.l.b16 %v2012
    %v2039 = vunpack.c.h.b16 %v2012
    %v2040 = vpack.c.b16 %v2034, %v2032
    %v2041 = vpack.c.b16 %v2035, %v2033
    %v2042 = vpack.c.b16 %v2038, %v2036
    %v2043 = vpack.c.b16 %v2039, %v2037
    %v2049 = vsel %vm1067, %v2027, 0
    %2051 = vmatprep.subr.bf16.mxu0 %v2041
    %2052 = vmatpush1.bf16.msra.mxu0 %v2040
    %2053 = vmatprep.subr.bf16.mxu0 %v2043
    %2054 = vmatpush1.bf16.msra.mxu0 %v2042
    %2055 = vmatprep.subr.bf16.mxu0 0
    %2056 = vmatpush1.bf16.msra.mxu0 0
    %2057 = vmatprep.subr.bf16.mxu0 0
    %2058 = vmatpush1.bf16.msra.mxu0 0
    %2059 = vmatprep.subr.bf16.mxu0 0
    %2060 = vmatpush1.bf16.msra.mxu0 0
    %2061 = vmatprep.subr.bf16.mxu0 0
    %2062 = vmatpush1.bf16.msra.mxu0 0
    %2063 = vmatprep.subr.bf16.mxu0 0
    %2064 = vmatpush1.bf16.msra.mxu0 0
    %2065 = vmatprep.subr.bf16.mxu0 0
    %2066 = vmatpush1.bf16.msra.mxu0 0
    %2067 = vmatprep.subr.bf16.mxu0 0
    %2068 = vmatpush1.bf16.msra.mxu0 0
    %2069 = vmatprep.subr.bf16.mxu0 0
    %2070 = vmatpush1.bf16.msra.mxu0 0
    %2071 = vmatprep.subr.bf16.mxu0 0
    %2072 = vmatpush1.bf16.msra.mxu0 0
    %2073 = vmatprep.subr.bf16.mxu0 0
    %2074 = vmatpush1.bf16.msra.mxu0 0
    %2075 = vmatprep.subr.bf16.mxu0 0
    %2076 = vmatpush1.bf16.msra.mxu0 0
    %2077 = vmatprep.subr.bf16.mxu0 0
    %2078 = vmatpush1.bf16.msra.mxu0 0
    %2079 = vmatprep.subr.bf16.mxu0 0
    %2080 = vmatpush1.bf16.msra.mxu0 0
    %2081 = vmatprep.subr.bf16.mxu0 0
    %2082 = vmatpush1.bf16.msra.mxu0 0
    %2083 = vmatprep.mubr.bf16.mxu0 0
    %2084 = vmatmul.mubr.bf16.gmra.mrb[0].mxu0 %v2049
    %v2085 = vpop.f32.mrb[0].mxu0
    %v2086 = vadd.f32 %v2018, %v2085
    %v2087 = vpop.f32.mrb[0].mxu0
    %v2088 = vadd.f32 %v2022, %v2087
    %v2089 = vpop.f32.mrb[0].mxu0
    %v2090 = vpop.f32.mrb[0].mxu0
    %2091 = vdwg.mxu0
    %v2092 = vmax.f32 %v2086, 0.0
    %v2093 = vmax.f32 %v2088, 0.0
    %v2094 = vld [vmem:[%s8] sm:$0x3]
    %v2096 = vlaneseq
    %v2097 = vshrl.u32 %v2096, 7
    %v2098 = vsub.s32 0, %v2097
    %v2099 = vrot.slane %v2094, %v2098
    %v2100 = vlaneseq
    %v2101 = vshrl.u32 %v2100, 7
    %v2102 = vsub.s32 1, %v2101
    %v2103 = vrot.slane %v2094, %v2102
    %v2106 = vmul.f32 %v2092, %v2099
    %v2107 = vmul.f32 %v2093, %v2103
    %v2108 = vadd.f32 %v2106, %v2107
    %2109 = vadd.xlane.f32.xlu0 %v2108
    %v2110 = vpop.xlane.xlu0 %2109
    %s2111 = sld [smem:[#allocation6]]
    %v2112 = vstv %s2111
    %v2113 = vadd.f32 %v2110, %v2112
    %v2114 = vxor.u32 %v2113, 2147483648
    %v2115 = vmul.f32 %v2114, 1.442695
    %v2116 = vpow.pop %v2115
    %v2117 = vadd.f32 %v2116, 1.0
    %v2118 = vrcp.pop %v2117
    %v2119 = vmul.f32 1.0, %v2118
    %vm2120 = vcmask 7168
    %2121 = vst.msk [vmem:[%s10] sm:$0xff] %vm2120, %v2119
    // Predicated region
    $region338: #{lstm_pos_penn_forward.1} parent=1 // pred_check
      _
    $region339: #{lstm_pos_penn_forward.1} parent=1 // pred_check_branch
      %2123 = sbr.rel (0) target = $region341
    $region340: #{lstm_pos_penn_forward.1} parent=1 // pred_region
      _
    $region341: #{lstm_pos_penn_forward.1} parent=1 // pred_fallthru
      _
    // Predicated region
    $region342: #{lstm_pos_penn_forward.1} parent=1 // pred_check
      _
    $region343: #{lstm_pos_penn_forward.1} parent=1 // pred_check_branch
      %2125 = sbr.rel (0) target = $region345
    $region344: #{lstm_pos_penn_forward.1} parent=1 // pred_region
      _
    $region345: #{lstm_pos_penn_forward.1} parent=1 // pred_fallthru
      _
    %2126 = vsyncpa [#allocation8], 1
  %2127 = vsyncmov [#allocation5]
  %s2128 = vpop.sfrf %2127
  %p2129 = scmp.eq.s32.totalorder %s2128, 0
  %p2130 = pneg %p2129
  %2132 = shalt.err (%p2130)
  %s2133 = scalar_lea.sflag [#allocation5], 1
  %2134 = vsyncmov %s2133
  %s2135 = vpop.sfrf %2134
  %p2136 = scmp.eq.s32.totalorder %s2135, 0
  %p2137 = pneg %p2136
  %2139 = shalt.err (%p2137)
  %s2140 = scalar_lea.sflag [#allocation5], 2
  %2141 = vsyncmov %s2140
  %s2142 = vpop.sfrf %2141
  %p2143 = scmp.eq.s32.totalorder %s2142, 0
  %p2144 = pneg %p2143
  %2146 = shalt.err (%p2144)
  %s2147 = scalar_lea.sflag [#allocation5], 3
  %2148 = vsyncmov %s2147
  %s2149 = vpop.sfrf %2148
  %p2150 = scmp.eq.s32.totalorder %s2149, 0
  %p2151 = pneg %p2150
  %2153 = shalt.err (%p2151)
  %s2154 = scalar_lea.sflag [#allocation5], 4
  %2155 = vsyncmov %s2154
  %s2156 = vpop.sfrf %2155
  %p2157 = scmp.eq.s32.totalorder %s2156, 0
  %p2158 = pneg %p2157
  %2160 = shalt.err (%p2158)
  %s2161 = scalar_lea.sflag [#allocation5], 5
  %2162 = vsyncmov %s2161
  %s2163 = vpop.sfrf %2162
  %p2164 = scmp.eq.s32.totalorder %s2163, 0
  %p2165 = pneg %p2164
  %2167 = shalt.err (%p2165)
  %s2168 = scalar_lea.sflag [#allocation5], 6
  %2169 = vsyncmov %s2168
  %s2170 = vpop.sfrf %2169
  %p2171 = scmp.eq.s32.totalorder %s2170, 0
  %p2172 = pneg %p2171
  %2174 = shalt.err (%p2172)
  %s2175 = scalar_lea.sflag [#allocation5], 7
  %2176 = vsyncmov %s2175
  %s2177 = vpop.sfrf %2176
  %p2178 = scmp.eq.s32.totalorder %s2177, 0
  %p2179 = pneg %p2178
  %2181 = shalt.err (%p2179)
  %s2182 = scalar_lea.sflag [#allocation5], 8
  %2183 = vsyncmov %s2182
  %s2184 = vpop.sfrf %2183
  %p2185 = scmp.eq.s32.totalorder %s2184, 0
  %p2186 = pneg %p2185
  %2188 = shalt.err (%p2186)
  %s2189 = scalar_lea.sflag [#allocation5], 9
  %2190 = vsyncmov %s2189
  %s2191 = vpop.sfrf %2190
  %p2192 = scmp.eq.s32.totalorder %s2191, 0
  %p2193 = pneg %p2192
  %2195 = shalt.err (%p2193)
  %s2196 = scalar_lea.sflag [#allocation5], 10
  %2197 = vsyncmov %s2196
  %s2198 = vpop.sfrf %2197
  %p2199 = scmp.eq.s32.totalorder %s2198, 0
  %p2200 = pneg %p2199
  %2202 = shalt.err (%p2200)
  %s2203 = scalar_lea.sflag [#allocation5], 11
  %2204 = vsyncmov %s2203
  %s2205 = vpop.sfrf %2204
  %p2206 = scmp.eq.s32.totalorder %s2205, 0
  %p2207 = pneg %p2206
  %2209 = shalt.err (%p2207)
  %s2210 = scalar_lea.sflag [#allocation5], 12
  %2211 = vsyncmov %s2210
  %s2212 = vpop.sfrf %2211
  %p2213 = scmp.eq.s32.totalorder %s2212, 0
  %p2214 = pneg %p2213
  %2216 = shalt.err (%p2214)
  %s2217 = scalar_lea.sflag [#allocation5], 13
  %2218 = vsyncmov %s2217
  %s2219 = vpop.sfrf %2218
  %p2220 = scmp.eq.s32.totalorder %s2219, 0
  %p2221 = pneg %p2220
  %2223 = shalt.err (%p2221)
  %s2224 = scalar_lea.sflag [#allocation5], 14
  %2225 = vsyncmov %s2224
  %s2226 = vpop.sfrf %2225
  %p2227 = scmp.eq.s32.totalorder %s2226, 0
  %p2228 = pneg %p2227
  %2230 = shalt.err (%p2228)
  %s2231 = scalar_lea.sflag [#allocation5], 15
  %2232 = vsyncmov %s2231
  %s2233 = vpop.sfrf %2232
  %p2234 = scmp.eq.s32.totalorder %s2233, 0
  %p2235 = pneg %p2234
  %2237 = shalt.err (%p2235)
  %s2238 = scalar_lea.sflag [#allocation5], 16
  %2239 = vsyncmov %s2238
  %s2240 = vpop.sfrf %2239
  %p2241 = scmp.eq.s32.totalorder %s2240, 0
  %p2242 = pneg %p2241
  %2244 = shalt.err (%p2242)
  %s2245 = scalar_lea.sflag [#allocation5], 17
  %2246 = vsyncmov %s2245
  %s2247 = vpop.sfrf %2246
  %p2248 = scmp.eq.s32.totalorder %s2247, 0
  %p2249 = pneg %p2248
  %2251 = shalt.err (%p2249)
  %s2252 = scalar_lea.sflag [#allocation5], 18
  %2253 = vsyncmov %s2252
  %s2254 = vpop.sfrf %2253
  %p2255 = scmp.eq.s32.totalorder %s2254, 0
  %p2256 = pneg %p2255
  %2258 = shalt.err (%p2256)
  %s2259 = scalar_lea.sflag [#allocation5], 19
  %2260 = vsyncmov %s2259
  %s2261 = vpop.sfrf %2260
  %p2262 = scmp.eq.s32.totalorder %s2261, 0
  %p2263 = pneg %p2262
  %2265 = shalt.err (%p2263)
  %s2266 = scalar_lea.sflag [#allocation5], 20
  %2267 = vsyncmov %s2266
  %s2268 = vpop.sfrf %2267
  %p2269 = scmp.eq.s32.totalorder %s2268, 0
  %p2270 = pneg %p2269
  %2272 = shalt.err (%p2270)
  %s2273 = scalar_lea.sflag [#allocation5], 21
  %2274 = vsyncmov %s2273
  %s2275 = vpop.sfrf %2274
  %p2276 = scmp.eq.s32.totalorder %s2275, 0
  %p2277 = pneg %p2276
  %2279 = shalt.err (%p2277)
  %s2280 = scalar_lea.sflag [#allocation5], 22
  %2281 = vsyncmov %s2280
  %s2282 = vpop.sfrf %2281
  %p2283 = scmp.eq.s32.totalorder %s2282, 0
  %p2284 = pneg %p2283
  %2286 = shalt.err (%p2284)
  %s2287 = scalar_lea.sflag [#allocation5], 23
  %2288 = vsyncmov %s2287
  %s2289 = vpop.sfrf %2288
  %p2290 = scmp.eq.s32.totalorder %s2289, 0
  %p2291 = pneg %p2290
  %2293 = shalt.err (%p2291)

</llo_original>
